<compile_context>
chip_gen: v7x
topology: tpu7x:2x2x1
jax: 0.10.0
libtpu: 0.0.40
codegen_flags: <defaults>
</compile_context>

<pallas_src>
import jax
import jax.numpy as jnp
from jax.experimental import pallas as pl
from jax.experimental.pallas import tpu as pltpu


def _round_up(v, m):
    return ((v + m - 1) // m) * m


def _pad_to(a, shape):
    pads = [(0, t - s) for s, t in zip(a.shape, shape)]
    return jnp.pad(a, pads)


def encoder_kernel(x_ref, w1_ref, b1_ref, w2_ref, b2_ref, wh_ref, bh_ref,
                   mean_ref, logvar_ref):
    """Fused VAE-encoder MLP for one batch tile.

    Matmuls run on the MXU with bf16 inputs and f32 accumulation; the
    bias-add + LeakyReLU(0.2) epilogue is computed in f32. The two output
    heads are a single fused matmul against [Wm | Wv].
    """
    latent = mean_ref.shape[1]          # logical latent dim (200)
    lat_p = bh_ref.shape[1] // 2        # padded per-head width (256)

    x = x_ref[...].astype(jnp.bfloat16)                                 # (bm, in_dim)

    # Layer 1: Linear + LeakyReLU(0.2)
    h = jnp.dot(x, w1_ref[...], preferred_element_type=jnp.float32) + b1_ref[...]
    h = jnp.maximum(h, 0.2 * h).astype(jnp.bfloat16)

    # Layer 2: Linear + LeakyReLU(0.2)
    h = jnp.dot(h, w2_ref[...], preferred_element_type=jnp.float32) + b2_ref[...]
    h = jnp.maximum(h, 0.2 * h).astype(jnp.bfloat16)

    # Fused heads: one (bm, hid_p) @ (hid_p, 2*lat_p) matmul, then split at the
    # tile-aligned column lat_p into mean / log_var.
    head = jnp.dot(h, wh_ref[...], preferred_element_type=jnp.float32) + bh_ref[...]
    mean_ref[...] = head[:, :latent]
    logvar_ref[...] = head[:, lat_p:lat_p + latent]


def prepare_encoder_params(w1, b1, w2, b2, w_mean, b_mean, w_var, b_var):
    """One-time (init-time) prep: lane-pad output dims, fuse the two heads,
    cast weights to bf16. Zero padding is exact (padded columns of h are
    0 after bias-pad + LeakyReLU(0)=0, and multiply zero rows of W2/Wh)."""
    in_dim, hidden = w1.shape
    latent = w_mean.shape[1]
    hid_p = _round_up(hidden, 128)
    lat_p = _round_up(latent, 128)

    params = dict(
        w1=_pad_to(w1, (in_dim, hid_p)).astype(jnp.bfloat16),
        b1=_pad_to(b1.reshape(1, -1), (1, hid_p)).astype(jnp.float32),
        w2=_pad_to(w2, (hid_p, hid_p)).astype(jnp.bfloat16),
        b2=_pad_to(b2.reshape(1, -1), (1, hid_p)).astype(jnp.float32),
        wh=jnp.concatenate([_pad_to(w_mean, (hid_p, lat_p)),
                            _pad_to(w_var, (hid_p, lat_p))],
                           axis=1).astype(jnp.bfloat16),
        bh=jnp.concatenate([_pad_to(b_mean.reshape(1, -1), (1, lat_p)),
                            _pad_to(b_var.reshape(1, -1), (1, lat_p))],
                           axis=1).astype(jnp.float32),
    )
    meta = dict(in_dim=in_dim, hidden=hidden, latent=latent,
                hid_p=hid_p, lat_p=lat_p)
    return params, meta


def encoder_forward(x, params, meta, *, block_m=128):
    """Run the fused encoder MLP as a single Pallas kernel, tiled over batch.

    Hot path does NO host-side padding/casting of x and NO output slicing:
    x goes in as-is (f32, unpadded features) and mean/log_var come out at
    their logical (B, latent) shapes.
    """
    B, in_dim = x.shape
    assert in_dim == meta["in_dim"]
    latent = meta["latent"]
    hid_p = meta["hid_p"]
    lat_p = meta["lat_p"]

    bm = min(block_m, _round_up(B, 8))
    grid = (pl.cdiv(B, bm),)

    flops = 2 * B * (in_dim * hid_p + hid_p * hid_p + hid_p * 2 * lat_p)
    bytes_accessed = (B * in_dim * 4                                     # x (f32)
                      + (in_dim * hid_p + hid_p * hid_p + hid_p * 2 * lat_p) * 2  # weights bf16
                      + (2 * hid_p + 2 * lat_p) * 4                      # biases f32
                      + 2 * B * latent * 4)                              # outputs f32

    mean, log_var = pl.pallas_call(
        encoder_kernel,
        out_shape=(jax.ShapeDtypeStruct((B, latent), jnp.float32),
                   jax.ShapeDtypeStruct((B, latent), jnp.float32)),
        grid_spec=pltpu.PrefetchScalarGridSpec(
            num_scalar_prefetch=0,
            grid=grid,
            in_specs=[
                # activations: tiled along batch, full (unpadded) feature width
                pl.BlockSpec((bm, in_dim), lambda i: (i, 0)),
                # weights / biases: full arrays, constant block -> stay resident
                pl.BlockSpec((in_dim, hid_p), lambda i: (0, 0)),
                pl.BlockSpec((1, hid_p), lambda i: (0, 0)),
                pl.BlockSpec((hid_p, hid_p), lambda i: (0, 0)),
                pl.BlockSpec((1, hid_p), lambda i: (0, 0)),
                pl.BlockSpec((hid_p, 2 * lat_p), lambda i: (0, 0)),
                pl.BlockSpec((1, 2 * lat_p), lambda i: (0, 0)),
            ],
            out_specs=[
                pl.BlockSpec((bm, latent), lambda i: (i, 0)),
                pl.BlockSpec((bm, latent), lambda i: (i, 0)),
            ],
        ),
        compiler_params=pltpu.CompilerParams(
            dimension_semantics=("parallel",),
        ),
        cost_estimate=pl.CostEstimate(flops=flops, transcendentals=0,
                                      bytes_accessed=bytes_accessed),
    )(x, params["w1"], params["b1"], params["w2"], params["b2"],
      params["wh"], params["bh"])

    return mean, log_var


def reference_forward_bf16(x, w1, b1, w2, b2, w_mean, b_mean, w_var, b_var):
    """Pure-JAX reference emulating the kernel's bf16-input / f32-accumulate
    matmul numerics (tight check of the kernel itself)."""
    def leaky(v):
        return jnp.where(v > 0, v, 0.2 * v)

    def mm(a, w):
        return jnp.dot(a.astype(jnp.bfloat16).astype(jnp.float32),
                       w.astype(jnp.bfloat16).astype(jnp.float32))

    h = leaky(mm(x, w1) + b1)
    h = leaky(mm(h, w2) + b2)
    return mm(h, w_mean) + b_mean, mm(h, w_var) + b_var


def reference_forward_f32(x, w1, b1, w2, b2, w_mean, b_mean, w_var, b_var):
    """Full-f32 reference matching the PyTorch Encoder (loose-tolerance check
    of the bf16-mixed-precision approximation)."""
    def leaky(v):
        return jnp.where(v > 0, v, 0.2 * v)

    h = leaky(x @ w1 + b1)
    h = leaky(h @ w2 + b2)
    return h @ w_mean + b_mean, h @ w_var + b_var


if __name__ == "__main__":
    # Module constants from the PyTorch script; input_dim is a flattened 28x28
    # image. batch=512 with block_m=128 gives 4 grid steps.
    input_dim = 784
    hidden_dim = 400
    latent_dim = 200
    batch = 512

    key = jax.random.PRNGKey(0)
    kx, k1, k2, k3, k4, kb1, kb2, kb3, kb4 = jax.random.split(key, 9)

    # Deterministic synthetic parameters (stored as [in, out] = PyTorch W^T).
    x = jax.random.normal(kx, (batch, input_dim), dtype=jnp.float32)
    w1 = jax.random.normal(k1, (input_dim, hidden_dim), dtype=jnp.float32) * 0.05
    b1 = jax.random.normal(kb1, (hidden_dim,), dtype=jnp.float32) * 0.05
    w2 = jax.random.normal(k2, (hidden_dim, hidden_dim), dtype=jnp.float32) * 0.05
    b2 = jax.random.normal(kb2, (hidden_dim,), dtype=jnp.float32) * 0.05
    w_mean = jax.random.normal(k3, (hidden_dim, latent_dim), dtype=jnp.float32) * 0.05
    b_mean = jax.random.normal(kb3, (latent_dim,), dtype=jnp.float32) * 0.05
    w_var = jax.random.normal(k4, (hidden_dim, latent_dim), dtype=jnp.float32) * 0.05
    b_var = jax.random.normal(kb4, (latent_dim,), dtype=jnp.float32) * 0.05

    # One-time parameter prep (outside the hot path).
    params, meta = prepare_encoder_params(
        w1, b1, w2, b2, w_mean, b_mean, w_var, b_var)
    params = jax.block_until_ready(params)

    mean, log_var = encoder_forward(x, params, meta, block_m=128)
    mean, log_var = jax.block_until_ready((mean, log_var))

    assert mean.shape == (batch, latent_dim)
    assert log_var.shape == (batch, latent_dim)

    # Tight check vs. a reference with the same bf16/f32 matmul numerics.
    ref_mean, ref_logvar = reference_forward_bf16(
        x, w1, b1, w2, b2, w_mean, b_mean, w_var, b_var)
    assert jnp.allclose(mean, ref_mean, atol=2e-3, rtol=2e-3), "mean mismatch vs bf16 reference"
    assert jnp.allclose(log_var, ref_logvar, atol=2e-3, rtol=2e-3), "log_var mismatch vs bf16 reference"

    # Looser check vs. the true f32 PyTorch-equivalent numerics.
    f32_mean, f32_logvar = reference_forward_f32(
        x, w1, b1, w2, b2, w_mean, b_mean, w_var, b_var)
    assert jnp.allclose(mean, f32_mean, atol=0.25, rtol=2e-2), "mean mismatch vs f32 reference"
    assert jnp.allclose(log_var, f32_logvar, atol=0.25, rtol=2e-2), "log_var mismatch vs f32 reference"

    print("KERNEL_OK")
</pallas_src>

<mosaic_0001>
module attributes {stable_mosaic.version = 11 : i64} {
  func.func @encoder_kernel(%arg0: i32, %arg1: memref<128x784xf32, #tpu.memory_space<vmem>>, %arg2: memref<784x512xbf16, #tpu.memory_space<vmem>>, %arg3: memref<1x512xf32, #tpu.memory_space<vmem>>, %arg4: memref<512x512xbf16, #tpu.memory_space<vmem>>, %arg5: memref<1x512xf32, #tpu.memory_space<vmem>>, %arg6: memref<512x512xbf16, #tpu.memory_space<vmem>>, %arg7: memref<1x512xf32, #tpu.memory_space<vmem>>, %arg8: memref<128x200xf32, #tpu.memory_space<vmem>>, %arg9: memref<128x200xf32, #tpu.memory_space<vmem>>) attributes {dimension_semantics = [#tpu.dimension_semantics<parallel>], iteration_bounds = array<i64: 4>, scalar_prefetch = 0 : i64, scratch_operands = 0 : i64, tpu.core_type = #tpu.core_type<tc>, window_params = [{transform_indices = @transform_0, window_bounds = array<i64: 128, 784>}, {pipeline_mode = #tpu.pipeline_mode<synchronous>, transform_indices = @transform_1, window_bounds = array<i64: 784, 512>}, {pipeline_mode = #tpu.pipeline_mode<synchronous>, transform_indices = @transform_2, window_bounds = array<i64: 1, 512>}, {pipeline_mode = #tpu.pipeline_mode<synchronous>, transform_indices = @transform_3, window_bounds = array<i64: 512, 512>}, {pipeline_mode = #tpu.pipeline_mode<synchronous>, transform_indices = @transform_4, window_bounds = array<i64: 1, 512>}, {pipeline_mode = #tpu.pipeline_mode<synchronous>, transform_indices = @transform_5, window_bounds = array<i64: 512, 512>}, {pipeline_mode = #tpu.pipeline_mode<synchronous>, transform_indices = @transform_6, window_bounds = array<i64: 1, 512>}, {transform_indices = @transform_7, window_bounds = array<i64: 128, 200>}, {transform_indices = @transform_8, window_bounds = array<i64: 128, 200>}]} {
    %c0 = arith.constant 0 : index
    %c0_0 = arith.constant 0 : index
    %0 = vector.load %arg1[%c0, %c0_0] : memref<128x784xf32, #tpu.memory_space<vmem>>, vector<128x784xf32>
    %1 = arith.truncf %0 : vector<128x784xf32> to vector<128x784xbf16>
    %c0_1 = arith.constant 0 : index
    %c0_2 = arith.constant 0 : index
    %2 = vector.load %arg2[%c0_1, %c0_2] : memref<784x512xbf16, #tpu.memory_space<vmem>>, vector<784x512xbf16>
    %cst = arith.constant dense<0.000000e+00> : vector<128x512xf32>
    %3 = tpu.matmul %1, %2, %cst {dimension_numbers = #tpu.dot_dimension_numbers<[1], [0], [0], [1], [0, 0, 1, 1], [], []>} : vector<128x784xbf16>, vector<784x512xbf16>, vector<128x512xf32> -> vector<128x512xf32>
    %c0_3 = arith.constant 0 : index
    %c0_4 = arith.constant 0 : index
    %4 = vector.load %arg3[%c0_3, %c0_4] : memref<1x512xf32, #tpu.memory_space<vmem>>, vector<1x512xf32>
    %5 = vector.broadcast %4 : vector<1x512xf32> to vector<128x512xf32>
    %6 = arith.addf %3, %5 : vector<128x512xf32>
    %cst_5 = arith.constant 2.000000e-01 : f32
    %7 = vector.broadcast %cst_5 : f32 to vector<128x512xf32>
    %8 = arith.mulf %7, %6 : vector<128x512xf32>
    %9 = arith.maximumf %6, %8 : vector<128x512xf32>
    %10 = arith.truncf %9 : vector<128x512xf32> to vector<128x512xbf16>
    %c0_6 = arith.constant 0 : index
    %c0_7 = arith.constant 0 : index
    %11 = vector.load %arg4[%c0_6, %c0_7] : memref<512x512xbf16, #tpu.memory_space<vmem>>, vector<512x512xbf16>
    %cst_8 = arith.constant dense<0.000000e+00> : vector<128x512xf32>
    %12 = tpu.matmul %10, %11, %cst_8 {dimension_numbers = #tpu.dot_dimension_numbers<[1], [0], [0], [1], [0, 0, 1, 1], [], []>} : vector<128x512xbf16>, vector<512x512xbf16>, vector<128x512xf32> -> vector<128x512xf32>
    %c0_9 = arith.constant 0 : index
    %c0_10 = arith.constant 0 : index
    %13 = vector.load %arg5[%c0_9, %c0_10] : memref<1x512xf32, #tpu.memory_space<vmem>>, vector<1x512xf32>
    %14 = vector.broadcast %13 : vector<1x512xf32> to vector<128x512xf32>
    %15 = arith.addf %12, %14 : vector<128x512xf32>
    %cst_11 = arith.constant 2.000000e-01 : f32
    %16 = vector.broadcast %cst_11 : f32 to vector<128x512xf32>
    %17 = arith.mulf %16, %15 : vector<128x512xf32>
    %18 = arith.maximumf %15, %17 : vector<128x512xf32>
    %19 = arith.truncf %18 : vector<128x512xf32> to vector<128x512xbf16>
    %c0_12 = arith.constant 0 : index
    %c0_13 = arith.constant 0 : index
    %20 = vector.load %arg6[%c0_12, %c0_13] : memref<512x512xbf16, #tpu.memory_space<vmem>>, vector<512x512xbf16>
    %cst_14 = arith.constant dense<0.000000e+00> : vector<128x512xf32>
    %21 = tpu.matmul %19, %20, %cst_14 {dimension_numbers = #tpu.dot_dimension_numbers<[1], [0], [0], [1], [0, 0, 1, 1], [], []>} : vector<128x512xbf16>, vector<512x512xbf16>, vector<128x512xf32> -> vector<128x512xf32>
    %c0_15 = arith.constant 0 : index
    %c0_16 = arith.constant 0 : index
    %22 = vector.load %arg7[%c0_15, %c0_16] : memref<1x512xf32, #tpu.memory_space<vmem>>, vector<1x512xf32>
    %23 = vector.broadcast %22 : vector<1x512xf32> to vector<128x512xf32>
    %24 = arith.addf %21, %23 : vector<128x512xf32>
    %25 = vector.extract_strided_slice %24 {offsets = [0, 0], sizes = [128, 200], strides = [1, 1]} : vector<128x512xf32> to vector<128x200xf32>
    %c0_17 = arith.constant 0 : index
    %c0_18 = arith.constant 0 : index
    %26 = vector.load %arg8[%c0_17, %c0_18] : memref<128x200xf32, #tpu.memory_space<vmem>>, vector<128x200xf32>
    tpu.vector_store %arg8[%c0_17, %c0_18], %25 {strides = array<i32>} : memref<128x200xf32, #tpu.memory_space<vmem>>, vector<128x200xf32>,
    %27 = vector.extract_strided_slice %24 {offsets = [0, 256], sizes = [128, 200], strides = [1, 1]} : vector<128x512xf32> to vector<128x200xf32>
    %c0_19 = arith.constant 0 : index
    %c0_20 = arith.constant 0 : index
    %28 = vector.load %arg9[%c0_19, %c0_20] : memref<128x200xf32, #tpu.memory_space<vmem>>, vector<128x200xf32>
    tpu.vector_store %arg9[%c0_19, %c0_20], %27 {strides = array<i32>} : memref<128x200xf32, #tpu.memory_space<vmem>>, vector<128x200xf32>,
    return
  }
  func.func @transform_0(%arg0: i32) -> (i32, i32) {
    %c0_i32 = arith.constant 0 : i32
    %c0_i32_0 = arith.constant 0 : i32
    return %arg0, %c0_i32 : i32, i32
  }
  func.func @transform_1(%arg0: i32) -> (i32, i32) {
    %c0_i32 = arith.constant 0 : i32
    %c0_i32_0 = arith.constant 0 : i32
    %c0_i32_1 = arith.constant 0 : i32
    return %c0_i32, %c0_i32_0 : i32, i32
  }
  func.func @transform_2(%arg0: i32) -> (i32, i32) {
    %c0_i32 = arith.constant 0 : i32
    %c0_i32_0 = arith.constant 0 : i32
    %c0_i32_1 = arith.constant 0 : i32
    return %c0_i32, %c0_i32_0 : i32, i32
  }
  func.func @transform_3(%arg0: i32) -> (i32, i32) {
    %c0_i32 = arith.constant 0 : i32
    %c0_i32_0 = arith.constant 0 : i32
    %c0_i32_1 = arith.constant 0 : i32
    return %c0_i32, %c0_i32_0 : i32, i32
  }
  func.func @transform_4(%arg0: i32) -> (i32, i32) {
    %c0_i32 = arith.constant 0 : i32
    %c0_i32_0 = arith.constant 0 : i32
    %c0_i32_1 = arith.constant 0 : i32
    return %c0_i32, %c0_i32_0 : i32, i32
  }
  func.func @transform_5(%arg0: i32) -> (i32, i32) {
    %c0_i32 = arith.constant 0 : i32
    %c0_i32_0 = arith.constant 0 : i32
    %c0_i32_1 = arith.constant 0 : i32
    return %c0_i32, %c0_i32_0 : i32, i32
  }
  func.func @transform_6(%arg0: i32) -> (i32, i32) {
    %c0_i32 = arith.constant 0 : i32
    %c0_i32_0 = arith.constant 0 : i32
    %c0_i32_1 = arith.constant 0 : i32
    return %c0_i32, %c0_i32_0 : i32, i32
  }
  func.func @transform_7(%arg0: i32) -> (i32, i32) {
    %c0_i32 = arith.constant 0 : i32
    %c0_i32_0 = arith.constant 0 : i32
    return %arg0, %c0_i32 : i32, i32
  }
  func.func @transform_8(%arg0: i32) -> (i32, i32) {
    %c0_i32 = arith.constant 0 : i32
    %c0_i32_0 = arith.constant 0 : i32
    return %arg0, %c0_i32 : i32, i32
  }
}

</mosaic_0001>

<llo_original>
// kernel: tpu_custom_call.1
$region0: #{tpu_custom_call.1}
  #allocation0 [shape = 'u32[]', space=smem, size = 0x4, offset = 0x4, fixed_abs, tag = 'smem constant byte address 0x4 - core index']
  #allocation1 [shape = 'u32[144,128]{1,0:T(1,128)}', space=vmem, size = 0x12000, scoped, tag = 'internal scratch']
  %s0 = inlined_call_operand.vmem [shape: f32[512,784], index: 0, kind: input, shape index: {}]
  %s1 = inlined_call_operand.vmem [shape: bf16[784,512], index: 1, kind: input, shape index: {}]
  %s2 = inlined_call_operand.vmem [shape: f32[1,512], index: 2, kind: input, shape index: {}]
  %s3 = inlined_call_operand.vmem [shape: bf16[512,512], index: 3, kind: input, shape index: {}]
  %s4 = inlined_call_operand.vmem [shape: f32[1,512], index: 4, kind: input, shape index: {}]
  %s5 = inlined_call_operand.vmem [shape: bf16[512,512], index: 5, kind: input, shape index: {}]
  %s6 = inlined_call_operand.vmem [shape: f32[1,512], index: 6, kind: input, shape index: {}]
  %s7 = inlined_call_operand.vmem [shape: f32[512,200], index: 7, kind: output, shape index: {0}]
  %s8 = inlined_call_operand.vmem [shape: f32[512,200], index: 8, kind: output, shape index: {1}]
  %9 = xla_tuple %s7, %s8
  %s10 = sld [smem:[#allocation0]]
  $region69: #{tpu_custom_call.1} parent=0
    _
  %s12 = ssub.s32 1, %s10
  %s13 = scalar_select 0, %s12, %s10
  loop: start=0, step=1, limit=6
  $region2: #{tpu_custom_call.1} parent=0 // loop_pre_header
    _
  $region3: #{tpu_custom_call.1} parent=0 // loop_header
    %s15 = sphi 0, %s19
    %p16 = scmp.ge.s32.totalorder %s15, 6
    %s25 = sphi 0, %s27
    %s28 = sphi 0, %s25
    %s29 = sphi 0, %s28
    %s45 = sphi 0, %s29
    %s49 = sphi 0, %s49
    %s51 = sphi 0, %s49
    %s52 = sphi 0, %s51
    %s66 = sphi 0, %s52
    %s70 = sphi 0, %s70
    %s72 = sphi 0, %s70
    %s73 = sphi 0, %s72
    %s87 = sphi 0, %s73
    %s91 = sphi 0, %s91
    %s93 = sphi 0, %s91
    %s94 = sphi 0, %s93
    %s108 = sphi 0, %s94
    %s112 = sphi 0, %s112
    %s114 = sphi 0, %s112
    %s115 = sphi 0, %s114
    %s129 = sphi 0, %s115
    %s133 = sphi 0, %s133
    %s135 = sphi 0, %s133
    %s136 = sphi 0, %s135
    %s150 = sphi 0, %s136
    %s154 = sphi 0, %s154
    %s156 = sphi 0, %s154
    %s157 = sphi 0, %s156
    %s171 = sphi 0, %s157
    %s177 = sphi 0, %s179
    %s180 = sphi 0, %s177
    %s181 = sphi 0, %s180
    %s197 = sphi 0, %s181
    %s203 = sphi 0, %s205
    %s206 = sphi 0, %s203
    %s207 = sphi 0, %s206
    %s223 = sphi 0, %s207
  $region4: #{tpu_custom_call.1} parent=0 // loop_header_branch
    %18 = sbr.rel (%p16) target = $region8
  $region5: #{tpu_custom_call.1} parent=0 // loop_body
    %s20 = ssub.s32 %s15, 1
    %s21 = ssub.s32 %s15, 2
    %s22 = sadd.s32 %s15, 1
    %s23 = ssub.s32 %s15, %s22
    %p24 = scmp.eq.s32.totalorder %s23, 0
    %s26 = sadd.s32 %s25, 1
    %s27 = scalar_select %p24, %s25, %s26
    %p30 = pneg %p24
    %p31 = scmp.eq.s32.totalorder %s15, 3
    %p32 = por %p30, %p31
    %p33 = scmp.ne.s32.totalorder %s25, %s28
    %p34 = scmp.eq.s32.totalorder %s15, 0
    %p35 = por %p33, %p34
    %p36 = scmp.ne.s32.totalorder %s25, %s28
    %p37 = scmp.eq.s32.totalorder %s20, 3
    %p38 = por %p36, %p37
    %p39 = scmp.ne.s32.totalorder %s28, %s29
    %p40 = scmp.eq.s32.totalorder %s20, 0
    %p41 = por %p39, %p40
    %p42 = scmp.ne.s32.totalorder %s28, %s29
    %p43 = scmp.eq.s32.totalorder %s21, 3
    %p44 = por %p42, %p43
    %p46 = scmp.ne.s32.totalorder %s29, %s45
    %p47 = scmp.eq.s32.totalorder %s21, 0
    %p48 = por %p46, %p47
    %s50 = sadd.s32 %s49, 1
    %p53 = scmp.eq.s32.totalorder %s15, 3
    %p54 = scmp.ne.s32.totalorder %s49, %s51
    %p55 = scmp.eq.s32.totalorder %s15, 0
    %p56 = por %p54, %p55
    %p57 = scmp.ne.s32.totalorder %s49, %s51
    %p58 = scmp.eq.s32.totalorder %s20, 3
    %p59 = por %p57, %p58
    %p60 = scmp.ne.s32.totalorder %s51, %s52
    %p61 = scmp.eq.s32.totalorder %s20, 0
    %p62 = por %p60, %p61
    %p63 = scmp.ne.s32.totalorder %s51, %s52
    %p64 = scmp.eq.s32.totalorder %s21, 3
    %p65 = por %p63, %p64
    %p67 = scmp.ne.s32.totalorder %s52, %s66
    %p68 = scmp.eq.s32.totalorder %s21, 0
    %p69 = por %p67, %p68
    %s71 = sadd.s32 %s70, 1
    %p74 = scmp.eq.s32.totalorder %s15, 3
    %p75 = scmp.ne.s32.totalorder %s70, %s72
    %p76 = scmp.eq.s32.totalorder %s15, 0
    %p77 = por %p75, %p76
    %p78 = scmp.ne.s32.totalorder %s70, %s72
    %p79 = scmp.eq.s32.totalorder %s20, 3
    %p80 = por %p78, %p79
    %p81 = scmp.ne.s32.totalorder %s72, %s73
    %p82 = scmp.eq.s32.totalorder %s20, 0
    %p83 = por %p81, %p82
    %p84 = scmp.ne.s32.totalorder %s72, %s73
    %p85 = scmp.eq.s32.totalorder %s21, 3
    %p86 = por %p84, %p85
    %p88 = scmp.ne.s32.totalorder %s73, %s87
    %p89 = scmp.eq.s32.totalorder %s21, 0
    %p90 = por %p88, %p89
    %s92 = sadd.s32 %s91, 1
    %p95 = scmp.eq.s32.totalorder %s15, 3
    %p96 = scmp.ne.s32.totalorder %s91, %s93
    %p97 = scmp.eq.s32.totalorder %s15, 0
    %p98 = por %p96, %p97
    %p99 = scmp.ne.s32.totalorder %s91, %s93
    %p100 = scmp.eq.s32.totalorder %s20, 3
    %p101 = por %p99, %p100
    %p102 = scmp.ne.s32.totalorder %s93, %s94
    %p103 = scmp.eq.s32.totalorder %s20, 0
    %p104 = por %p102, %p103
    %p105 = scmp.ne.s32.totalorder %s93, %s94
    %p106 = scmp.eq.s32.totalorder %s21, 3
    %p107 = por %p105, %p106
    %p109 = scmp.ne.s32.totalorder %s94, %s108
    %p110 = scmp.eq.s32.totalorder %s21, 0
    %p111 = por %p109, %p110
    %s113 = sadd.s32 %s112, 1
    %p116 = scmp.eq.s32.totalorder %s15, 3
    %p117 = scmp.ne.s32.totalorder %s112, %s114
    %p118 = scmp.eq.s32.totalorder %s15, 0
    %p119 = por %p117, %p118
    %p120 = scmp.ne.s32.totalorder %s112, %s114
    %p121 = scmp.eq.s32.totalorder %s20, 3
    %p122 = por %p120, %p121
    %p123 = scmp.ne.s32.totalorder %s114, %s115
    %p124 = scmp.eq.s32.totalorder %s20, 0
    %p125 = por %p123, %p124
    %p126 = scmp.ne.s32.totalorder %s114, %s115
    %p127 = scmp.eq.s32.totalorder %s21, 3
    %p128 = por %p126, %p127
    %p130 = scmp.ne.s32.totalorder %s115, %s129
    %p131 = scmp.eq.s32.totalorder %s21, 0
    %p132 = por %p130, %p131
    %s134 = sadd.s32 %s133, 1
    %p137 = scmp.eq.s32.totalorder %s15, 3
    %p138 = scmp.ne.s32.totalorder %s133, %s135
    %p139 = scmp.eq.s32.totalorder %s15, 0
    %p140 = por %p138, %p139
    %p141 = scmp.ne.s32.totalorder %s133, %s135
    %p142 = scmp.eq.s32.totalorder %s20, 3
    %p143 = por %p141, %p142
    %p144 = scmp.ne.s32.totalorder %s135, %s136
    %p145 = scmp.eq.s32.totalorder %s20, 0
    %p146 = por %p144, %p145
    %p147 = scmp.ne.s32.totalorder %s135, %s136
    %p148 = scmp.eq.s32.totalorder %s21, 3
    %p149 = por %p147, %p148
    %p151 = scmp.ne.s32.totalorder %s136, %s150
    %p152 = scmp.eq.s32.totalorder %s21, 0
    %p153 = por %p151, %p152
    %s155 = sadd.s32 %s154, 1
    %p158 = scmp.eq.s32.totalorder %s15, 3
    %p159 = scmp.ne.s32.totalorder %s154, %s156
    %p160 = scmp.eq.s32.totalorder %s15, 0
    %p161 = por %p159, %p160
    %p162 = scmp.ne.s32.totalorder %s154, %s156
    %p163 = scmp.eq.s32.totalorder %s20, 3
    %p164 = por %p162, %p163
    %p165 = scmp.ne.s32.totalorder %s156, %s157
    %p166 = scmp.eq.s32.totalorder %s20, 0
    %p167 = por %p165, %p166
    %p168 = scmp.ne.s32.totalorder %s156, %s157
    %p169 = scmp.eq.s32.totalorder %s21, 3
    %p170 = por %p168, %p169
    %p172 = scmp.ne.s32.totalorder %s157, %s171
    %p173 = scmp.eq.s32.totalorder %s21, 0
    %p174 = por %p172, %p173
    %s175 = ssub.s32 %s15, %s22
    %p176 = scmp.eq.s32.totalorder %s175, 0
    %s178 = sadd.s32 %s177, 1
    %s179 = scalar_select %p176, %s177, %s178
    %p182 = pneg %p176
    %p183 = scmp.eq.s32.totalorder %s15, 3
    %p184 = por %p182, %p183
    %p185 = scmp.ne.s32.totalorder %s177, %s180
    %p186 = scmp.eq.s32.totalorder %s15, 0
    %p187 = por %p185, %p186
    %p188 = scmp.ne.s32.totalorder %s177, %s180
    %p189 = scmp.eq.s32.totalorder %s20, 3
    %p190 = por %p188, %p189
    %p191 = scmp.ne.s32.totalorder %s180, %s181
    %p192 = scmp.eq.s32.totalorder %s20, 0
    %p193 = por %p191, %p192
    %p194 = scmp.ne.s32.totalorder %s180, %s181
    %p195 = scmp.eq.s32.totalorder %s21, 3
    %p196 = por %p194, %p195
    %p198 = scmp.ne.s32.totalorder %s181, %s197
    %p199 = scmp.eq.s32.totalorder %s21, 0
    %p200 = por %p198, %p199
    %s201 = ssub.s32 %s15, %s22
    %p202 = scmp.eq.s32.totalorder %s201, 0
    %s204 = sadd.s32 %s203, 1
    %s205 = scalar_select %p202, %s203, %s204
    %p208 = pneg %p202
    %p209 = scmp.eq.s32.totalorder %s15, 3
    %p210 = por %p208, %p209
    %p211 = scmp.ne.s32.totalorder %s203, %s206
    %p212 = scmp.eq.s32.totalorder %s15, 0
    %p213 = por %p211, %p212
    %p214 = scmp.ne.s32.totalorder %s203, %s206
    %p215 = scmp.eq.s32.totalorder %s20, 3
    %p216 = por %p214, %p215
    %p217 = scmp.ne.s32.totalorder %s206, %s207
    %p218 = scmp.eq.s32.totalorder %s20, 0
    %p219 = por %p217, %p218
    %p220 = scmp.ne.s32.totalorder %s206, %s207
    %p221 = scmp.eq.s32.totalorder %s21, 3
    %p222 = por %p220, %p221
    %p224 = scmp.ne.s32.totalorder %s207, %s223
    %p225 = scmp.eq.s32.totalorder %s21, 0
    %p226 = por %p224, %p225
    %p227 = scmp.le.s32.totalorder 1, %s15
    %p228 = scmp.lt.s32.totalorder %s15, 5
    %p229 = pnand %p227, %p228
    %p230 = pneg %p229
    // Predicated region
    $region9: #{tpu_custom_call.1} parent=5 // pred_check
      _
    $region10: #{tpu_custom_call.1} parent=5 // pred_check_branch
      %232 = sbr.rel (%p229) target = $region12
    $region11: #{tpu_custom_call.1} parent=5 // pred_region
      %s233 = ssub.s32 %s15, 1
      // Predicated region
      $region13: #{tpu_custom_call.1} parent=11 // pred_check
        %p234 = pneg %p62
      $region14: #{tpu_custom_call.1} parent=11 // pred_check_branch
        %236 = sbr.rel (%p234) target = $region16
      $region15: #{tpu_custom_call.1} parent=11 // pred_region
        _
      $region16: #{tpu_custom_call.1} parent=11 // pred_fallthru
        _
      // Predicated region
      $region17: #{tpu_custom_call.1} parent=11 // pred_check
        %p237 = pneg %p83
      $region18: #{tpu_custom_call.1} parent=11 // pred_check_branch
        %239 = sbr.rel (%p237) target = $region20
      $region19: #{tpu_custom_call.1} parent=11 // pred_region
        _
      $region20: #{tpu_custom_call.1} parent=11 // pred_fallthru
        _
      // Predicated region
      $region21: #{tpu_custom_call.1} parent=11 // pred_check
        %p240 = pneg %p104
      $region22: #{tpu_custom_call.1} parent=11 // pred_check_branch
        %242 = sbr.rel (%p240) target = $region24
      $region23: #{tpu_custom_call.1} parent=11 // pred_region
        _
      $region24: #{tpu_custom_call.1} parent=11 // pred_fallthru
        _
      // Predicated region
      $region25: #{tpu_custom_call.1} parent=11 // pred_check
        %p243 = pneg %p125
      $region26: #{tpu_custom_call.1} parent=11 // pred_check_branch
        %245 = sbr.rel (%p243) target = $region28
      $region27: #{tpu_custom_call.1} parent=11 // pred_region
        _
      $region28: #{tpu_custom_call.1} parent=11 // pred_fallthru
        _
      // Predicated region
      $region29: #{tpu_custom_call.1} parent=11 // pred_check
        %p246 = pneg %p146
      $region30: #{tpu_custom_call.1} parent=11 // pred_check_branch
        %248 = sbr.rel (%p246) target = $region32
      $region31: #{tpu_custom_call.1} parent=11 // pred_region
        _
      $region32: #{tpu_custom_call.1} parent=11 // pred_fallthru
        _
      // Predicated region
      $region33: #{tpu_custom_call.1} parent=11 // pred_check
        %p249 = pneg %p167
      $region34: #{tpu_custom_call.1} parent=11 // pred_check_branch
        %251 = sbr.rel (%p249) target = $region36
      $region35: #{tpu_custom_call.1} parent=11 // pred_region
        _
      $region36: #{tpu_custom_call.1} parent=11 // pred_fallthru
        _
    $region12: #{tpu_custom_call.1} parent=5 // pred_fallthru
      _
    %p252 = scmp.lt.s32.totalorder %s15, 4
    // Predicated region
    $region37: #{tpu_custom_call.1} parent=5 // pred_check
      %p253 = pneg %p252
    $region38: #{tpu_custom_call.1} parent=5 // pred_check_branch
      %255 = sbr.rel (%p253) target = $region40
    $region39: #{tpu_custom_call.1} parent=5 // pred_region
      // Predicated region
      $region41: #{tpu_custom_call.1} parent=39 // pred_check
        %p256 = pneg %p35
      $region42: #{tpu_custom_call.1} parent=39 // pred_check_branch
        %258 = sbr.rel (%p256) target = $region44
      $region43: #{tpu_custom_call.1} parent=39 // pred_region
        %s259 = smul.u32 16, %s15
        %p260 = scmp.lt.s32.totalorder %s259, 63
        %s261 = scalar_select %p260, %s259, 63
        %s262 = smul.addr %s261, 7
        %s263 = smul.addr %s262, 8
        %s264 = scalar_lea.vmem %s0, %s263
        %s265 = smul.u32 16, %s15
      $region44: #{tpu_custom_call.1} parent=39 // pred_fallthru
        _
    $region40: #{tpu_custom_call.1} parent=5 // pred_fallthru
      _
    %p266 = scmp.le.s32.totalorder 1, %s15
    %p267 = scmp.lt.s32.totalorder %s15, 5
    %p268 = pnand %p266, %p267
    %p269 = pneg %p268
    // Predicated region
    $region45: #{tpu_custom_call.1} parent=5 // pred_check
      _
    $region46: #{tpu_custom_call.1} parent=5 // pred_check_branch
      %271 = sbr.rel (%p268) target = $region48
    $region47: #{tpu_custom_call.1} parent=5 // pred_region
      %s272 = ssub.s32 %s15, 1
      %s273 = smul.u32 16, %s20
      %p274 = scmp.lt.s32.totalorder %s273, 63
      %s275 = scalar_select %p274, %s273, 63
      %s276 = smul.addr %s275, 7
      %s277 = smul.addr %s276, 8
      %s278 = scalar_lea.vmem %s0, %s277
      %p279 = pneg %p41
      %p280 = pneg %p38
      %p281 = pneg %p62
      %p282 = pneg %p59
      %p283 = pneg %p83
      %p284 = pneg %p80
      %p285 = pneg %p104
      %p286 = pneg %p101
      %p287 = pneg %p125
      %p288 = pneg %p122
      %p289 = pneg %p146
      %p290 = pneg %p143
      %p291 = pneg %p167
      %p292 = pneg %p164
      %p293 = pneg %p193
      %p294 = pneg %p190
      %s295 = smul.u32 16, %s20
      %p296 = scmp.lt.s32.totalorder %s295, 63
      %s297 = scalar_select %p296, %s295, 63
      %s298 = smul.addr %s297, 2
      %s299 = smul.addr %s298, 8
      %s300 = scalar_lea.vmem %s7, %s299
      %p301 = pneg %p219
      %p302 = pneg %p216
      %s303 = smul.u32 16, %s20
      %p304 = scmp.lt.s32.totalorder %s303, 63
      %s305 = scalar_select %p304, %s303, 63
      %s306 = smul.addr %s305, 2
      %s307 = smul.addr %s306, 8
      %s308 = scalar_lea.vmem %s8, %s307
      %s309 = smul.u32 16, %s20
      %p310 = scmp.lt.s32.totalorder %s309, 63
      %s311 = scalar_select %p310, %s309, 63
      %s312 = smul.addr %s311, 7
      %s313 = smul.addr %s312, 8
      %s314 = scalar_lea.vmem %s0, %s313
      %s315 = smul.u32 16, %s20
      %s316 = smul.u32 16, %s20
      %p317 = scmp.lt.s32.totalorder %s316, 63
      %s318 = scalar_select %p317, %s316, 63
      %s319 = smul.addr %s318, 2
      %s320 = smul.addr %s319, 8
      %s321 = scalar_lea.vmem %s7, %s320
      %s322 = smul.u32 16, %s20
      %s323 = smul.u32 16, %s20
      %p324 = scmp.lt.s32.totalorder %s323, 63
      %s325 = scalar_select %p324, %s323, 63
      %s326 = smul.addr %s325, 2
      %s327 = smul.addr %s326, 8
      %s328 = scalar_lea.vmem %s8, %s327
      %s329 = smul.u32 16, %s20
      %v331 = vld [vmem:[%s314] sm:$0xff]
      %v332 = vld [vmem:[%s314 + $0x8] sm:$0xff]
      %v333 = vld [vmem:[%s314 + $0x10] sm:$0xff]
      %v334 = vld [vmem:[%s314 + $0x18] sm:$0xff]
      %v335 = vld [vmem:[%s314 + $0x20] sm:$0xff]
      %v336 = vld [vmem:[%s314 + $0x28] sm:$0xff]
      %v337 = vld [vmem:[%s314 + $0x30] sm:$0xff]
      %v338 = vld [vmem:[%s314 + $0x38] sm:$0xff]
      %v339 = vld [vmem:[%s314 + $0x40] sm:$0xff]
      %v340 = vld [vmem:[%s314 + $0x48] sm:$0xff]
      %v341 = vld [vmem:[%s314 + $0x50] sm:$0xff]
      %v342 = vld [vmem:[%s314 + $0x58] sm:$0xff]
      %v343 = vld [vmem:[%s314 + $0x60] sm:$0xff]
      %v344 = vld [vmem:[%s314 + $0x68] sm:$0xff]
      %v345 = vld [vmem:[%s314 + $0x70] sm:$0xff]
      %v346 = vld [vmem:[%s314 + $0x78] sm:$0xff]
      %v347 = vld [vmem:[%s314 + $0x80] sm:$0xff]
      %v348 = vld [vmem:[%s314 + $0x88] sm:$0xff]
      %v349 = vld [vmem:[%s314 + $0x90] sm:$0xff]
      %v350 = vld [vmem:[%s314 + $0x98] sm:$0xff]
      %v351 = vld [vmem:[%s314 + $0xa0] sm:$0xff]
      %v352 = vld [vmem:[%s314 + $0xa8] sm:$0xff]
      %v353 = vld [vmem:[%s314 + $0xb0] sm:$0xff]
      %v354 = vld [vmem:[%s314 + $0xb8] sm:$0xff]
      %v355 = vld [vmem:[%s314 + $0xc0] sm:$0xff]
      %v356 = vld [vmem:[%s314 + $0xc8] sm:$0xff]
      %v357 = vld [vmem:[%s314 + $0xd0] sm:$0xff]
      %v358 = vld [vmem:[%s314 + $0xd8] sm:$0xff]
      %v359 = vld [vmem:[%s314 + $0xe0] sm:$0xff]
      %v360 = vld [vmem:[%s314 + $0xe8] sm:$0xff]
      %v361 = vld [vmem:[%s314 + $0xf0] sm:$0xff]
      %v362 = vld [vmem:[%s314 + $0xf8] sm:$0xff]
      %v363 = vld [vmem:[%s314 + $0x100] sm:$0xff]
      %v364 = vld [vmem:[%s314 + $0x108] sm:$0xff]
      %v365 = vld [vmem:[%s314 + $0x110] sm:$0xff]
      %v366 = vld [vmem:[%s314 + $0x118] sm:$0xff]
      %v367 = vld [vmem:[%s314 + $0x120] sm:$0xff]
      %v368 = vld [vmem:[%s314 + $0x128] sm:$0xff]
      %v369 = vld [vmem:[%s314 + $0x130] sm:$0xff]
      %v370 = vld [vmem:[%s314 + $0x138] sm:$0xff]
      %v371 = vld [vmem:[%s314 + $0x140] sm:$0xff]
      %v372 = vld [vmem:[%s314 + $0x148] sm:$0xff]
      %v373 = vld [vmem:[%s314 + $0x150] sm:$0xff]
      %v374 = vld [vmem:[%s314 + $0x158] sm:$0xff]
      %v375 = vld [vmem:[%s314 + $0x160] sm:$0xff]
      %v376 = vld [vmem:[%s314 + $0x168] sm:$0xff]
      %v377 = vld [vmem:[%s314 + $0x170] sm:$0xff]
      %v378 = vld [vmem:[%s314 + $0x178] sm:$0xff]
      %v379 = vld [vmem:[%s314 + $0x180] sm:$0xff]
      %v380 = vld [vmem:[%s314 + $0x188] sm:$0xff]
      %v381 = vld [vmem:[%s314 + $0x190] sm:$0xff]
      %v382 = vld [vmem:[%s314 + $0x198] sm:$0xff]
      %v383 = vld [vmem:[%s314 + $0x1a0] sm:$0xff]
      %v384 = vld [vmem:[%s314 + $0x1a8] sm:$0xff]
      %v385 = vld [vmem:[%s314 + $0x1b0] sm:$0xff]
      %v386 = vld [vmem:[%s314 + $0x1b8] sm:$0xff]
      %v387 = vld [vmem:[%s314 + $0x1c0] sm:$0xff]
      %v388 = vld [vmem:[%s314 + $0x1c8] sm:$0xff]
      %v389 = vld [vmem:[%s314 + $0x1d0] sm:$0xff]
      %v390 = vld [vmem:[%s314 + $0x1d8] sm:$0xff]
      %v391 = vld [vmem:[%s314 + $0x1e0] sm:$0xff]
      %v392 = vld [vmem:[%s314 + $0x1e8] sm:$0xff]
      %v393 = vld [vmem:[%s314 + $0x1f0] sm:$0xff]
      %v394 = vld [vmem:[%s314 + $0x1f8] sm:$0xff]
      %v395 = vld [vmem:[%s314 + $0x200] sm:$0xff]
      %v396 = vld [vmem:[%s314 + $0x208] sm:$0xff]
      %v397 = vld [vmem:[%s314 + $0x210] sm:$0xff]
      %v398 = vld [vmem:[%s314 + $0x218] sm:$0xff]
      %v399 = vld [vmem:[%s314 + $0x220] sm:$0xff]
      %v400 = vld [vmem:[%s314 + $0x228] sm:$0xff]
      %v401 = vld [vmem:[%s314 + $0x230] sm:$0xff]
      %v402 = vld [vmem:[%s314 + $0x238] sm:$0xff]
      %v403 = vld [vmem:[%s314 + $0x240] sm:$0xff]
      %v404 = vld [vmem:[%s314 + $0x248] sm:$0xff]
      %v405 = vld [vmem:[%s314 + $0x250] sm:$0xff]
      %v406 = vld [vmem:[%s314 + $0x258] sm:$0xff]
      %v407 = vld [vmem:[%s314 + $0x260] sm:$0xff]
      %v408 = vld [vmem:[%s314 + $0x268] sm:$0xff]
      %v409 = vld [vmem:[%s314 + $0x270] sm:$0xff]
      %v410 = vld [vmem:[%s314 + $0x278] sm:$0xff]
      %v411 = vld [vmem:[%s314 + $0x280] sm:$0xff]
      %v412 = vld [vmem:[%s314 + $0x288] sm:$0xff]
      %v413 = vld [vmem:[%s314 + $0x290] sm:$0xff]
      %v414 = vld [vmem:[%s314 + $0x298] sm:$0xff]
      %v415 = vld [vmem:[%s314 + $0x2a0] sm:$0xff]
      %v416 = vld [vmem:[%s314 + $0x2a8] sm:$0xff]
      %v417 = vld [vmem:[%s314 + $0x2b0] sm:$0xff]
      %v418 = vld [vmem:[%s314 + $0x2b8] sm:$0xff]
      %v419 = vld [vmem:[%s314 + $0x2c0] sm:$0xff]
      %v420 = vld [vmem:[%s314 + $0x2c8] sm:$0xff]
      %v421 = vld [vmem:[%s314 + $0x2d0] sm:$0xff]
      %v422 = vld [vmem:[%s314 + $0x2d8] sm:$0xff]
      %v423 = vld [vmem:[%s314 + $0x2e0] sm:$0xff]
      %v424 = vld [vmem:[%s314 + $0x2e8] sm:$0xff]
      %v425 = vld [vmem:[%s314 + $0x2f0] sm:$0xff]
      %v426 = vld [vmem:[%s314 + $0x2f8] sm:$0xff]
      %v427 = vld [vmem:[%s314 + $0x300] sm:$0xff]
      %v428 = vld [vmem:[%s314 + $0x308] sm:$0xff]
      %v429 = vld [vmem:[%s314 + $0x310] sm:$0xff]
      %v430 = vld [vmem:[%s314 + $0x318] sm:$0xff]
      %v431 = vld [vmem:[%s314 + $0x320] sm:$0xff]
      %v432 = vld [vmem:[%s314 + $0x328] sm:$0xff]
      %v433 = vld [vmem:[%s314 + $0x330] sm:$0xff]
      %v434 = vld [vmem:[%s314 + $0x338] sm:$0xff]
      %v435 = vld [vmem:[%s314 + $0x340] sm:$0xff]
      %v436 = vld [vmem:[%s314 + $0x348] sm:$0xff]
      %v437 = vld [vmem:[%s314 + $0x350] sm:$0xff]
      %v438 = vld [vmem:[%s314 + $0x358] sm:$0xff]
      %v439 = vld [vmem:[%s314 + $0x360] sm:$0xff]
      %v440 = vld [vmem:[%s314 + $0x368] sm:$0xff]
      %v441 = vld [vmem:[%s314 + $0x370] sm:$0xff]
      %v442 = vld [vmem:[%s314 + $0x378] sm:$0xff]
      %v443 = vpack.c.bf16 %v338, %v331
      %v444 = vpack.c.bf16 %v339, %v332
      %v445 = vpack.c.bf16 %v340, %v333
      %v446 = vpack.c.bf16 %v341, %v334
      %v447 = vpack.c.bf16 %v342, %v335
      %v448 = vpack.c.bf16 %v343, %v336
      %v449 = vpack.c.bf16 %v344, %v337
      %v450 = vpack.c.bf16 %v352, %v345
      %v451 = vpack.c.bf16 %v353, %v346
      %v452 = vpack.c.bf16 %v354, %v347
      %v453 = vpack.c.bf16 %v355, %v348
      %v454 = vpack.c.bf16 %v356, %v349
      %v455 = vpack.c.bf16 %v357, %v350
      %v456 = vpack.c.bf16 %v358, %v351
      %v457 = vpack.c.bf16 %v366, %v359
      %v458 = vpack.c.bf16 %v367, %v360
      %v459 = vpack.c.bf16 %v368, %v361
      %v460 = vpack.c.bf16 %v369, %v362
      %v461 = vpack.c.bf16 %v370, %v363
      %v462 = vpack.c.bf16 %v371, %v364
      %v463 = vpack.c.bf16 %v372, %v365
      %v464 = vpack.c.bf16 %v380, %v373
      %v465 = vpack.c.bf16 %v381, %v374
      %v466 = vpack.c.bf16 %v382, %v375
      %v467 = vpack.c.bf16 %v383, %v376
      %v468 = vpack.c.bf16 %v384, %v377
      %v469 = vpack.c.bf16 %v385, %v378
      %v470 = vpack.c.bf16 %v386, %v379
      %v471 = vpack.c.bf16 %v394, %v387
      %v472 = vpack.c.bf16 %v395, %v388
      %v473 = vpack.c.bf16 %v396, %v389
      %v474 = vpack.c.bf16 %v397, %v390
      %v475 = vpack.c.bf16 %v398, %v391
      %v476 = vpack.c.bf16 %v399, %v392
      %v477 = vpack.c.bf16 %v400, %v393
      %v478 = vpack.c.bf16 %v408, %v401
      %v479 = vpack.c.bf16 %v409, %v402
      %v480 = vpack.c.bf16 %v410, %v403
      %v481 = vpack.c.bf16 %v411, %v404
      %v482 = vpack.c.bf16 %v412, %v405
      %v483 = vpack.c.bf16 %v413, %v406
      %v484 = vpack.c.bf16 %v414, %v407
      %v485 = vpack.c.bf16 %v422, %v415
      %v486 = vpack.c.bf16 %v423, %v416
      %v487 = vpack.c.bf16 %v424, %v417
      %v488 = vpack.c.bf16 %v425, %v418
      %v489 = vpack.c.bf16 %v426, %v419
      %v490 = vpack.c.bf16 %v427, %v420
      %v491 = vpack.c.bf16 %v428, %v421
      %v492 = vpack.c.bf16 %v436, %v429
      %v493 = vpack.c.bf16 %v437, %v430
      %v494 = vpack.c.bf16 %v438, %v431
      %v495 = vpack.c.bf16 %v439, %v432
      %v496 = vpack.c.bf16 %v440, %v433
      %v497 = vpack.c.bf16 %v441, %v434
      %v498 = vpack.c.bf16 %v442, %v435
      %v499 = vld [vmem:[%s1] sm:$0xff]
      %v500 = vld [vmem:[%s1 + $0x8] sm:$0xff]
      %v501 = vld [vmem:[%s1 + $0x10] sm:$0xff]
      %v502 = vld [vmem:[%s1 + $0x18] sm:$0xff]
      %v503 = vld [vmem:[%s1 + $0x20] sm:$0xff]
      %v504 = vld [vmem:[%s1 + $0x28] sm:$0xff]
      %v505 = vld [vmem:[%s1 + $0x30] sm:$0xff]
      %v506 = vld [vmem:[%s1 + $0x38] sm:$0xff]
      %v507 = vld [vmem:[%s1 + $0x40] sm:$0xff]
      %v508 = vld [vmem:[%s1 + $0x48] sm:$0xff]
      %v509 = vld [vmem:[%s1 + $0x50] sm:$0xff]
      %v510 = vld [vmem:[%s1 + $0x58] sm:$0xff]
      %v511 = vld [vmem:[%s1 + $0x60] sm:$0xff]
      %v512 = vld [vmem:[%s1 + $0x68] sm:$0xff]
      %v513 = vld [vmem:[%s1 + $0x70] sm:$0xff]
      %v514 = vld [vmem:[%s1 + $0x78] sm:$0xff]
      %v515 = vld [vmem:[%s1 + $0x80] sm:$0xff]
      %v516 = vld [vmem:[%s1 + $0x88] sm:$0xff]
      %v517 = vld [vmem:[%s1 + $0x90] sm:$0xff]
      %v518 = vld [vmem:[%s1 + $0x98] sm:$0xff]
      %v519 = vld [vmem:[%s1 + $0xa0] sm:$0xff]
      %v520 = vld [vmem:[%s1 + $0xa8] sm:$0xff]
      %v521 = vld [vmem:[%s1 + $0xb0] sm:$0xff]
      %v522 = vld [vmem:[%s1 + $0xb8] sm:$0xff]
      %v523 = vld [vmem:[%s1 + $0xc0] sm:$0xff]
      %v524 = vld [vmem:[%s1 + $0xc8] sm:$0xff]
      %v525 = vld [vmem:[%s1 + $0xd0] sm:$0xff]
      %v526 = vld [vmem:[%s1 + $0xd8] sm:$0xff]
      %v527 = vld [vmem:[%s1 + $0xe0] sm:$0xff]
      %v528 = vld [vmem:[%s1 + $0xe8] sm:$0xff]
      %v529 = vld [vmem:[%s1 + $0xf0] sm:$0xff]
      %v530 = vld [vmem:[%s1 + $0xf8] sm:$0xff]
      %v531 = vld [vmem:[%s1 + $0x100] sm:$0xff]
      %v532 = vld [vmem:[%s1 + $0x108] sm:$0xff]
      %v533 = vld [vmem:[%s1 + $0x110] sm:$0xff]
      %v534 = vld [vmem:[%s1 + $0x118] sm:$0xff]
      %v535 = vld [vmem:[%s1 + $0x120] sm:$0xff]
      %v536 = vld [vmem:[%s1 + $0x128] sm:$0xff]
      %v537 = vld [vmem:[%s1 + $0x130] sm:$0xff]
      %v538 = vld [vmem:[%s1 + $0x138] sm:$0xff]
      %v539 = vld [vmem:[%s1 + $0x140] sm:$0xff]
      %v540 = vld [vmem:[%s1 + $0x148] sm:$0xff]
      %v541 = vld [vmem:[%s1 + $0x150] sm:$0xff]
      %v542 = vld [vmem:[%s1 + $0x158] sm:$0xff]
      %v543 = vld [vmem:[%s1 + $0x160] sm:$0xff]
      %v544 = vld [vmem:[%s1 + $0x168] sm:$0xff]
      %v545 = vld [vmem:[%s1 + $0x170] sm:$0xff]
      %v546 = vld [vmem:[%s1 + $0x178] sm:$0xff]
      %v547 = vld [vmem:[%s1 + $0x180] sm:$0xff]
      %v548 = vld [vmem:[%s1 + $0x188] sm:$0xff]
      %v549 = vld [vmem:[%s1 + $0x190] sm:$0xff]
      %v550 = vld [vmem:[%s1 + $0x198] sm:$0xff]
      %v551 = vld [vmem:[%s1 + $0x1a0] sm:$0xff]
      %v552 = vld [vmem:[%s1 + $0x1a8] sm:$0xff]
      %v553 = vld [vmem:[%s1 + $0x1b0] sm:$0xff]
      %v554 = vld [vmem:[%s1 + $0x1b8] sm:$0xff]
      %v555 = vld [vmem:[%s1 + $0x1c0] sm:$0xff]
      %v556 = vld [vmem:[%s1 + $0x1c8] sm:$0xff]
      %v557 = vld [vmem:[%s1 + $0x1d0] sm:$0xff]
      %v558 = vld [vmem:[%s1 + $0x1d8] sm:$0xff]
      %v559 = vld [vmem:[%s1 + $0x1e0] sm:$0xff]
      %v560 = vld [vmem:[%s1 + $0x1e8] sm:$0xff]
      %v561 = vld [vmem:[%s1 + $0x1f0] sm:$0xff]
      %v562 = vld [vmem:[%s1 + $0x1f8] sm:$0xff]
      %v563 = vld [vmem:[%s1 + $0x200] sm:$0xff]
      %v564 = vld [vmem:[%s1 + $0x208] sm:$0xff]
      %v565 = vld [vmem:[%s1 + $0x210] sm:$0xff]
      %v566 = vld [vmem:[%s1 + $0x218] sm:$0xff]
      %v567 = vld [vmem:[%s1 + $0x220] sm:$0xff]
      %v568 = vld [vmem:[%s1 + $0x228] sm:$0xff]
      %v569 = vld [vmem:[%s1 + $0x230] sm:$0xff]
      %v570 = vld [vmem:[%s1 + $0x238] sm:$0xff]
      %v571 = vld [vmem:[%s1 + $0x240] sm:$0xff]
      %v572 = vld [vmem:[%s1 + $0x248] sm:$0xff]
      %v573 = vld [vmem:[%s1 + $0x250] sm:$0xff]
      %v574 = vld [vmem:[%s1 + $0x258] sm:$0xff]
      %v575 = vld [vmem:[%s1 + $0x260] sm:$0xff]
      %v576 = vld [vmem:[%s1 + $0x268] sm:$0xff]
      %v577 = vld [vmem:[%s1 + $0x270] sm:$0xff]
      %v578 = vld [vmem:[%s1 + $0x278] sm:$0xff]
      %v579 = vld [vmem:[%s1 + $0x280] sm:$0xff]
      %v580 = vld [vmem:[%s1 + $0x288] sm:$0xff]
      %v581 = vld [vmem:[%s1 + $0x290] sm:$0xff]
      %v582 = vld [vmem:[%s1 + $0x298] sm:$0xff]
      %v583 = vld [vmem:[%s1 + $0x2a0] sm:$0xff]
      %v584 = vld [vmem:[%s1 + $0x2a8] sm:$0xff]
      %v585 = vld [vmem:[%s1 + $0x2b0] sm:$0xff]
      %v586 = vld [vmem:[%s1 + $0x2b8] sm:$0xff]
      %v587 = vld [vmem:[%s1 + $0x2c0] sm:$0xff]
      %v588 = vld [vmem:[%s1 + $0x2c8] sm:$0xff]
      %v589 = vld [vmem:[%s1 + $0x2d0] sm:$0xff]
      %v590 = vld [vmem:[%s1 + $0x2d8] sm:$0xff]
      %v591 = vld [vmem:[%s1 + $0x2e0] sm:$0xff]
      %v592 = vld [vmem:[%s1 + $0x2e8] sm:$0xff]
      %v593 = vld [vmem:[%s1 + $0x2f0] sm:$0xff]
      %v594 = vld [vmem:[%s1 + $0x2f8] sm:$0xff]
      %v595 = vld [vmem:[%s1 + $0x300] sm:$0xff]
      %v596 = vld [vmem:[%s1 + $0x308] sm:$0xff]
      %v597 = vld [vmem:[%s1 + $0x310] sm:$0xff]
      %v598 = vld [vmem:[%s1 + $0x318] sm:$0xff]
      %v599 = vld [vmem:[%s1 + $0x320] sm:$0xff]
      %v600 = vld [vmem:[%s1 + $0x328] sm:$0xff]
      %v601 = vld [vmem:[%s1 + $0x330] sm:$0xff]
      %v602 = vld [vmem:[%s1 + $0x338] sm:$0xff]
      %v603 = vld [vmem:[%s1 + $0x340] sm:$0xff]
      %v604 = vld [vmem:[%s1 + $0x348] sm:$0xff]
      %v605 = vld [vmem:[%s1 + $0x350] sm:$0xff]
      %v606 = vld [vmem:[%s1 + $0x358] sm:$0xff]
      %v607 = vld [vmem:[%s1 + $0x360] sm:$0xff]
      %v608 = vld [vmem:[%s1 + $0x368] sm:$0xff]
      %v609 = vld [vmem:[%s1 + $0x370] sm:$0xff]
      %v610 = vld [vmem:[%s1 + $0x378] sm:$0xff]
      %v611 = vld [vmem:[%s1 + $0x380] sm:$0xff]
      %v612 = vld [vmem:[%s1 + $0x388] sm:$0xff]
      %v613 = vld [vmem:[%s1 + $0x390] sm:$0xff]
      %v614 = vld [vmem:[%s1 + $0x398] sm:$0xff]
      %v615 = vld [vmem:[%s1 + $0x3a0] sm:$0xff]
      %v616 = vld [vmem:[%s1 + $0x3a8] sm:$0xff]
      %v617 = vld [vmem:[%s1 + $0x3b0] sm:$0xff]
      %v618 = vld [vmem:[%s1 + $0x3b8] sm:$0xff]
      %v619 = vld [vmem:[%s1 + $0x3c0] sm:$0xff]
      %v620 = vld [vmem:[%s1 + $0x3c8] sm:$0xff]
      %v621 = vld [vmem:[%s1 + $0x3d0] sm:$0xff]
      %v622 = vld [vmem:[%s1 + $0x3d8] sm:$0xff]
      %v623 = vld [vmem:[%s1 + $0x3e0] sm:$0xff]
      %v624 = vld [vmem:[%s1 + $0x3e8] sm:$0xff]
      %v625 = vld [vmem:[%s1 + $0x3f0] sm:$0xff]
      %v626 = vld [vmem:[%s1 + $0x3f8] sm:$0xff]
      %v627 = vld [vmem:[%s1 + $0x400] sm:$0xff]
      %v628 = vld [vmem:[%s1 + $0x408] sm:$0xff]
      %v629 = vld [vmem:[%s1 + $0x410] sm:$0xff]
      %v630 = vld [vmem:[%s1 + $0x418] sm:$0xff]
      %v631 = vld [vmem:[%s1 + $0x420] sm:$0xff]
      %v632 = vld [vmem:[%s1 + $0x428] sm:$0xff]
      %v633 = vld [vmem:[%s1 + $0x430] sm:$0xff]
      %v634 = vld [vmem:[%s1 + $0x438] sm:$0xff]
      %v635 = vld [vmem:[%s1 + $0x440] sm:$0xff]
      %v636 = vld [vmem:[%s1 + $0x448] sm:$0xff]
      %v637 = vld [vmem:[%s1 + $0x450] sm:$0xff]
      %v638 = vld [vmem:[%s1 + $0x458] sm:$0xff]
      %v639 = vld [vmem:[%s1 + $0x460] sm:$0xff]
      %v640 = vld [vmem:[%s1 + $0x468] sm:$0xff]
      %v641 = vld [vmem:[%s1 + $0x470] sm:$0xff]
      %v642 = vld [vmem:[%s1 + $0x478] sm:$0xff]
      %v643 = vld [vmem:[%s1 + $0x480] sm:$0xff]
      %v644 = vld [vmem:[%s1 + $0x488] sm:$0xff]
      %v645 = vld [vmem:[%s1 + $0x490] sm:$0xff]
      %v646 = vld [vmem:[%s1 + $0x498] sm:$0xff]
      %v647 = vld [vmem:[%s1 + $0x4a0] sm:$0xff]
      %v648 = vld [vmem:[%s1 + $0x4a8] sm:$0xff]
      %v649 = vld [vmem:[%s1 + $0x4b0] sm:$0xff]
      %v650 = vld [vmem:[%s1 + $0x4b8] sm:$0xff]
      %v651 = vld [vmem:[%s1 + $0x4c0] sm:$0xff]
      %v652 = vld [vmem:[%s1 + $0x4c8] sm:$0xff]
      %v653 = vld [vmem:[%s1 + $0x4d0] sm:$0xff]
      %v654 = vld [vmem:[%s1 + $0x4d8] sm:$0xff]
      %v655 = vld [vmem:[%s1 + $0x4e0] sm:$0xff]
      %v656 = vld [vmem:[%s1 + $0x4e8] sm:$0xff]
      %v657 = vld [vmem:[%s1 + $0x4f0] sm:$0xff]
      %v658 = vld [vmem:[%s1 + $0x4f8] sm:$0xff]
      %v659 = vld [vmem:[%s1 + $0x500] sm:$0xff]
      %v660 = vld [vmem:[%s1 + $0x508] sm:$0xff]
      %v661 = vld [vmem:[%s1 + $0x510] sm:$0xff]
      %v662 = vld [vmem:[%s1 + $0x518] sm:$0xff]
      %v663 = vld [vmem:[%s1 + $0x520] sm:$0xff]
      %v664 = vld [vmem:[%s1 + $0x528] sm:$0xff]
      %v665 = vld [vmem:[%s1 + $0x530] sm:$0xff]
      %v666 = vld [vmem:[%s1 + $0x538] sm:$0xff]
      %v667 = vld [vmem:[%s1 + $0x540] sm:$0xff]
      %v668 = vld [vmem:[%s1 + $0x548] sm:$0xff]
      %v669 = vld [vmem:[%s1 + $0x550] sm:$0xff]
      %v670 = vld [vmem:[%s1 + $0x558] sm:$0xff]
      %v671 = vld [vmem:[%s1 + $0x560] sm:$0xff]
      %v672 = vld [vmem:[%s1 + $0x568] sm:$0xff]
      %v673 = vld [vmem:[%s1 + $0x570] sm:$0xff]
      %v674 = vld [vmem:[%s1 + $0x578] sm:$0xff]
      %v675 = vld [vmem:[%s1 + $0x580] sm:$0xff]
      %v676 = vld [vmem:[%s1 + $0x588] sm:$0xff]
      %v677 = vld [vmem:[%s1 + $0x590] sm:$0xff]
      %v678 = vld [vmem:[%s1 + $0x598] sm:$0xff]
      %v679 = vld [vmem:[%s1 + $0x5a0] sm:$0xff]
      %v680 = vld [vmem:[%s1 + $0x5a8] sm:$0xff]
      %v681 = vld [vmem:[%s1 + $0x5b0] sm:$0xff]
      %v682 = vld [vmem:[%s1 + $0x5b8] sm:$0xff]
      %v683 = vld [vmem:[%s1 + $0x5c0] sm:$0xff]
      %v684 = vld [vmem:[%s1 + $0x5c8] sm:$0xff]
      %v685 = vld [vmem:[%s1 + $0x5d0] sm:$0xff]
      %v686 = vld [vmem:[%s1 + $0x5d8] sm:$0xff]
      %v687 = vld [vmem:[%s1 + $0x5e0] sm:$0xff]
      %v688 = vld [vmem:[%s1 + $0x5e8] sm:$0xff]
      %v689 = vld [vmem:[%s1 + $0x5f0] sm:$0xff]
      %v690 = vld [vmem:[%s1 + $0x5f8] sm:$0xff]
      %v691 = vld [vmem:[%s1 + $0x600] sm:$0xff]
      %v692 = vld [vmem:[%s1 + $0x608] sm:$0xff]
      %v693 = vld [vmem:[%s1 + $0x610] sm:$0xff]
      %v694 = vld [vmem:[%s1 + $0x618] sm:$0xff]
      %v695 = vld [vmem:[%s2] sm:$0xf]
      %v697 = vlaneseq
      %v698 = vshrl.u32 %v697, 7
      %v699 = vsub.s32 0, %v698
      %v700 = vrot.slane %v695, %v699
      %v701 = vlaneseq
      %v702 = vshrl.u32 %v701, 7
      %v703 = vsub.s32 1, %v702
      %v704 = vrot.slane %v695, %v703
      %v705 = vlaneseq
      %v706 = vshrl.u32 %v705, 7
      %v707 = vsub.s32 2, %v706
      %v708 = vrot.slane %v695, %v707
      %v709 = vlaneseq
      %v710 = vshrl.u32 %v709, 7
      %v711 = vsub.s32 3, %v710
      %v712 = vrot.slane %v695, %v711
      %v913 = vunpack.c.l.b16 %v499
      %v914 = vunpack.c.h.b16 %v499
      %v915 = vunpack.c.l.b16 %v500
      %v916 = vunpack.c.h.b16 %v500
      %v917 = vunpack.c.l.b16 %v501
      %v918 = vunpack.c.h.b16 %v501
      %v919 = vunpack.c.l.b16 %v502
      %v920 = vunpack.c.h.b16 %v502
      %v921 = vunpack.c.l.b16 %v503
      %v922 = vunpack.c.h.b16 %v503
      %v923 = vunpack.c.l.b16 %v504
      %v924 = vunpack.c.h.b16 %v504
      %v925 = vunpack.c.l.b16 %v505
      %v926 = vunpack.c.h.b16 %v505
      %v927 = vunpack.c.l.b16 %v506
      %v928 = vunpack.c.h.b16 %v506
      %v929 = vunpack.c.l.b16 %v507
      %v930 = vunpack.c.h.b16 %v507
      %v931 = vunpack.c.l.b16 %v508
      %v932 = vunpack.c.h.b16 %v508
      %v933 = vunpack.c.l.b16 %v509
      %v934 = vunpack.c.h.b16 %v509
      %v935 = vunpack.c.l.b16 %v510
      %v936 = vunpack.c.h.b16 %v510
      %v937 = vunpack.c.l.b16 %v511
      %v938 = vunpack.c.h.b16 %v511
      %v939 = vunpack.c.l.b16 %v512
      %v940 = vunpack.c.h.b16 %v512
      %v941 = vunpack.c.l.b16 %v513
      %v942 = vunpack.c.h.b16 %v513
      %v943 = vunpack.c.l.b16 %v514
      %v944 = vunpack.c.h.b16 %v514
      %v945 = vunpack.c.l.b16 %v515
      %v946 = vunpack.c.h.b16 %v515
      %v947 = vunpack.c.l.b16 %v516
      %v948 = vunpack.c.h.b16 %v516
      %v949 = vunpack.c.l.b16 %v517
      %v950 = vunpack.c.h.b16 %v517
      %v951 = vunpack.c.l.b16 %v518
      %v952 = vunpack.c.h.b16 %v518
      %v953 = vunpack.c.l.b16 %v519
      %v954 = vunpack.c.h.b16 %v519
      %v955 = vunpack.c.l.b16 %v520
      %v956 = vunpack.c.h.b16 %v520
      %v957 = vunpack.c.l.b16 %v521
      %v958 = vunpack.c.h.b16 %v521
      %v959 = vunpack.c.l.b16 %v522
      %v960 = vunpack.c.h.b16 %v522
      %v961 = vunpack.c.l.b16 %v523
      %v962 = vunpack.c.h.b16 %v523
      %v963 = vunpack.c.l.b16 %v524
      %v964 = vunpack.c.h.b16 %v524
      %v965 = vunpack.c.l.b16 %v525
      %v966 = vunpack.c.h.b16 %v525
      %v967 = vunpack.c.l.b16 %v526
      %v968 = vunpack.c.h.b16 %v526
      %v969 = vunpack.c.l.b16 %v527
      %v970 = vunpack.c.h.b16 %v527
      %v971 = vunpack.c.l.b16 %v528
      %v972 = vunpack.c.h.b16 %v528
      %v973 = vunpack.c.l.b16 %v529
      %v974 = vunpack.c.h.b16 %v529
      %v975 = vunpack.c.l.b16 %v530
      %v976 = vunpack.c.h.b16 %v530
      %v977 = vunpack.c.l.b16 %v531
      %v978 = vunpack.c.h.b16 %v531
      %v979 = vunpack.c.l.b16 %v532
      %v980 = vunpack.c.h.b16 %v532
      %v981 = vunpack.c.l.b16 %v533
      %v982 = vunpack.c.h.b16 %v533
      %v983 = vunpack.c.l.b16 %v534
      %v984 = vunpack.c.h.b16 %v534
      %v985 = vunpack.c.l.b16 %v535
      %v986 = vunpack.c.h.b16 %v535
      %v987 = vunpack.c.l.b16 %v536
      %v988 = vunpack.c.h.b16 %v536
      %v989 = vunpack.c.l.b16 %v537
      %v990 = vunpack.c.h.b16 %v537
      %v991 = vunpack.c.l.b16 %v538
      %v992 = vunpack.c.h.b16 %v538
      %v993 = vunpack.c.l.b16 %v539
      %v994 = vunpack.c.h.b16 %v539
      %v995 = vunpack.c.l.b16 %v540
      %v996 = vunpack.c.h.b16 %v540
      %v997 = vunpack.c.l.b16 %v541
      %v998 = vunpack.c.h.b16 %v541
      %v999 = vunpack.c.l.b16 %v542
      %v1000 = vunpack.c.h.b16 %v542
      %v1001 = vunpack.c.l.b16 %v543
      %v1002 = vunpack.c.h.b16 %v543
      %v1003 = vunpack.c.l.b16 %v544
      %v1004 = vunpack.c.h.b16 %v544
      %v1005 = vunpack.c.l.b16 %v545
      %v1006 = vunpack.c.h.b16 %v545
      %v1007 = vunpack.c.l.b16 %v546
      %v1008 = vunpack.c.h.b16 %v546
      %v1009 = vunpack.c.l.b16 %v547
      %v1010 = vunpack.c.h.b16 %v547
      %v1011 = vunpack.c.l.b16 %v548
      %v1012 = vunpack.c.h.b16 %v548
      %v1013 = vunpack.c.l.b16 %v549
      %v1014 = vunpack.c.h.b16 %v549
      %v1015 = vunpack.c.l.b16 %v550
      %v1016 = vunpack.c.h.b16 %v550
      %v1017 = vunpack.c.l.b16 %v551
      %v1018 = vunpack.c.h.b16 %v551
      %v1019 = vunpack.c.l.b16 %v552
      %v1020 = vunpack.c.h.b16 %v552
      %v1021 = vunpack.c.l.b16 %v553
      %v1022 = vunpack.c.h.b16 %v553
      %v1023 = vunpack.c.l.b16 %v554
      %v1024 = vunpack.c.h.b16 %v554
      %v1025 = vunpack.c.l.b16 %v555
      %v1026 = vunpack.c.h.b16 %v555
      %v1027 = vunpack.c.l.b16 %v556
      %v1028 = vunpack.c.h.b16 %v556
      %v1029 = vunpack.c.l.b16 %v557
      %v1030 = vunpack.c.h.b16 %v557
      %v1031 = vunpack.c.l.b16 %v558
      %v1032 = vunpack.c.h.b16 %v558
      %v1033 = vunpack.c.l.b16 %v559
      %v1034 = vunpack.c.h.b16 %v559
      %v1035 = vunpack.c.l.b16 %v560
      %v1036 = vunpack.c.h.b16 %v560
      %v1037 = vunpack.c.l.b16 %v561
      %v1038 = vunpack.c.h.b16 %v561
      %v1039 = vunpack.c.l.b16 %v562
      %v1040 = vunpack.c.h.b16 %v562
      %v1041 = vunpack.c.l.b16 %v563
      %v1042 = vunpack.c.h.b16 %v563
      %v1043 = vunpack.c.l.b16 %v564
      %v1044 = vunpack.c.h.b16 %v564
      %v1045 = vunpack.c.l.b16 %v565
      %v1046 = vunpack.c.h.b16 %v565
      %v1047 = vunpack.c.l.b16 %v566
      %v1048 = vunpack.c.h.b16 %v566
      %v1049 = vunpack.c.l.b16 %v567
      %v1050 = vunpack.c.h.b16 %v567
      %v1051 = vunpack.c.l.b16 %v568
      %v1052 = vunpack.c.h.b16 %v568
      %v1053 = vunpack.c.l.b16 %v569
      %v1054 = vunpack.c.h.b16 %v569
      %v1055 = vunpack.c.l.b16 %v570
      %v1056 = vunpack.c.h.b16 %v570
      %v1057 = vunpack.c.l.b16 %v571
      %v1058 = vunpack.c.h.b16 %v571
      %v1059 = vunpack.c.l.b16 %v572
      %v1060 = vunpack.c.h.b16 %v572
      %v1061 = vunpack.c.l.b16 %v573
      %v1062 = vunpack.c.h.b16 %v573
      %v1063 = vunpack.c.l.b16 %v574
      %v1064 = vunpack.c.h.b16 %v574
      %v1065 = vunpack.c.l.b16 %v575
      %v1066 = vunpack.c.h.b16 %v575
      %v1067 = vunpack.c.l.b16 %v576
      %v1068 = vunpack.c.h.b16 %v576
      %v1069 = vunpack.c.l.b16 %v577
      %v1070 = vunpack.c.h.b16 %v577
      %v1071 = vunpack.c.l.b16 %v578
      %v1072 = vunpack.c.h.b16 %v578
      %v1073 = vunpack.c.l.b16 %v579
      %v1074 = vunpack.c.h.b16 %v579
      %v1075 = vunpack.c.l.b16 %v580
      %v1076 = vunpack.c.h.b16 %v580
      %v1077 = vunpack.c.l.b16 %v581
      %v1078 = vunpack.c.h.b16 %v581
      %v1079 = vunpack.c.l.b16 %v582
      %v1080 = vunpack.c.h.b16 %v582
      %v1081 = vunpack.c.l.b16 %v583
      %v1082 = vunpack.c.h.b16 %v583
      %v1083 = vunpack.c.l.b16 %v584
      %v1084 = vunpack.c.h.b16 %v584
      %v1085 = vunpack.c.l.b16 %v585
      %v1086 = vunpack.c.h.b16 %v585
      %v1087 = vunpack.c.l.b16 %v586
      %v1088 = vunpack.c.h.b16 %v586
      %v1089 = vunpack.c.l.b16 %v587
      %v1090 = vunpack.c.h.b16 %v587
      %v1091 = vunpack.c.l.b16 %v588
      %v1092 = vunpack.c.h.b16 %v588
      %v1093 = vunpack.c.l.b16 %v589
      %v1094 = vunpack.c.h.b16 %v589
      %v1095 = vunpack.c.l.b16 %v590
      %v1096 = vunpack.c.h.b16 %v590
      %v1097 = vunpack.c.l.b16 %v591
      %v1098 = vunpack.c.h.b16 %v591
      %v1099 = vunpack.c.l.b16 %v592
      %v1100 = vunpack.c.h.b16 %v592
      %v1101 = vunpack.c.l.b16 %v593
      %v1102 = vunpack.c.h.b16 %v593
      %v1103 = vunpack.c.l.b16 %v594
      %v1104 = vunpack.c.h.b16 %v594
      %v1105 = vunpack.c.l.b16 %v595
      %v1106 = vunpack.c.h.b16 %v595
      %v1107 = vunpack.c.l.b16 %v596
      %v1108 = vunpack.c.h.b16 %v596
      %v1109 = vunpack.c.l.b16 %v597
      %v1110 = vunpack.c.h.b16 %v597
      %v1111 = vunpack.c.l.b16 %v598
      %v1112 = vunpack.c.h.b16 %v598
      %v1113 = vunpack.c.l.b16 %v599
      %v1114 = vunpack.c.h.b16 %v599
      %v1115 = vunpack.c.l.b16 %v600
      %v1116 = vunpack.c.h.b16 %v600
      %v1117 = vunpack.c.l.b16 %v601
      %v1118 = vunpack.c.h.b16 %v601
      %v1119 = vunpack.c.l.b16 %v602
      %v1120 = vunpack.c.h.b16 %v602
      %v1121 = vunpack.c.l.b16 %v603
      %v1122 = vunpack.c.h.b16 %v603
      %v1123 = vunpack.c.l.b16 %v604
      %v1124 = vunpack.c.h.b16 %v604
      %v1125 = vunpack.c.l.b16 %v605
      %v1126 = vunpack.c.h.b16 %v605
      %v1127 = vunpack.c.l.b16 %v606
      %v1128 = vunpack.c.h.b16 %v606
      %v1129 = vunpack.c.l.b16 %v607
      %v1130 = vunpack.c.h.b16 %v607
      %v1131 = vunpack.c.l.b16 %v608
      %v1132 = vunpack.c.h.b16 %v608
      %v1133 = vunpack.c.l.b16 %v609
      %v1134 = vunpack.c.h.b16 %v609
      %v1135 = vunpack.c.l.b16 %v610
      %v1136 = vunpack.c.h.b16 %v610
      %v1137 = vunpack.c.l.b16 %v611
      %v1138 = vunpack.c.h.b16 %v611
      %v1139 = vunpack.c.l.b16 %v612
      %v1140 = vunpack.c.h.b16 %v612
      %v1141 = vunpack.c.l.b16 %v613
      %v1142 = vunpack.c.h.b16 %v613
      %v1143 = vunpack.c.l.b16 %v614
      %v1144 = vunpack.c.h.b16 %v614
      %v1145 = vunpack.c.l.b16 %v615
      %v1146 = vunpack.c.h.b16 %v615
      %v1147 = vunpack.c.l.b16 %v616
      %v1148 = vunpack.c.h.b16 %v616
      %v1149 = vunpack.c.l.b16 %v617
      %v1150 = vunpack.c.h.b16 %v617
      %v1151 = vunpack.c.l.b16 %v618
      %v1152 = vunpack.c.h.b16 %v618
      %v1153 = vunpack.c.l.b16 %v619
      %v1154 = vunpack.c.h.b16 %v619
      %v1155 = vunpack.c.l.b16 %v620
      %v1156 = vunpack.c.h.b16 %v620
      %v1157 = vunpack.c.l.b16 %v621
      %v1158 = vunpack.c.h.b16 %v621
      %v1159 = vunpack.c.l.b16 %v622
      %v1160 = vunpack.c.h.b16 %v622
      %v1161 = vunpack.c.l.b16 %v623
      %v1162 = vunpack.c.h.b16 %v623
      %v1163 = vunpack.c.l.b16 %v624
      %v1164 = vunpack.c.h.b16 %v624
      %v1165 = vunpack.c.l.b16 %v625
      %v1166 = vunpack.c.h.b16 %v625
      %v1167 = vunpack.c.l.b16 %v626
      %v1168 = vunpack.c.h.b16 %v626
      %v1169 = vunpack.c.l.b16 %v627
      %v1170 = vunpack.c.h.b16 %v627
      %v1171 = vunpack.c.l.b16 %v628
      %v1172 = vunpack.c.h.b16 %v628
      %v1173 = vunpack.c.l.b16 %v629
      %v1174 = vunpack.c.h.b16 %v629
      %v1175 = vunpack.c.l.b16 %v630
      %v1176 = vunpack.c.h.b16 %v630
      %v1177 = vunpack.c.l.b16 %v631
      %v1178 = vunpack.c.h.b16 %v631
      %v1179 = vunpack.c.l.b16 %v632
      %v1180 = vunpack.c.h.b16 %v632
      %v1181 = vunpack.c.l.b16 %v633
      %v1182 = vunpack.c.h.b16 %v633
      %v1183 = vunpack.c.l.b16 %v634
      %v1184 = vunpack.c.h.b16 %v634
      %v1185 = vunpack.c.l.b16 %v635
      %v1186 = vunpack.c.h.b16 %v635
      %v1187 = vunpack.c.l.b16 %v636
      %v1188 = vunpack.c.h.b16 %v636
      %v1189 = vunpack.c.l.b16 %v637
      %v1190 = vunpack.c.h.b16 %v637
      %v1191 = vunpack.c.l.b16 %v638
      %v1192 = vunpack.c.h.b16 %v638
      %v1193 = vunpack.c.l.b16 %v639
      %v1194 = vunpack.c.h.b16 %v639
      %v1195 = vunpack.c.l.b16 %v640
      %v1196 = vunpack.c.h.b16 %v640
      %v1197 = vunpack.c.l.b16 %v641
      %v1198 = vunpack.c.h.b16 %v641
      %v1199 = vunpack.c.l.b16 %v642
      %v1200 = vunpack.c.h.b16 %v642
      %v1201 = vunpack.c.l.b16 %v643
      %v1202 = vunpack.c.h.b16 %v643
      %v1203 = vunpack.c.l.b16 %v644
      %v1204 = vunpack.c.h.b16 %v644
      %v1205 = vunpack.c.l.b16 %v645
      %v1206 = vunpack.c.h.b16 %v645
      %v1207 = vunpack.c.l.b16 %v646
      %v1208 = vunpack.c.h.b16 %v646
      %v1209 = vunpack.c.l.b16 %v647
      %v1210 = vunpack.c.h.b16 %v647
      %v1211 = vunpack.c.l.b16 %v648
      %v1212 = vunpack.c.h.b16 %v648
      %v1213 = vunpack.c.l.b16 %v649
      %v1214 = vunpack.c.h.b16 %v649
      %v1215 = vunpack.c.l.b16 %v650
      %v1216 = vunpack.c.h.b16 %v650
      %v1217 = vunpack.c.l.b16 %v651
      %v1218 = vunpack.c.h.b16 %v651
      %v1219 = vunpack.c.l.b16 %v652
      %v1220 = vunpack.c.h.b16 %v652
      %v1221 = vunpack.c.l.b16 %v653
      %v1222 = vunpack.c.h.b16 %v653
      %v1223 = vunpack.c.l.b16 %v654
      %v1224 = vunpack.c.h.b16 %v654
      %v1225 = vunpack.c.l.b16 %v655
      %v1226 = vunpack.c.h.b16 %v655
      %v1227 = vunpack.c.l.b16 %v656
      %v1228 = vunpack.c.h.b16 %v656
      %v1229 = vunpack.c.l.b16 %v657
      %v1230 = vunpack.c.h.b16 %v657
      %v1231 = vunpack.c.l.b16 %v658
      %v1232 = vunpack.c.h.b16 %v658
      %v1233 = vunpack.c.l.b16 %v659
      %v1234 = vunpack.c.h.b16 %v659
      %v1235 = vunpack.c.l.b16 %v660
      %v1236 = vunpack.c.h.b16 %v660
      %v1237 = vunpack.c.l.b16 %v661
      %v1238 = vunpack.c.h.b16 %v661
      %v1239 = vunpack.c.l.b16 %v662
      %v1240 = vunpack.c.h.b16 %v662
      %v1241 = vunpack.c.l.b16 %v663
      %v1242 = vunpack.c.h.b16 %v663
      %v1243 = vunpack.c.l.b16 %v664
      %v1244 = vunpack.c.h.b16 %v664
      %v1245 = vunpack.c.l.b16 %v665
      %v1246 = vunpack.c.h.b16 %v665
      %v1247 = vunpack.c.l.b16 %v666
      %v1248 = vunpack.c.h.b16 %v666
      %v1249 = vunpack.c.l.b16 %v667
      %v1250 = vunpack.c.h.b16 %v667
      %v1251 = vunpack.c.l.b16 %v668
      %v1252 = vunpack.c.h.b16 %v668
      %v1253 = vunpack.c.l.b16 %v669
      %v1254 = vunpack.c.h.b16 %v669
      %v1255 = vunpack.c.l.b16 %v670
      %v1256 = vunpack.c.h.b16 %v670
      %v1257 = vunpack.c.l.b16 %v671
      %v1258 = vunpack.c.h.b16 %v671
      %v1259 = vunpack.c.l.b16 %v672
      %v1260 = vunpack.c.h.b16 %v672
      %v1261 = vunpack.c.l.b16 %v673
      %v1262 = vunpack.c.h.b16 %v673
      %v1263 = vunpack.c.l.b16 %v674
      %v1264 = vunpack.c.h.b16 %v674
      %v1265 = vunpack.c.l.b16 %v675
      %v1266 = vunpack.c.h.b16 %v675
      %v1267 = vunpack.c.l.b16 %v676
      %v1268 = vunpack.c.h.b16 %v676
      %v1269 = vunpack.c.l.b16 %v677
      %v1270 = vunpack.c.h.b16 %v677
      %v1271 = vunpack.c.l.b16 %v678
      %v1272 = vunpack.c.h.b16 %v678
      %v1273 = vunpack.c.l.b16 %v679
      %v1274 = vunpack.c.h.b16 %v679
      %v1275 = vunpack.c.l.b16 %v680
      %v1276 = vunpack.c.h.b16 %v680
      %v1277 = vunpack.c.l.b16 %v681
      %v1278 = vunpack.c.h.b16 %v681
      %v1279 = vunpack.c.l.b16 %v682
      %v1280 = vunpack.c.h.b16 %v682
      %v1281 = vunpack.c.l.b16 %v683
      %v1282 = vunpack.c.h.b16 %v683
      %v1283 = vunpack.c.l.b16 %v684
      %v1284 = vunpack.c.h.b16 %v684
      %v1285 = vunpack.c.l.b16 %v685
      %v1286 = vunpack.c.h.b16 %v685
      %v1287 = vunpack.c.l.b16 %v686
      %v1288 = vunpack.c.h.b16 %v686
      %v1289 = vunpack.c.l.b16 %v687
      %v1290 = vunpack.c.h.b16 %v687
      %v1291 = vunpack.c.l.b16 %v688
      %v1292 = vunpack.c.h.b16 %v688
      %v1293 = vunpack.c.l.b16 %v689
      %v1294 = vunpack.c.h.b16 %v689
      %v1295 = vunpack.c.l.b16 %v690
      %v1296 = vunpack.c.h.b16 %v690
      %v1297 = vunpack.c.l.b16 %v691
      %v1298 = vunpack.c.h.b16 %v691
      %v1299 = vunpack.c.l.b16 %v692
      %v1300 = vunpack.c.h.b16 %v692
      %v1301 = vunpack.c.l.b16 %v693
      %v1302 = vunpack.c.h.b16 %v693
      %v1303 = vunpack.c.l.b16 %v694
      %v1304 = vunpack.c.h.b16 %v694
      %v1305 = vpack.c.b16 %v917, %v913
      %v1306 = vpack.c.b16 %v918, %v914
      %v1307 = vpack.c.b16 %v919, %v915
      %v1308 = vpack.c.b16 %v920, %v916
      %v1309 = vpack.c.b16 %v925, %v921
      %v1310 = vpack.c.b16 %v926, %v922
      %v1311 = vpack.c.b16 %v927, %v923
      %v1312 = vpack.c.b16 %v928, %v924
      %v1313 = vpack.c.b16 %v933, %v929
      %v1314 = vpack.c.b16 %v934, %v930
      %v1315 = vpack.c.b16 %v935, %v931
      %v1316 = vpack.c.b16 %v936, %v932
      %v1317 = vpack.c.b16 %v941, %v937
      %v1318 = vpack.c.b16 %v942, %v938
      %v1319 = vpack.c.b16 %v943, %v939
      %v1320 = vpack.c.b16 %v944, %v940
      %v1321 = vpack.c.b16 %v949, %v945
      %v1322 = vpack.c.b16 %v950, %v946
      %v1323 = vpack.c.b16 %v951, %v947
      %v1324 = vpack.c.b16 %v952, %v948
      %v1325 = vpack.c.b16 %v957, %v953
      %v1326 = vpack.c.b16 %v958, %v954
      %v1327 = vpack.c.b16 %v959, %v955
      %v1328 = vpack.c.b16 %v960, %v956
      %v1329 = vpack.c.b16 %v965, %v961
      %v1330 = vpack.c.b16 %v966, %v962
      %v1331 = vpack.c.b16 %v967, %v963
      %v1332 = vpack.c.b16 %v968, %v964
      %v1333 = vpack.c.b16 %v973, %v969
      %v1334 = vpack.c.b16 %v974, %v970
      %v1335 = vpack.c.b16 %v975, %v971
      %v1336 = vpack.c.b16 %v976, %v972
      %v1337 = vpack.c.b16 %v981, %v977
      %v1338 = vpack.c.b16 %v982, %v978
      %v1339 = vpack.c.b16 %v983, %v979
      %v1340 = vpack.c.b16 %v984, %v980
      %v1341 = vpack.c.b16 %v989, %v985
      %v1342 = vpack.c.b16 %v990, %v986
      %v1343 = vpack.c.b16 %v991, %v987
      %v1344 = vpack.c.b16 %v992, %v988
      %v1345 = vpack.c.b16 %v997, %v993
      %v1346 = vpack.c.b16 %v998, %v994
      %v1347 = vpack.c.b16 %v999, %v995
      %v1348 = vpack.c.b16 %v1000, %v996
      %v1349 = vpack.c.b16 %v1005, %v1001
      %v1350 = vpack.c.b16 %v1006, %v1002
      %v1351 = vpack.c.b16 %v1007, %v1003
      %v1352 = vpack.c.b16 %v1008, %v1004
      %v1353 = vpack.c.b16 %v1013, %v1009
      %v1354 = vpack.c.b16 %v1014, %v1010
      %v1355 = vpack.c.b16 %v1015, %v1011
      %v1356 = vpack.c.b16 %v1016, %v1012
      %v1357 = vpack.c.b16 %v1021, %v1017
      %v1358 = vpack.c.b16 %v1022, %v1018
      %v1359 = vpack.c.b16 %v1023, %v1019
      %v1360 = vpack.c.b16 %v1024, %v1020
      %v1361 = vpack.c.b16 %v1029, %v1025
      %v1362 = vpack.c.b16 %v1030, %v1026
      %v1363 = vpack.c.b16 %v1031, %v1027
      %v1364 = vpack.c.b16 %v1032, %v1028
      %v1365 = vpack.c.b16 %v1037, %v1033
      %v1366 = vpack.c.b16 %v1038, %v1034
      %v1367 = vpack.c.b16 %v1039, %v1035
      %v1368 = vpack.c.b16 %v1040, %v1036
      %v1369 = vpack.c.b16 %v1045, %v1041
      %v1370 = vpack.c.b16 %v1046, %v1042
      %v1371 = vpack.c.b16 %v1047, %v1043
      %v1372 = vpack.c.b16 %v1048, %v1044
      %v1373 = vpack.c.b16 %v1053, %v1049
      %v1374 = vpack.c.b16 %v1054, %v1050
      %v1375 = vpack.c.b16 %v1055, %v1051
      %v1376 = vpack.c.b16 %v1056, %v1052
      %v1377 = vpack.c.b16 %v1061, %v1057
      %v1378 = vpack.c.b16 %v1062, %v1058
      %v1379 = vpack.c.b16 %v1063, %v1059
      %v1380 = vpack.c.b16 %v1064, %v1060
      %v1381 = vpack.c.b16 %v1069, %v1065
      %v1382 = vpack.c.b16 %v1070, %v1066
      %v1383 = vpack.c.b16 %v1071, %v1067
      %v1384 = vpack.c.b16 %v1072, %v1068
      %v1385 = vpack.c.b16 %v1077, %v1073
      %v1386 = vpack.c.b16 %v1078, %v1074
      %v1387 = vpack.c.b16 %v1079, %v1075
      %v1388 = vpack.c.b16 %v1080, %v1076
      %v1389 = vpack.c.b16 %v1085, %v1081
      %v1390 = vpack.c.b16 %v1086, %v1082
      %v1391 = vpack.c.b16 %v1087, %v1083
      %v1392 = vpack.c.b16 %v1088, %v1084
      %v1393 = vpack.c.b16 %v1093, %v1089
      %v1394 = vpack.c.b16 %v1094, %v1090
      %v1395 = vpack.c.b16 %v1095, %v1091
      %v1396 = vpack.c.b16 %v1096, %v1092
      %v1397 = vpack.c.b16 %v1101, %v1097
      %v1398 = vpack.c.b16 %v1102, %v1098
      %v1399 = vpack.c.b16 %v1103, %v1099
      %v1400 = vpack.c.b16 %v1104, %v1100
      %v1401 = vpack.c.b16 %v1109, %v1105
      %v1402 = vpack.c.b16 %v1110, %v1106
      %v1403 = vpack.c.b16 %v1111, %v1107
      %v1404 = vpack.c.b16 %v1112, %v1108
      %v1405 = vpack.c.b16 %v1117, %v1113
      %v1406 = vpack.c.b16 %v1118, %v1114
      %v1407 = vpack.c.b16 %v1119, %v1115
      %v1408 = vpack.c.b16 %v1120, %v1116
      %v1409 = vpack.c.b16 %v1125, %v1121
      %v1410 = vpack.c.b16 %v1126, %v1122
      %v1411 = vpack.c.b16 %v1127, %v1123
      %v1412 = vpack.c.b16 %v1128, %v1124
      %v1413 = vpack.c.b16 %v1133, %v1129
      %v1414 = vpack.c.b16 %v1134, %v1130
      %v1415 = vpack.c.b16 %v1135, %v1131
      %v1416 = vpack.c.b16 %v1136, %v1132
      %v1417 = vpack.c.b16 %v1141, %v1137
      %v1418 = vpack.c.b16 %v1142, %v1138
      %v1419 = vpack.c.b16 %v1143, %v1139
      %v1420 = vpack.c.b16 %v1144, %v1140
      %v1421 = vpack.c.b16 %v1149, %v1145
      %v1422 = vpack.c.b16 %v1150, %v1146
      %v1423 = vpack.c.b16 %v1151, %v1147
      %v1424 = vpack.c.b16 %v1152, %v1148
      %v1425 = vpack.c.b16 %v1157, %v1153
      %v1426 = vpack.c.b16 %v1158, %v1154
      %v1427 = vpack.c.b16 %v1159, %v1155
      %v1428 = vpack.c.b16 %v1160, %v1156
      %v1429 = vpack.c.b16 %v1165, %v1161
      %v1430 = vpack.c.b16 %v1166, %v1162
      %v1431 = vpack.c.b16 %v1167, %v1163
      %v1432 = vpack.c.b16 %v1168, %v1164
      %v1433 = vpack.c.b16 %v1173, %v1169
      %v1434 = vpack.c.b16 %v1174, %v1170
      %v1435 = vpack.c.b16 %v1175, %v1171
      %v1436 = vpack.c.b16 %v1176, %v1172
      %v1437 = vpack.c.b16 %v1181, %v1177
      %v1438 = vpack.c.b16 %v1182, %v1178
      %v1439 = vpack.c.b16 %v1183, %v1179
      %v1440 = vpack.c.b16 %v1184, %v1180
      %v1441 = vpack.c.b16 %v1189, %v1185
      %v1442 = vpack.c.b16 %v1190, %v1186
      %v1443 = vpack.c.b16 %v1191, %v1187
      %v1444 = vpack.c.b16 %v1192, %v1188
      %v1445 = vpack.c.b16 %v1197, %v1193
      %v1446 = vpack.c.b16 %v1198, %v1194
      %v1447 = vpack.c.b16 %v1199, %v1195
      %v1448 = vpack.c.b16 %v1200, %v1196
      %v1449 = vpack.c.b16 %v1205, %v1201
      %v1450 = vpack.c.b16 %v1206, %v1202
      %v1451 = vpack.c.b16 %v1207, %v1203
      %v1452 = vpack.c.b16 %v1208, %v1204
      %v1453 = vpack.c.b16 %v1213, %v1209
      %v1454 = vpack.c.b16 %v1214, %v1210
      %v1455 = vpack.c.b16 %v1215, %v1211
      %v1456 = vpack.c.b16 %v1216, %v1212
      %v1457 = vpack.c.b16 %v1221, %v1217
      %v1458 = vpack.c.b16 %v1222, %v1218
      %v1459 = vpack.c.b16 %v1223, %v1219
      %v1460 = vpack.c.b16 %v1224, %v1220
      %v1461 = vpack.c.b16 %v1229, %v1225
      %v1462 = vpack.c.b16 %v1230, %v1226
      %v1463 = vpack.c.b16 %v1231, %v1227
      %v1464 = vpack.c.b16 %v1232, %v1228
      %v1465 = vpack.c.b16 %v1237, %v1233
      %v1466 = vpack.c.b16 %v1238, %v1234
      %v1467 = vpack.c.b16 %v1239, %v1235
      %v1468 = vpack.c.b16 %v1240, %v1236
      %v1469 = vpack.c.b16 %v1245, %v1241
      %v1470 = vpack.c.b16 %v1246, %v1242
      %v1471 = vpack.c.b16 %v1247, %v1243
      %v1472 = vpack.c.b16 %v1248, %v1244
      %v1473 = vpack.c.b16 %v1253, %v1249
      %v1474 = vpack.c.b16 %v1254, %v1250
      %v1475 = vpack.c.b16 %v1255, %v1251
      %v1476 = vpack.c.b16 %v1256, %v1252
      %v1477 = vpack.c.b16 %v1261, %v1257
      %v1478 = vpack.c.b16 %v1262, %v1258
      %v1479 = vpack.c.b16 %v1263, %v1259
      %v1480 = vpack.c.b16 %v1264, %v1260
      %v1481 = vpack.c.b16 %v1269, %v1265
      %v1482 = vpack.c.b16 %v1270, %v1266
      %v1483 = vpack.c.b16 %v1271, %v1267
      %v1484 = vpack.c.b16 %v1272, %v1268
      %v1485 = vpack.c.b16 %v1277, %v1273
      %v1486 = vpack.c.b16 %v1278, %v1274
      %v1487 = vpack.c.b16 %v1279, %v1275
      %v1488 = vpack.c.b16 %v1280, %v1276
      %v1489 = vpack.c.b16 %v1285, %v1281
      %v1490 = vpack.c.b16 %v1286, %v1282
      %v1491 = vpack.c.b16 %v1287, %v1283
      %v1492 = vpack.c.b16 %v1288, %v1284
      %v1493 = vpack.c.b16 %v1293, %v1289
      %v1494 = vpack.c.b16 %v1294, %v1290
      %v1495 = vpack.c.b16 %v1295, %v1291
      %v1496 = vpack.c.b16 %v1296, %v1292
      %v1497 = vpack.c.b16 %v1301, %v1297
      %v1498 = vpack.c.b16 %v1302, %v1298
      %v1499 = vpack.c.b16 %v1303, %v1299
      %v1500 = vpack.c.b16 %v1304, %v1300
      %vm1697 = vcmask 130048
      %v1699 = vsel %vm1697, %v449, 0
      %v1702 = vsel %vm1697, %v456, 0
      %v1705 = vsel %vm1697, %v463, 0
      %v1708 = vsel %vm1697, %v470, 0
      %v1711 = vsel %vm1697, %v477, 0
      %v1714 = vsel %vm1697, %v484, 0
      %v1717 = vsel %vm1697, %v491, 0
      %v1720 = vsel %vm1697, %v498, 0
      %1722 = vmatprep.subr.bf16.mxu0 %v1306
      %1723 = vmatpush1.bf16.msra.mxu0 %v1305
      %1724 = vmatprep.subr.bf16.mxu0 %v1310
      %1725 = vmatpush1.bf16.msra.mxu0 %v1309
      %1726 = vmatprep.subr.bf16.mxu0 %v1314
      %1727 = vmatpush1.bf16.msra.mxu0 %v1313
      %1728 = vmatprep.subr.bf16.mxu0 %v1318
      %1729 = vmatpush1.bf16.msra.mxu0 %v1317
      %1730 = vmatprep.subr.bf16.mxu0 %v1322
      %1731 = vmatpush1.bf16.msra.mxu0 %v1321
      %1732 = vmatprep.subr.bf16.mxu0 %v1326
      %1733 = vmatpush1.bf16.msra.mxu0 %v1325
      %1734 = vmatprep.subr.bf16.mxu0 %v1330
      %1735 = vmatpush1.bf16.msra.mxu0 %v1329
      %1736 = vmatprep.subr.bf16.mxu0 %v1334
      %1737 = vmatpush1.bf16.msra.mxu0 %v1333
      %1738 = vmatprep.subr.bf16.mxu0 %v1338
      %1739 = vmatpush1.bf16.msra.mxu0 %v1337
      %1740 = vmatprep.subr.bf16.mxu0 %v1342
      %1741 = vmatpush1.bf16.msra.mxu0 %v1341
      %1742 = vmatprep.subr.bf16.mxu0 %v1346
      %1743 = vmatpush1.bf16.msra.mxu0 %v1345
      %1744 = vmatprep.subr.bf16.mxu0 %v1350
      %1745 = vmatpush1.bf16.msra.mxu0 %v1349
      %1746 = vmatprep.subr.bf16.mxu0 %v1354
      %1747 = vmatpush1.bf16.msra.mxu0 %v1353
      %1748 = vmatprep.subr.bf16.mxu0 %v1358
      %1749 = vmatpush1.bf16.msra.mxu0 %v1357
      %1750 = vmatprep.subr.bf16.mxu0 %v1362
      %1751 = vmatpush1.bf16.msra.mxu0 %v1361
      %1752 = vmatprep.subr.bf16.mxu0 %v1366
      %1753 = vmatpush1.bf16.msra.mxu0 %v1365
      %1754 = vmatprep.mubr.bf16.mxu0 %v444
      %1755 = vmatmul.mubr.bf16.gmra.mrb[0].mxu0 %v443
      %v1756 = vpop.f32.mrb[0].mxu0
      %v1757 = vadd.f32 %v700, %v1756
      %v1758 = vpop.f32.mrb[0].mxu0
      %v1759 = vadd.f32 %v704, %v1758
      %v1760 = vpop.f32.mrb[0].mxu0
      %v1761 = vadd.f32 %v700, %v1760
      %v1762 = vpop.f32.mrb[0].mxu0
      %v1763 = vadd.f32 %v704, %v1762
      %1764 = vmatprep.mubr.bf16.mxu0 %v451
      %1765 = vmatmul.mubr.bf16.gmra.mrb[0].mxu0 %v450
      %v1766 = vpop.f32.mrb[0].mxu0
      %v1767 = vadd.f32 %v700, %v1766
      %v1768 = vpop.f32.mrb[0].mxu0
      %v1769 = vadd.f32 %v704, %v1768
      %v1770 = vpop.f32.mrb[0].mxu0
      %v1771 = vadd.f32 %v700, %v1770
      %v1772 = vpop.f32.mrb[0].mxu0
      %v1773 = vadd.f32 %v704, %v1772
      %1774 = vmatprep.mubr.bf16.mxu0 %v458
      %1775 = vmatmul.mubr.bf16.gmra.mrb[0].mxu0 %v457
      %v1776 = vpop.f32.mrb[0].mxu0
      %v1777 = vadd.f32 %v700, %v1776
      %v1778 = vpop.f32.mrb[0].mxu0
      %v1779 = vadd.f32 %v704, %v1778
      %v1780 = vpop.f32.mrb[0].mxu0
      %v1781 = vadd.f32 %v700, %v1780
      %v1782 = vpop.f32.mrb[0].mxu0
      %v1783 = vadd.f32 %v704, %v1782
      %1784 = vmatprep.mubr.bf16.mxu0 %v465
      %1785 = vmatmul.mubr.bf16.gmra.mrb[0].mxu0 %v464
      %v1786 = vpop.f32.mrb[0].mxu0
      %v1787 = vadd.f32 %v700, %v1786
      %v1788 = vpop.f32.mrb[0].mxu0
      %v1789 = vadd.f32 %v704, %v1788
      %v1790 = vpop.f32.mrb[0].mxu0
      %v1791 = vadd.f32 %v700, %v1790
      %v1792 = vpop.f32.mrb[0].mxu0
      %v1793 = vadd.f32 %v704, %v1792
      %1794 = vmatprep.mubr.bf16.mxu0 %v472
      %1795 = vmatmul.mubr.bf16.gmra.mrb[0].mxu0 %v471
      %v1796 = vpop.f32.mrb[0].mxu0
      %v1797 = vadd.f32 %v700, %v1796
      %v1798 = vpop.f32.mrb[0].mxu0
      %v1799 = vadd.f32 %v704, %v1798
      %v1800 = vpop.f32.mrb[0].mxu0
      %v1801 = vadd.f32 %v700, %v1800
      %v1802 = vpop.f32.mrb[0].mxu0
      %v1803 = vadd.f32 %v704, %v1802
      %1804 = vmatprep.mubr.bf16.mxu0 %v479
      %1805 = vmatmul.mubr.bf16.gmra.mrb[0].mxu0 %v478
      %v1806 = vpop.f32.mrb[0].mxu0
      %v1807 = vadd.f32 %v700, %v1806
      %v1808 = vpop.f32.mrb[0].mxu0
      %v1809 = vadd.f32 %v704, %v1808
      %v1810 = vpop.f32.mrb[0].mxu0
      %v1811 = vadd.f32 %v700, %v1810
      %v1812 = vpop.f32.mrb[0].mxu0
      %v1813 = vadd.f32 %v704, %v1812
      %1814 = vmatprep.mubr.bf16.mxu0 %v486
      %1815 = vmatmul.mubr.bf16.gmra.mrb[0].mxu0 %v485
      %v1816 = vpop.f32.mrb[0].mxu0
      %v1817 = vadd.f32 %v700, %v1816
      %v1818 = vpop.f32.mrb[0].mxu0
      %v1819 = vadd.f32 %v704, %v1818
      %v1820 = vpop.f32.mrb[0].mxu0
      %v1821 = vadd.f32 %v700, %v1820
      %v1822 = vpop.f32.mrb[0].mxu0
      %v1823 = vadd.f32 %v704, %v1822
      %1824 = vmatprep.mubr.bf16.mxu0 %v493
      %1825 = vmatmul.mubr.bf16.gmra.mrb[0].mxu0 %v492
      %v1826 = vpop.f32.mrb[0].mxu0
      %v1827 = vadd.f32 %v700, %v1826
      %v1828 = vpop.f32.mrb[0].mxu0
      %v1829 = vadd.f32 %v704, %v1828
      %v1830 = vpop.f32.mrb[0].mxu0
      %v1831 = vadd.f32 %v700, %v1830
      %v1832 = vpop.f32.mrb[0].mxu0
      %v1833 = vadd.f32 %v704, %v1832
      %1834 = vdwg.mxu0
      %1835 = vmatprep.subr.bf16.mxu0 %v1370
      %1836 = vmatpush1.bf16.msra.mxu0 %v1369
      %1837 = vmatprep.subr.bf16.mxu0 %v1374
      %1838 = vmatpush1.bf16.msra.mxu0 %v1373
      %1839 = vmatprep.subr.bf16.mxu0 %v1378
      %1840 = vmatpush1.bf16.msra.mxu0 %v1377
      %1841 = vmatprep.subr.bf16.mxu0 %v1382
      %1842 = vmatpush1.bf16.msra.mxu0 %v1381
      %1843 = vmatprep.subr.bf16.mxu0 %v1386
      %1844 = vmatpush1.bf16.msra.mxu0 %v1385
      %1845 = vmatprep.subr.bf16.mxu0 %v1390
      %1846 = vmatpush1.bf16.msra.mxu0 %v1389
      %1847 = vmatprep.subr.bf16.mxu0 %v1394
      %1848 = vmatpush1.bf16.msra.mxu0 %v1393
      %1849 = vmatprep.subr.bf16.mxu0 %v1398
      %1850 = vmatpush1.bf16.msra.mxu0 %v1397
      %1851 = vmatprep.subr.bf16.mxu0 %v1402
      %1852 = vmatpush1.bf16.msra.mxu0 %v1401
      %1853 = vmatprep.subr.bf16.mxu0 %v1406
      %1854 = vmatpush1.bf16.msra.mxu0 %v1405
      %1855 = vmatprep.subr.bf16.mxu0 %v1410
      %1856 = vmatpush1.bf16.msra.mxu0 %v1409
      %1857 = vmatprep.subr.bf16.mxu0 %v1414
      %1858 = vmatpush1.bf16.msra.mxu0 %v1413
      %1859 = vmatprep.subr.bf16.mxu0 %v1418
      %1860 = vmatpush1.bf16.msra.mxu0 %v1417
      %1861 = vmatprep.subr.bf16.mxu0 %v1422
      %1862 = vmatpush1.bf16.msra.mxu0 %v1421
      %1863 = vmatprep.subr.bf16.mxu0 %v1426
      %1864 = vmatpush1.bf16.msra.mxu0 %v1425
      %1865 = vmatprep.subr.bf16.mxu0 %v1430
      %1866 = vmatpush1.bf16.msra.mxu0 %v1429
      %1867 = vmatprep.mubr.bf16.mxu0 %v446
      %1868 = vmatmul.mubr.bf16.gmra.mrb[0].mxu0 %v445
      %v1869 = vpop.f32.mrb[0].mxu0
      %v1870 = vadd.f32 %v1757, %v1869
      %v1871 = vpop.f32.mrb[0].mxu0
      %v1872 = vadd.f32 %v1759, %v1871
      %v1873 = vpop.f32.mrb[0].mxu0
      %v1874 = vadd.f32 %v1761, %v1873
      %v1875 = vpop.f32.mrb[0].mxu0
      %v1876 = vadd.f32 %v1763, %v1875
      %1877 = vmatprep.mubr.bf16.mxu0 %v453
      %1878 = vmatmul.mubr.bf16.gmra.mrb[0].mxu0 %v452
      %v1879 = vpop.f32.mrb[0].mxu0
      %v1880 = vadd.f32 %v1767, %v1879
      %v1881 = vpop.f32.mrb[0].mxu0
      %v1882 = vadd.f32 %v1769, %v1881
      %v1883 = vpop.f32.mrb[0].mxu0
      %v1884 = vadd.f32 %v1771, %v1883
      %v1885 = vpop.f32.mrb[0].mxu0
      %v1886 = vadd.f32 %v1773, %v1885
      %1887 = vmatprep.mubr.bf16.mxu0 %v460
      %1888 = vmatmul.mubr.bf16.gmra.mrb[0].mxu0 %v459
      %v1889 = vpop.f32.mrb[0].mxu0
      %v1890 = vadd.f32 %v1777, %v1889
      %v1891 = vpop.f32.mrb[0].mxu0
      %v1892 = vadd.f32 %v1779, %v1891
      %v1893 = vpop.f32.mrb[0].mxu0
      %v1894 = vadd.f32 %v1781, %v1893
      %v1895 = vpop.f32.mrb[0].mxu0
      %v1896 = vadd.f32 %v1783, %v1895
      %1897 = vmatprep.mubr.bf16.mxu0 %v467
      %1898 = vmatmul.mubr.bf16.gmra.mrb[0].mxu0 %v466
      %v1899 = vpop.f32.mrb[0].mxu0
      %v1900 = vadd.f32 %v1787, %v1899
      %v1901 = vpop.f32.mrb[0].mxu0
      %v1902 = vadd.f32 %v1789, %v1901
      %v1903 = vpop.f32.mrb[0].mxu0
      %v1904 = vadd.f32 %v1791, %v1903
      %v1905 = vpop.f32.mrb[0].mxu0
      %v1906 = vadd.f32 %v1793, %v1905
      %1907 = vmatprep.mubr.bf16.mxu0 %v474
      %1908 = vmatmul.mubr.bf16.gmra.mrb[0].mxu0 %v473
      %v1909 = vpop.f32.mrb[0].mxu0
      %v1910 = vadd.f32 %v1797, %v1909
      %v1911 = vpop.f32.mrb[0].mxu0
      %v1912 = vadd.f32 %v1799, %v1911
      %v1913 = vpop.f32.mrb[0].mxu0
      %v1914 = vadd.f32 %v1801, %v1913
      %v1915 = vpop.f32.mrb[0].mxu0
      %v1916 = vadd.f32 %v1803, %v1915
      %1917 = vmatprep.mubr.bf16.mxu0 %v481
      %1918 = vmatmul.mubr.bf16.gmra.mrb[0].mxu0 %v480
      %v1919 = vpop.f32.mrb[0].mxu0
      %v1920 = vadd.f32 %v1807, %v1919
      %v1921 = vpop.f32.mrb[0].mxu0
      %v1922 = vadd.f32 %v1809, %v1921
      %v1923 = vpop.f32.mrb[0].mxu0
      %v1924 = vadd.f32 %v1811, %v1923
      %v1925 = vpop.f32.mrb[0].mxu0
      %v1926 = vadd.f32 %v1813, %v1925
      %1927 = vmatprep.mubr.bf16.mxu0 %v488
      %1928 = vmatmul.mubr.bf16.gmra.mrb[0].mxu0 %v487
      %v1929 = vpop.f32.mrb[0].mxu0
      %v1930 = vadd.f32 %v1817, %v1929
      %v1931 = vpop.f32.mrb[0].mxu0
      %v1932 = vadd.f32 %v1819, %v1931
      %v1933 = vpop.f32.mrb[0].mxu0
      %v1934 = vadd.f32 %v1821, %v1933
      %v1935 = vpop.f32.mrb[0].mxu0
      %v1936 = vadd.f32 %v1823, %v1935
      %1937 = vmatprep.mubr.bf16.mxu0 %v495
      %1938 = vmatmul.mubr.bf16.gmra.mrb[0].mxu0 %v494
      %v1939 = vpop.f32.mrb[0].mxu0
      %v1940 = vadd.f32 %v1827, %v1939
      %v1941 = vpop.f32.mrb[0].mxu0
      %v1942 = vadd.f32 %v1829, %v1941
      %v1943 = vpop.f32.mrb[0].mxu0
      %v1944 = vadd.f32 %v1831, %v1943
      %v1945 = vpop.f32.mrb[0].mxu0
      %v1946 = vadd.f32 %v1833, %v1945
      %1947 = vdwg.mxu0
      %1948 = vmatprep.subr.bf16.mxu0 %v1434
      %1949 = vmatpush1.bf16.msra.mxu0 %v1433
      %1950 = vmatprep.subr.bf16.mxu0 %v1438
      %1951 = vmatpush1.bf16.msra.mxu0 %v1437
      %1952 = vmatprep.subr.bf16.mxu0 %v1442
      %1953 = vmatpush1.bf16.msra.mxu0 %v1441
      %1954 = vmatprep.subr.bf16.mxu0 %v1446
      %1955 = vmatpush1.bf16.msra.mxu0 %v1445
      %1956 = vmatprep.subr.bf16.mxu0 %v1450
      %1957 = vmatpush1.bf16.msra.mxu0 %v1449
      %1958 = vmatprep.subr.bf16.mxu0 %v1454
      %1959 = vmatpush1.bf16.msra.mxu0 %v1453
      %1960 = vmatprep.subr.bf16.mxu0 %v1458
      %1961 = vmatpush1.bf16.msra.mxu0 %v1457
      %1962 = vmatprep.subr.bf16.mxu0 %v1462
      %1963 = vmatpush1.bf16.msra.mxu0 %v1461
      %1964 = vmatprep.subr.bf16.mxu0 %v1466
      %1965 = vmatpush1.bf16.msra.mxu0 %v1465
      %1966 = vmatprep.subr.bf16.mxu0 %v1470
      %1967 = vmatpush1.bf16.msra.mxu0 %v1469
      %1968 = vmatprep.subr.bf16.mxu0 %v1474
      %1969 = vmatpush1.bf16.msra.mxu0 %v1473
      %1970 = vmatprep.subr.bf16.mxu0 %v1478
      %1971 = vmatpush1.bf16.msra.mxu0 %v1477
      %1972 = vmatprep.subr.bf16.mxu0 %v1482
      %1973 = vmatpush1.bf16.msra.mxu0 %v1481
      %1974 = vmatprep.subr.bf16.mxu0 %v1486
      %1975 = vmatpush1.bf16.msra.mxu0 %v1485
      %1976 = vmatprep.subr.bf16.mxu0 %v1490
      %1977 = vmatpush1.bf16.msra.mxu0 %v1489
      %1978 = vmatprep.subr.bf16.mxu0 %v1494
      %1979 = vmatpush1.bf16.msra.mxu0 %v1493
      %1980 = vmatprep.mubr.bf16.mxu0 %v448
      %1981 = vmatmul.mubr.bf16.gmra.mrb[0].mxu0 %v447
      %v1982 = vpop.f32.mrb[0].mxu0
      %v1983 = vadd.f32 %v1870, %v1982
      %v1984 = vpop.f32.mrb[0].mxu0
      %v1985 = vadd.f32 %v1872, %v1984
      %v1986 = vpop.f32.mrb[0].mxu0
      %v1987 = vadd.f32 %v1874, %v1986
      %v1988 = vpop.f32.mrb[0].mxu0
      %v1989 = vadd.f32 %v1876, %v1988
      %1990 = vmatprep.mubr.bf16.mxu0 %v455
      %1991 = vmatmul.mubr.bf16.gmra.mrb[0].mxu0 %v454
      %v1992 = vpop.f32.mrb[0].mxu0
      %v1993 = vadd.f32 %v1880, %v1992
      %v1994 = vpop.f32.mrb[0].mxu0
      %v1995 = vadd.f32 %v1882, %v1994
      %v1996 = vpop.f32.mrb[0].mxu0
      %v1997 = vadd.f32 %v1884, %v1996
      %v1998 = vpop.f32.mrb[0].mxu0
      %v1999 = vadd.f32 %v1886, %v1998
      %2000 = vmatprep.mubr.bf16.mxu0 %v462
      %2001 = vmatmul.mubr.bf16.gmra.mrb[0].mxu0 %v461
      %v2002 = vpop.f32.mrb[0].mxu0
      %v2003 = vadd.f32 %v1890, %v2002
      %v2004 = vpop.f32.mrb[0].mxu0
      %v2005 = vadd.f32 %v1892, %v2004
      %v2006 = vpop.f32.mrb[0].mxu0
      %v2007 = vadd.f32 %v1894, %v2006
      %v2008 = vpop.f32.mrb[0].mxu0
      %v2009 = vadd.f32 %v1896, %v2008
      %2010 = vmatprep.mubr.bf16.mxu0 %v469
      %2011 = vmatmul.mubr.bf16.gmra.mrb[0].mxu0 %v468
      %v2012 = vpop.f32.mrb[0].mxu0
      %v2013 = vadd.f32 %v1900, %v2012
      %v2014 = vpop.f32.mrb[0].mxu0
      %v2015 = vadd.f32 %v1902, %v2014
      %v2016 = vpop.f32.mrb[0].mxu0
      %v2017 = vadd.f32 %v1904, %v2016
      %v2018 = vpop.f32.mrb[0].mxu0
      %v2019 = vadd.f32 %v1906, %v2018
      %2020 = vmatprep.mubr.bf16.mxu0 %v476
      %2021 = vmatmul.mubr.bf16.gmra.mrb[0].mxu0 %v475
      %v2022 = vpop.f32.mrb[0].mxu0
      %v2023 = vadd.f32 %v1910, %v2022
      %v2024 = vpop.f32.mrb[0].mxu0
      %v2025 = vadd.f32 %v1912, %v2024
      %v2026 = vpop.f32.mrb[0].mxu0
      %v2027 = vadd.f32 %v1914, %v2026
      %v2028 = vpop.f32.mrb[0].mxu0
      %v2029 = vadd.f32 %v1916, %v2028
      %2030 = vmatprep.mubr.bf16.mxu0 %v483
      %2031 = vmatmul.mubr.bf16.gmra.mrb[0].mxu0 %v482
      %v2032 = vpop.f32.mrb[0].mxu0
      %v2033 = vadd.f32 %v1920, %v2032
      %v2034 = vpop.f32.mrb[0].mxu0
      %v2035 = vadd.f32 %v1922, %v2034
      %v2036 = vpop.f32.mrb[0].mxu0
      %v2037 = vadd.f32 %v1924, %v2036
      %v2038 = vpop.f32.mrb[0].mxu0
      %v2039 = vadd.f32 %v1926, %v2038
      %2040 = vmatprep.mubr.bf16.mxu0 %v490
      %2041 = vmatmul.mubr.bf16.gmra.mrb[0].mxu0 %v489
      %v2042 = vpop.f32.mrb[0].mxu0
      %v2043 = vadd.f32 %v1930, %v2042
      %v2044 = vpop.f32.mrb[0].mxu0
      %v2045 = vadd.f32 %v1932, %v2044
      %v2046 = vpop.f32.mrb[0].mxu0
      %v2047 = vadd.f32 %v1934, %v2046
      %v2048 = vpop.f32.mrb[0].mxu0
      %v2049 = vadd.f32 %v1936, %v2048
      %2050 = vmatprep.mubr.bf16.mxu0 %v497
      %2051 = vmatmul.mubr.bf16.gmra.mrb[0].mxu0 %v496
      %v2052 = vpop.f32.mrb[0].mxu0
      %v2053 = vadd.f32 %v1940, %v2052
      %v2054 = vpop.f32.mrb[0].mxu0
      %v2055 = vadd.f32 %v1942, %v2054
      %v2056 = vpop.f32.mrb[0].mxu0
      %v2057 = vadd.f32 %v1944, %v2056
      %v2058 = vpop.f32.mrb[0].mxu0
      %v2059 = vadd.f32 %v1946, %v2058
      %2060 = vdwg.mxu0
      %2061 = vmatprep.subr.bf16.mxu0 %v1498
      %2062 = vmatpush1.bf16.msra.mxu0 %v1497
      %2063 = vmatprep.subr.bf16.mxu0 0
      %2064 = vmatpush1.bf16.msra.mxu0 0
      %2065 = vmatprep.subr.bf16.mxu0 0
      %2066 = vmatpush1.bf16.msra.mxu0 0
      %2067 = vmatprep.subr.bf16.mxu0 0
      %2068 = vmatpush1.bf16.msra.mxu0 0
      %2069 = vmatprep.subr.bf16.mxu0 0
      %2070 = vmatpush1.bf16.msra.mxu0 0
      %2071 = vmatprep.subr.bf16.mxu0 0
      %2072 = vmatpush1.bf16.msra.mxu0 0
      %2073 = vmatprep.subr.bf16.mxu0 0
      %2074 = vmatpush1.bf16.msra.mxu0 0
      %2075 = vmatprep.subr.bf16.mxu0 0
      %2076 = vmatpush1.bf16.msra.mxu0 0
      %2077 = vmatprep.subr.bf16.mxu0 0
      %2078 = vmatpush1.bf16.msra.mxu0 0
      %2079 = vmatprep.subr.bf16.mxu0 0
      %2080 = vmatpush1.bf16.msra.mxu0 0
      %2081 = vmatprep.subr.bf16.mxu0 0
      %2082 = vmatpush1.bf16.msra.mxu0 0
      %2083 = vmatprep.subr.bf16.mxu0 0
      %2084 = vmatpush1.bf16.msra.mxu0 0
      %2085 = vmatprep.subr.bf16.mxu0 0
      %2086 = vmatpush1.bf16.msra.mxu0 0
      %2087 = vmatprep.subr.bf16.mxu0 0
      %2088 = vmatpush1.bf16.msra.mxu0 0
      %2089 = vmatprep.subr.bf16.mxu0 0
      %2090 = vmatpush1.bf16.msra.mxu0 0
      %2091 = vmatprep.subr.bf16.mxu0 0
      %2092 = vmatpush1.bf16.msra.mxu0 0
      %2093 = vmatprep.mubr.bf16.mxu0 0
      %2094 = vmatmul.mubr.bf16.gmra.mrb[0].mxu0 %v1699
      %v2095 = vpop.f32.mrb[0].mxu0
      %v2096 = vadd.f32 %v1983, %v2095
      %v2097 = vpop.f32.mrb[0].mxu0
      %v2098 = vadd.f32 %v1985, %v2097
      %v2099 = vpop.f32.mrb[0].mxu0
      %v2100 = vadd.f32 %v1987, %v2099
      %v2101 = vpop.f32.mrb[0].mxu0
      %v2102 = vadd.f32 %v1989, %v2101
      %2103 = vmatprep.mubr.bf16.mxu0 0
      %2104 = vmatmul.mubr.bf16.gmra.mrb[0].mxu0 %v1702
      %v2105 = vpop.f32.mrb[0].mxu0
      %v2106 = vadd.f32 %v1993, %v2105
      %v2107 = vpop.f32.mrb[0].mxu0
      %v2108 = vadd.f32 %v1995, %v2107
      %v2109 = vpop.f32.mrb[0].mxu0
      %v2110 = vadd.f32 %v1997, %v2109
      %v2111 = vpop.f32.mrb[0].mxu0
      %v2112 = vadd.f32 %v1999, %v2111
      %2113 = vmatprep.mubr.bf16.mxu0 0
      %2114 = vmatmul.mubr.bf16.gmra.mrb[0].mxu0 %v1705
      %v2115 = vpop.f32.mrb[0].mxu0
      %v2116 = vadd.f32 %v2003, %v2115
      %v2117 = vpop.f32.mrb[0].mxu0
      %v2118 = vadd.f32 %v2005, %v2117
      %v2119 = vpop.f32.mrb[0].mxu0
      %v2120 = vadd.f32 %v2007, %v2119
      %v2121 = vpop.f32.mrb[0].mxu0
      %v2122 = vadd.f32 %v2009, %v2121
      %2123 = vmatprep.mubr.bf16.mxu0 0
      %2124 = vmatmul.mubr.bf16.gmra.mrb[0].mxu0 %v1708
      %v2125 = vpop.f32.mrb[0].mxu0
      %v2126 = vadd.f32 %v2013, %v2125
      %v2127 = vpop.f32.mrb[0].mxu0
      %v2128 = vadd.f32 %v2015, %v2127
      %v2129 = vpop.f32.mrb[0].mxu0
      %v2130 = vadd.f32 %v2017, %v2129
      %v2131 = vpop.f32.mrb[0].mxu0
      %v2132 = vadd.f32 %v2019, %v2131
      %2133 = vmatprep.mubr.bf16.mxu0 0
      %2134 = vmatmul.mubr.bf16.gmra.mrb[0].mxu0 %v1711
      %v2135 = vpop.f32.mrb[0].mxu0
      %v2136 = vadd.f32 %v2023, %v2135
      %v2137 = vpop.f32.mrb[0].mxu0
      %v2138 = vadd.f32 %v2025, %v2137
      %v2139 = vpop.f32.mrb[0].mxu0
      %v2140 = vadd.f32 %v2027, %v2139
      %v2141 = vpop.f32.mrb[0].mxu0
      %v2142 = vadd.f32 %v2029, %v2141
      %2143 = vmatprep.mubr.bf16.mxu0 0
      %2144 = vmatmul.mubr.bf16.gmra.mrb[0].mxu0 %v1714
      %v2145 = vpop.f32.mrb[0].mxu0
      %v2146 = vadd.f32 %v2033, %v2145
      %v2147 = vpop.f32.mrb[0].mxu0
      %v2148 = vadd.f32 %v2035, %v2147
      %v2149 = vpop.f32.mrb[0].mxu0
      %v2150 = vadd.f32 %v2037, %v2149
      %v2151 = vpop.f32.mrb[0].mxu0
      %v2152 = vadd.f32 %v2039, %v2151
      %2153 = vmatprep.mubr.bf16.mxu0 0
      %2154 = vmatmul.mubr.bf16.gmra.mrb[0].mxu0 %v1717
      %v2155 = vpop.f32.mrb[0].mxu0
      %v2156 = vadd.f32 %v2043, %v2155
      %v2157 = vpop.f32.mrb[0].mxu0
      %v2158 = vadd.f32 %v2045, %v2157
      %v2159 = vpop.f32.mrb[0].mxu0
      %v2160 = vadd.f32 %v2047, %v2159
      %v2161 = vpop.f32.mrb[0].mxu0
      %v2162 = vadd.f32 %v2049, %v2161
      %2163 = vmatprep.mubr.bf16.mxu0 0
      %2164 = vmatmul.mubr.bf16.gmra.mrb[0].mxu0 %v1720
      %v2165 = vpop.f32.mrb[0].mxu0
      %v2166 = vadd.f32 %v2053, %v2165
      %v2167 = vpop.f32.mrb[0].mxu0
      %v2168 = vadd.f32 %v2055, %v2167
      %v2169 = vpop.f32.mrb[0].mxu0
      %v2170 = vadd.f32 %v2057, %v2169
      %v2171 = vpop.f32.mrb[0].mxu0
      %v2172 = vadd.f32 %v2059, %v2171
      %2173 = vdwg.mxu0
      %2174 = vmatprep.subr.bf16.mxu0 %v1308
      %2175 = vmatpush1.bf16.msra.mxu0 %v1307
      %2176 = vmatprep.subr.bf16.mxu0 %v1312
      %2177 = vmatpush1.bf16.msra.mxu0 %v1311
      %2178 = vmatprep.subr.bf16.mxu0 %v1316
      %2179 = vmatpush1.bf16.msra.mxu0 %v1315
      %2180 = vmatprep.subr.bf16.mxu0 %v1320
      %2181 = vmatpush1.bf16.msra.mxu0 %v1319
      %2182 = vmatprep.subr.bf16.mxu0 %v1324
      %2183 = vmatpush1.bf16.msra.mxu0 %v1323
      %2184 = vmatprep.subr.bf16.mxu0 %v1328
      %2185 = vmatpush1.bf16.msra.mxu0 %v1327
      %2186 = vmatprep.subr.bf16.mxu0 %v1332
      %2187 = vmatpush1.bf16.msra.mxu0 %v1331
      %2188 = vmatprep.subr.bf16.mxu0 %v1336
      %2189 = vmatpush1.bf16.msra.mxu0 %v1335
      %2190 = vmatprep.subr.bf16.mxu0 %v1340
      %2191 = vmatpush1.bf16.msra.mxu0 %v1339
      %2192 = vmatprep.subr.bf16.mxu0 %v1344
      %2193 = vmatpush1.bf16.msra.mxu0 %v1343
      %2194 = vmatprep.subr.bf16.mxu0 %v1348
      %2195 = vmatpush1.bf16.msra.mxu0 %v1347
      %2196 = vmatprep.subr.bf16.mxu0 %v1352
      %2197 = vmatpush1.bf16.msra.mxu0 %v1351
      %2198 = vmatprep.subr.bf16.mxu0 %v1356
      %2199 = vmatpush1.bf16.msra.mxu0 %v1355
      %2200 = vmatprep.subr.bf16.mxu0 %v1360
      %2201 = vmatpush1.bf16.msra.mxu0 %v1359
      %2202 = vmatprep.subr.bf16.mxu0 %v1364
      %2203 = vmatpush1.bf16.msra.mxu0 %v1363
      %2204 = vmatprep.subr.bf16.mxu0 %v1368
      %2205 = vmatpush1.bf16.msra.mxu0 %v1367
      %2206 = vmatprep.mubr.bf16.mxu0 %v444
      %2207 = vmatmul.mubr.bf16.gmra.mrb[0].mxu0 %v443
      %v2208 = vpop.f32.mrb[0].mxu0
      %v2209 = vadd.f32 %v708, %v2208
      %v2210 = vpop.f32.mrb[0].mxu0
      %v2211 = vadd.f32 %v712, %v2210
      %v2212 = vpop.f32.mrb[0].mxu0
      %v2213 = vadd.f32 %v708, %v2212
      %v2214 = vpop.f32.mrb[0].mxu0
      %v2215 = vadd.f32 %v712, %v2214
      %2216 = vmatprep.mubr.bf16.mxu0 %v451
      %2217 = vmatmul.mubr.bf16.gmra.mrb[0].mxu0 %v450
      %v2218 = vpop.f32.mrb[0].mxu0
      %v2219 = vadd.f32 %v708, %v2218
      %v2220 = vpop.f32.mrb[0].mxu0
      %v2221 = vadd.f32 %v712, %v2220
      %v2222 = vpop.f32.mrb[0].mxu0
      %v2223 = vadd.f32 %v708, %v2222
      %v2224 = vpop.f32.mrb[0].mxu0
      %v2225 = vadd.f32 %v712, %v2224
      %2226 = vmatprep.mubr.bf16.mxu0 %v458
      %2227 = vmatmul.mubr.bf16.gmra.mrb[0].mxu0 %v457
      %v2228 = vpop.f32.mrb[0].mxu0
      %v2229 = vadd.f32 %v708, %v2228
      %v2230 = vpop.f32.mrb[0].mxu0
      %v2231 = vadd.f32 %v712, %v2230
      %v2232 = vpop.f32.mrb[0].mxu0
      %v2233 = vadd.f32 %v708, %v2232
      %v2234 = vpop.f32.mrb[0].mxu0
      %v2235 = vadd.f32 %v712, %v2234
      %2236 = vmatprep.mubr.bf16.mxu0 %v465
      %2237 = vmatmul.mubr.bf16.gmra.mrb[0].mxu0 %v464
      %v2238 = vpop.f32.mrb[0].mxu0
      %v2239 = vadd.f32 %v708, %v2238
      %v2240 = vpop.f32.mrb[0].mxu0
      %v2241 = vadd.f32 %v712, %v2240
      %v2242 = vpop.f32.mrb[0].mxu0
      %v2243 = vadd.f32 %v708, %v2242
      %v2244 = vpop.f32.mrb[0].mxu0
      %v2245 = vadd.f32 %v712, %v2244
      %2246 = vmatprep.mubr.bf16.mxu0 %v472
      %2247 = vmatmul.mubr.bf16.gmra.mrb[0].mxu0 %v471
      %v2248 = vpop.f32.mrb[0].mxu0
      %v2249 = vadd.f32 %v708, %v2248
      %v2250 = vpop.f32.mrb[0].mxu0
      %v2251 = vadd.f32 %v712, %v2250
      %v2252 = vpop.f32.mrb[0].mxu0
      %v2253 = vadd.f32 %v708, %v2252
      %v2254 = vpop.f32.mrb[0].mxu0
      %v2255 = vadd.f32 %v712, %v2254
      %2256 = vmatprep.mubr.bf16.mxu0 %v479
      %2257 = vmatmul.mubr.bf16.gmra.mrb[0].mxu0 %v478
      %v2258 = vpop.f32.mrb[0].mxu0
      %v2259 = vadd.f32 %v708, %v2258
      %v2260 = vpop.f32.mrb[0].mxu0
      %v2261 = vadd.f32 %v712, %v2260
      %v2262 = vpop.f32.mrb[0].mxu0
      %v2263 = vadd.f32 %v708, %v2262
      %v2264 = vpop.f32.mrb[0].mxu0
      %v2265 = vadd.f32 %v712, %v2264
      %2266 = vmatprep.mubr.bf16.mxu0 %v486
      %2267 = vmatmul.mubr.bf16.gmra.mrb[0].mxu0 %v485
      %v2268 = vpop.f32.mrb[0].mxu0
      %v2269 = vadd.f32 %v708, %v2268
      %v2270 = vpop.f32.mrb[0].mxu0
      %v2271 = vadd.f32 %v712, %v2270
      %v2272 = vpop.f32.mrb[0].mxu0
      %v2273 = vadd.f32 %v708, %v2272
      %v2274 = vpop.f32.mrb[0].mxu0
      %v2275 = vadd.f32 %v712, %v2274
      %2276 = vmatprep.mubr.bf16.mxu0 %v493
      %2277 = vmatmul.mubr.bf16.gmra.mrb[0].mxu0 %v492
      %v2278 = vpop.f32.mrb[0].mxu0
      %v2279 = vadd.f32 %v708, %v2278
      %v2280 = vpop.f32.mrb[0].mxu0
      %v2281 = vadd.f32 %v712, %v2280
      %v2282 = vpop.f32.mrb[0].mxu0
      %v2283 = vadd.f32 %v708, %v2282
      %v2284 = vpop.f32.mrb[0].mxu0
      %v2285 = vadd.f32 %v712, %v2284
      %2286 = vdwg.mxu0
      %2287 = vmatprep.subr.bf16.mxu0 %v1372
      %2288 = vmatpush1.bf16.msra.mxu0 %v1371
      %2289 = vmatprep.subr.bf16.mxu0 %v1376
      %2290 = vmatpush1.bf16.msra.mxu0 %v1375
      %2291 = vmatprep.subr.bf16.mxu0 %v1380
      %2292 = vmatpush1.bf16.msra.mxu0 %v1379
      %2293 = vmatprep.subr.bf16.mxu0 %v1384
      %2294 = vmatpush1.bf16.msra.mxu0 %v1383
      %2295 = vmatprep.subr.bf16.mxu0 %v1388
      %2296 = vmatpush1.bf16.msra.mxu0 %v1387
      %2297 = vmatprep.subr.bf16.mxu0 %v1392
      %2298 = vmatpush1.bf16.msra.mxu0 %v1391
      %2299 = vmatprep.subr.bf16.mxu0 %v1396
      %2300 = vmatpush1.bf16.msra.mxu0 %v1395
      %2301 = vmatprep.subr.bf16.mxu0 %v1400
      %2302 = vmatpush1.bf16.msra.mxu0 %v1399
      %2303 = vmatprep.subr.bf16.mxu0 %v1404
      %2304 = vmatpush1.bf16.msra.mxu0 %v1403
      %2305 = vmatprep.subr.bf16.mxu0 %v1408
      %2306 = vmatpush1.bf16.msra.mxu0 %v1407
      %2307 = vmatprep.subr.bf16.mxu0 %v1412
      %2308 = vmatpush1.bf16.msra.mxu0 %v1411
      %2309 = vmatprep.subr.bf16.mxu0 %v1416
      %2310 = vmatpush1.bf16.msra.mxu0 %v1415
      %2311 = vmatprep.subr.bf16.mxu0 %v1420
      %2312 = vmatpush1.bf16.msra.mxu0 %v1419
      %2313 = vmatprep.subr.bf16.mxu0 %v1424
      %2314 = vmatpush1.bf16.msra.mxu0 %v1423
      %2315 = vmatprep.subr.bf16.mxu0 %v1428
      %2316 = vmatpush1.bf16.msra.mxu0 %v1427
      %2317 = vmatprep.subr.bf16.mxu0 %v1432
      %2318 = vmatpush1.bf16.msra.mxu0 %v1431
      %2319 = vmatprep.mubr.bf16.mxu0 %v446
      %2320 = vmatmul.mubr.bf16.gmra.mrb[0].mxu0 %v445
      %v2321 = vpop.f32.mrb[0].mxu0
      %v2322 = vadd.f32 %v2209, %v2321
      %v2323 = vpop.f32.mrb[0].mxu0
      %v2324 = vadd.f32 %v2211, %v2323
      %v2325 = vpop.f32.mrb[0].mxu0
      %v2326 = vadd.f32 %v2213, %v2325
      %v2327 = vpop.f32.mrb[0].mxu0
      %v2328 = vadd.f32 %v2215, %v2327
      %2329 = vmatprep.mubr.bf16.mxu0 %v453
      %2330 = vmatmul.mubr.bf16.gmra.mrb[0].mxu0 %v452
      %v2331 = vpop.f32.mrb[0].mxu0
      %v2332 = vadd.f32 %v2219, %v2331
      %v2333 = vpop.f32.mrb[0].mxu0
      %v2334 = vadd.f32 %v2221, %v2333
      %v2335 = vpop.f32.mrb[0].mxu0
      %v2336 = vadd.f32 %v2223, %v2335
      %v2337 = vpop.f32.mrb[0].mxu0
      %v2338 = vadd.f32 %v2225, %v2337
      %2339 = vmatprep.mubr.bf16.mxu0 %v460
      %2340 = vmatmul.mubr.bf16.gmra.mrb[0].mxu0 %v459
      %v2341 = vpop.f32.mrb[0].mxu0
      %v2342 = vadd.f32 %v2229, %v2341
      %v2343 = vpop.f32.mrb[0].mxu0
      %v2344 = vadd.f32 %v2231, %v2343
      %v2345 = vpop.f32.mrb[0].mxu0
      %v2346 = vadd.f32 %v2233, %v2345
      %v2347 = vpop.f32.mrb[0].mxu0
      %v2348 = vadd.f32 %v2235, %v2347
      %2349 = vmatprep.mubr.bf16.mxu0 %v467
      %2350 = vmatmul.mubr.bf16.gmra.mrb[0].mxu0 %v466
      %v2351 = vpop.f32.mrb[0].mxu0
      %v2352 = vadd.f32 %v2239, %v2351
      %v2353 = vpop.f32.mrb[0].mxu0
      %v2354 = vadd.f32 %v2241, %v2353
      %v2355 = vpop.f32.mrb[0].mxu0
      %v2356 = vadd.f32 %v2243, %v2355
      %v2357 = vpop.f32.mrb[0].mxu0
      %v2358 = vadd.f32 %v2245, %v2357
      %2359 = vmatprep.mubr.bf16.mxu0 %v474
      %2360 = vmatmul.mubr.bf16.gmra.mrb[0].mxu0 %v473
      %v2361 = vpop.f32.mrb[0].mxu0
      %v2362 = vadd.f32 %v2249, %v2361
      %v2363 = vpop.f32.mrb[0].mxu0
      %v2364 = vadd.f32 %v2251, %v2363
      %v2365 = vpop.f32.mrb[0].mxu0
      %v2366 = vadd.f32 %v2253, %v2365
      %v2367 = vpop.f32.mrb[0].mxu0
      %v2368 = vadd.f32 %v2255, %v2367
      %2369 = vmatprep.mubr.bf16.mxu0 %v481
      %2370 = vmatmul.mubr.bf16.gmra.mrb[0].mxu0 %v480
      %v2371 = vpop.f32.mrb[0].mxu0
      %v2372 = vadd.f32 %v2259, %v2371
      %v2373 = vpop.f32.mrb[0].mxu0
      %v2374 = vadd.f32 %v2261, %v2373
      %v2375 = vpop.f32.mrb[0].mxu0
      %v2376 = vadd.f32 %v2263, %v2375
      %v2377 = vpop.f32.mrb[0].mxu0
      %v2378 = vadd.f32 %v2265, %v2377
      %2379 = vmatprep.mubr.bf16.mxu0 %v488
      %2380 = vmatmul.mubr.bf16.gmra.mrb[0].mxu0 %v487
      %v2381 = vpop.f32.mrb[0].mxu0
      %v2382 = vadd.f32 %v2269, %v2381
      %v2383 = vpop.f32.mrb[0].mxu0
      %v2384 = vadd.f32 %v2271, %v2383
      %v2385 = vpop.f32.mrb[0].mxu0
      %v2386 = vadd.f32 %v2273, %v2385
      %v2387 = vpop.f32.mrb[0].mxu0
      %v2388 = vadd.f32 %v2275, %v2387
      %2389 = vmatprep.mubr.bf16.mxu0 %v495
      %2390 = vmatmul.mubr.bf16.gmra.mrb[0].mxu0 %v494
      %v2391 = vpop.f32.mrb[0].mxu0
      %v2392 = vadd.f32 %v2279, %v2391
      %v2393 = vpop.f32.mrb[0].mxu0
      %v2394 = vadd.f32 %v2281, %v2393
      %v2395 = vpop.f32.mrb[0].mxu0
      %v2396 = vadd.f32 %v2283, %v2395
      %v2397 = vpop.f32.mrb[0].mxu0
      %v2398 = vadd.f32 %v2285, %v2397
      %2399 = vdwg.mxu0
      %2400 = vmatprep.subr.bf16.mxu0 %v1436
      %2401 = vmatpush1.bf16.msra.mxu0 %v1435
      %2402 = vmatprep.subr.bf16.mxu0 %v1440
      %2403 = vmatpush1.bf16.msra.mxu0 %v1439
      %2404 = vmatprep.subr.bf16.mxu0 %v1444
      %2405 = vmatpush1.bf16.msra.mxu0 %v1443
      %2406 = vmatprep.subr.bf16.mxu0 %v1448
      %2407 = vmatpush1.bf16.msra.mxu0 %v1447
      %2408 = vmatprep.subr.bf16.mxu0 %v1452
      %2409 = vmatpush1.bf16.msra.mxu0 %v1451
      %2410 = vmatprep.subr.bf16.mxu0 %v1456
      %2411 = vmatpush1.bf16.msra.mxu0 %v1455
      %2412 = vmatprep.subr.bf16.mxu0 %v1460
      %2413 = vmatpush1.bf16.msra.mxu0 %v1459
      %2414 = vmatprep.subr.bf16.mxu0 %v1464
      %2415 = vmatpush1.bf16.msra.mxu0 %v1463
      %2416 = vmatprep.subr.bf16.mxu0 %v1468
      %2417 = vmatpush1.bf16.msra.mxu0 %v1467
      %2418 = vmatprep.subr.bf16.mxu0 %v1472
      %2419 = vmatpush1.bf16.msra.mxu0 %v1471
      %2420 = vmatprep.subr.bf16.mxu0 %v1476
      %2421 = vmatpush1.bf16.msra.mxu0 %v1475
      %2422 = vmatprep.subr.bf16.mxu0 %v1480
      %2423 = vmatpush1.bf16.msra.mxu0 %v1479
      %2424 = vmatprep.subr.bf16.mxu0 %v1484
      %2425 = vmatpush1.bf16.msra.mxu0 %v1483
      %2426 = vmatprep.subr.bf16.mxu0 %v1488
      %2427 = vmatpush1.bf16.msra.mxu0 %v1487
      %2428 = vmatprep.subr.bf16.mxu0 %v1492
      %2429 = vmatpush1.bf16.msra.mxu0 %v1491
      %2430 = vmatprep.subr.bf16.mxu0 %v1496
      %2431 = vmatpush1.bf16.msra.mxu0 %v1495
      %2432 = vmatprep.mubr.bf16.mxu0 %v448
      %2433 = vmatmul.mubr.bf16.gmra.mrb[0].mxu0 %v447
      %v2434 = vpop.f32.mrb[0].mxu0
      %v2435 = vadd.f32 %v2322, %v2434
      %v2436 = vpop.f32.mrb[0].mxu0
      %v2437 = vadd.f32 %v2324, %v2436
      %v2438 = vpop.f32.mrb[0].mxu0
      %v2439 = vadd.f32 %v2326, %v2438
      %v2440 = vpop.f32.mrb[0].mxu0
      %v2441 = vadd.f32 %v2328, %v2440
      %2442 = vmatprep.mubr.bf16.mxu0 %v455
      %2443 = vmatmul.mubr.bf16.gmra.mrb[0].mxu0 %v454
      %v2444 = vpop.f32.mrb[0].mxu0
      %v2445 = vadd.f32 %v2332, %v2444
      %v2446 = vpop.f32.mrb[0].mxu0
      %v2447 = vadd.f32 %v2334, %v2446
      %v2448 = vpop.f32.mrb[0].mxu0
      %v2449 = vadd.f32 %v2336, %v2448
      %v2450 = vpop.f32.mrb[0].mxu0
      %v2451 = vadd.f32 %v2338, %v2450
      %2452 = vmatprep.mubr.bf16.mxu0 %v462
      %2453 = vmatmul.mubr.bf16.gmra.mrb[0].mxu0 %v461
      %v2454 = vpop.f32.mrb[0].mxu0
      %v2455 = vadd.f32 %v2342, %v2454
      %v2456 = vpop.f32.mrb[0].mxu0
      %v2457 = vadd.f32 %v2344, %v2456
      %v2458 = vpop.f32.mrb[0].mxu0
      %v2459 = vadd.f32 %v2346, %v2458
      %v2460 = vpop.f32.mrb[0].mxu0
      %v2461 = vadd.f32 %v2348, %v2460
      %2462 = vmatprep.mubr.bf16.mxu0 %v469
      %2463 = vmatmul.mubr.bf16.gmra.mrb[0].mxu0 %v468
      %v2464 = vpop.f32.mrb[0].mxu0
      %v2465 = vadd.f32 %v2352, %v2464
      %v2466 = vpop.f32.mrb[0].mxu0
      %v2467 = vadd.f32 %v2354, %v2466
      %v2468 = vpop.f32.mrb[0].mxu0
      %v2469 = vadd.f32 %v2356, %v2468
      %v2470 = vpop.f32.mrb[0].mxu0
      %v2471 = vadd.f32 %v2358, %v2470
      %2472 = vmatprep.mubr.bf16.mxu0 %v476
      %2473 = vmatmul.mubr.bf16.gmra.mrb[0].mxu0 %v475
      %v2474 = vpop.f32.mrb[0].mxu0
      %v2475 = vadd.f32 %v2362, %v2474
      %v2476 = vpop.f32.mrb[0].mxu0
      %v2477 = vadd.f32 %v2364, %v2476
      %v2478 = vpop.f32.mrb[0].mxu0
      %v2479 = vadd.f32 %v2366, %v2478
      %v2480 = vpop.f32.mrb[0].mxu0
      %v2481 = vadd.f32 %v2368, %v2480
      %2482 = vmatprep.mubr.bf16.mxu0 %v483
      %2483 = vmatmul.mubr.bf16.gmra.mrb[0].mxu0 %v482
      %v2484 = vpop.f32.mrb[0].mxu0
      %v2485 = vadd.f32 %v2372, %v2484
      %v2486 = vpop.f32.mrb[0].mxu0
      %v2487 = vadd.f32 %v2374, %v2486
      %v2488 = vpop.f32.mrb[0].mxu0
      %v2489 = vadd.f32 %v2376, %v2488
      %v2490 = vpop.f32.mrb[0].mxu0
      %v2491 = vadd.f32 %v2378, %v2490
      %2492 = vmatprep.mubr.bf16.mxu0 %v490
      %2493 = vmatmul.mubr.bf16.gmra.mrb[0].mxu0 %v489
      %v2494 = vpop.f32.mrb[0].mxu0
      %v2495 = vadd.f32 %v2382, %v2494
      %v2496 = vpop.f32.mrb[0].mxu0
      %v2497 = vadd.f32 %v2384, %v2496
      %v2498 = vpop.f32.mrb[0].mxu0
      %v2499 = vadd.f32 %v2386, %v2498
      %v2500 = vpop.f32.mrb[0].mxu0
      %v2501 = vadd.f32 %v2388, %v2500
      %2502 = vmatprep.mubr.bf16.mxu0 %v497
      %2503 = vmatmul.mubr.bf16.gmra.mrb[0].mxu0 %v496
      %v2504 = vpop.f32.mrb[0].mxu0
      %v2505 = vadd.f32 %v2392, %v2504
      %v2506 = vpop.f32.mrb[0].mxu0
      %v2507 = vadd.f32 %v2394, %v2506
      %v2508 = vpop.f32.mrb[0].mxu0
      %v2509 = vadd.f32 %v2396, %v2508
      %v2510 = vpop.f32.mrb[0].mxu0
      %v2511 = vadd.f32 %v2398, %v2510
      %2512 = vdwg.mxu0
      %2513 = vmatprep.subr.bf16.mxu0 %v1500
      %2514 = vmatpush1.bf16.msra.mxu0 %v1499
      %2515 = vmatprep.subr.bf16.mxu0 0
      %2516 = vmatpush1.bf16.msra.mxu0 0
      %2517 = vmatprep.subr.bf16.mxu0 0
      %2518 = vmatpush1.bf16.msra.mxu0 0
      %2519 = vmatprep.subr.bf16.mxu0 0
      %2520 = vmatpush1.bf16.msra.mxu0 0
      %2521 = vmatprep.subr.bf16.mxu0 0
      %2522 = vmatpush1.bf16.msra.mxu0 0
      %2523 = vmatprep.subr.bf16.mxu0 0
      %2524 = vmatpush1.bf16.msra.mxu0 0
      %2525 = vmatprep.subr.bf16.mxu0 0
      %2526 = vmatpush1.bf16.msra.mxu0 0
      %2527 = vmatprep.subr.bf16.mxu0 0
      %2528 = vmatpush1.bf16.msra.mxu0 0
      %2529 = vmatprep.subr.bf16.mxu0 0
      %2530 = vmatpush1.bf16.msra.mxu0 0
      %2531 = vmatprep.subr.bf16.mxu0 0
      %2532 = vmatpush1.bf16.msra.mxu0 0
      %2533 = vmatprep.subr.bf16.mxu0 0
      %2534 = vmatpush1.bf16.msra.mxu0 0
      %2535 = vmatprep.subr.bf16.mxu0 0
      %2536 = vmatpush1.bf16.msra.mxu0 0
      %2537 = vmatprep.subr.bf16.mxu0 0
      %2538 = vmatpush1.bf16.msra.mxu0 0
      %2539 = vmatprep.subr.bf16.mxu0 0
      %2540 = vmatpush1.bf16.msra.mxu0 0
      %2541 = vmatprep.subr.bf16.mxu0 0
      %2542 = vmatpush1.bf16.msra.mxu0 0
      %2543 = vmatprep.subr.bf16.mxu0 0
      %2544 = vmatpush1.bf16.msra.mxu0 0
      %2545 = vmatprep.mubr.bf16.mxu0 0
      %2546 = vmatmul.mubr.bf16.gmra.mrb[0].mxu0 %v1699
      %v2547 = vpop.f32.mrb[0].mxu0
      %v2548 = vadd.f32 %v2435, %v2547
      %v2549 = vpop.f32.mrb[0].mxu0
      %v2550 = vadd.f32 %v2437, %v2549
      %v2551 = vpop.f32.mrb[0].mxu0
      %v2552 = vadd.f32 %v2439, %v2551
      %v2553 = vpop.f32.mrb[0].mxu0
      %v2554 = vadd.f32 %v2441, %v2553
      %2555 = vmatprep.mubr.bf16.mxu0 0
      %2556 = vmatmul.mubr.bf16.gmra.mrb[0].mxu0 %v1702
      %v2557 = vpop.f32.mrb[0].mxu0
      %v2558 = vadd.f32 %v2445, %v2557
      %v2559 = vpop.f32.mrb[0].mxu0
      %v2560 = vadd.f32 %v2447, %v2559
      %v2561 = vpop.f32.mrb[0].mxu0
      %v2562 = vadd.f32 %v2449, %v2561
      %v2563 = vpop.f32.mrb[0].mxu0
      %v2564 = vadd.f32 %v2451, %v2563
      %2565 = vmatprep.mubr.bf16.mxu0 0
      %2566 = vmatmul.mubr.bf16.gmra.mrb[0].mxu0 %v1705
      %v2567 = vpop.f32.mrb[0].mxu0
      %v2568 = vadd.f32 %v2455, %v2567
      %v2569 = vpop.f32.mrb[0].mxu0
      %v2570 = vadd.f32 %v2457, %v2569
      %v2571 = vpop.f32.mrb[0].mxu0
      %v2572 = vadd.f32 %v2459, %v2571
      %v2573 = vpop.f32.mrb[0].mxu0
      %v2574 = vadd.f32 %v2461, %v2573
      %2575 = vmatprep.mubr.bf16.mxu0 0
      %2576 = vmatmul.mubr.bf16.gmra.mrb[0].mxu0 %v1708
      %v2577 = vpop.f32.mrb[0].mxu0
      %v2578 = vadd.f32 %v2465, %v2577
      %v2579 = vpop.f32.mrb[0].mxu0
      %v2580 = vadd.f32 %v2467, %v2579
      %v2581 = vpop.f32.mrb[0].mxu0
      %v2582 = vadd.f32 %v2469, %v2581
      %v2583 = vpop.f32.mrb[0].mxu0
      %v2584 = vadd.f32 %v2471, %v2583
      %2585 = vmatprep.mubr.bf16.mxu0 0
      %2586 = vmatmul.mubr.bf16.gmra.mrb[0].mxu0 %v1711
      %v2587 = vpop.f32.mrb[0].mxu0
      %v2588 = vadd.f32 %v2475, %v2587
      %v2589 = vpop.f32.mrb[0].mxu0
      %v2590 = vadd.f32 %v2477, %v2589
      %v2591 = vpop.f32.mrb[0].mxu0
      %v2592 = vadd.f32 %v2479, %v2591
      %v2593 = vpop.f32.mrb[0].mxu0
      %v2594 = vadd.f32 %v2481, %v2593
      %2595 = vmatprep.mubr.bf16.mxu0 0
      %2596 = vmatmul.mubr.bf16.gmra.mrb[0].mxu0 %v1714
      %v2597 = vpop.f32.mrb[0].mxu0
      %v2598 = vadd.f32 %v2485, %v2597
      %v2599 = vpop.f32.mrb[0].mxu0
      %v2600 = vadd.f32 %v2487, %v2599
      %v2601 = vpop.f32.mrb[0].mxu0
      %v2602 = vadd.f32 %v2489, %v2601
      %v2603 = vpop.f32.mrb[0].mxu0
      %v2604 = vadd.f32 %v2491, %v2603
      %2605 = vmatprep.mubr.bf16.mxu0 0
      %2606 = vmatmul.mubr.bf16.gmra.mrb[0].mxu0 %v1717
      %v2607 = vpop.f32.mrb[0].mxu0
      %v2608 = vadd.f32 %v2495, %v2607
      %v2609 = vpop.f32.mrb[0].mxu0
      %v2610 = vadd.f32 %v2497, %v2609
      %v2611 = vpop.f32.mrb[0].mxu0
      %v2612 = vadd.f32 %v2499, %v2611
      %v2613 = vpop.f32.mrb[0].mxu0
      %v2614 = vadd.f32 %v2501, %v2613
      %2615 = vmatprep.mubr.bf16.mxu0 0
      %2616 = vmatmul.mubr.bf16.gmra.mrb[0].mxu0 %v1720
      %v2617 = vpop.f32.mrb[0].mxu0
      %v2618 = vadd.f32 %v2505, %v2617
      %v2619 = vpop.f32.mrb[0].mxu0
      %v2620 = vadd.f32 %v2507, %v2619
      %v2621 = vpop.f32.mrb[0].mxu0
      %v2622 = vadd.f32 %v2509, %v2621
      %v2623 = vpop.f32.mrb[0].mxu0
      %v2624 = vadd.f32 %v2511, %v2623
      %2625 = vdwg.mxu0
      %v2626 = vmul.f32 %v2096, 0.2
      %v2627 = vmul.f32 %v2098, 0.2
      %v2628 = vmul.f32 %v2548, 0.2
      %v2629 = vmul.f32 %v2550, 0.2
      %v2630 = vmul.f32 %v2100, 0.2
      %v2631 = vmul.f32 %v2102, 0.2
      %v2632 = vmul.f32 %v2552, 0.2
      %v2633 = vmul.f32 %v2554, 0.2
      %v2634 = vmul.f32 %v2106, 0.2
      %v2635 = vmul.f32 %v2108, 0.2
      %v2636 = vmul.f32 %v2558, 0.2
      %v2637 = vmul.f32 %v2560, 0.2
      %v2638 = vmul.f32 %v2110, 0.2
      %v2639 = vmul.f32 %v2112, 0.2
      %v2640 = vmul.f32 %v2562, 0.2
      %v2641 = vmul.f32 %v2564, 0.2
      %v2642 = vmul.f32 %v2116, 0.2
      %v2643 = vmul.f32 %v2118, 0.2
      %v2644 = vmul.f32 %v2568, 0.2
      %v2645 = vmul.f32 %v2570, 0.2
      %v2646 = vmul.f32 %v2120, 0.2
      %v2647 = vmul.f32 %v2122, 0.2
      %v2648 = vmul.f32 %v2572, 0.2
      %v2649 = vmul.f32 %v2574, 0.2
      %v2650 = vmul.f32 %v2126, 0.2
      %v2651 = vmul.f32 %v2128, 0.2
      %v2652 = vmul.f32 %v2578, 0.2
      %v2653 = vmul.f32 %v2580, 0.2
      %v2654 = vmul.f32 %v2130, 0.2
      %v2655 = vmul.f32 %v2132, 0.2
      %v2656 = vmul.f32 %v2582, 0.2
      %v2657 = vmul.f32 %v2584, 0.2
      %v2658 = vmul.f32 %v2136, 0.2
      %v2659 = vmul.f32 %v2138, 0.2
      %v2660 = vmul.f32 %v2588, 0.2
      %v2661 = vmul.f32 %v2590, 0.2
      %v2662 = vmul.f32 %v2140, 0.2
      %v2663 = vmul.f32 %v2142, 0.2
      %v2664 = vmul.f32 %v2592, 0.2
      %v2665 = vmul.f32 %v2594, 0.2
      %v2666 = vmul.f32 %v2146, 0.2
      %v2667 = vmul.f32 %v2148, 0.2
      %v2668 = vmul.f32 %v2598, 0.2
      %v2669 = vmul.f32 %v2600, 0.2
      %v2670 = vmul.f32 %v2150, 0.2
      %v2671 = vmul.f32 %v2152, 0.2
      %v2672 = vmul.f32 %v2602, 0.2
      %v2673 = vmul.f32 %v2604, 0.2
      %v2674 = vmul.f32 %v2156, 0.2
      %v2675 = vmul.f32 %v2158, 0.2
      %v2676 = vmul.f32 %v2608, 0.2
      %v2677 = vmul.f32 %v2610, 0.2
      %v2678 = vmul.f32 %v2160, 0.2
      %v2679 = vmul.f32 %v2162, 0.2
      %v2680 = vmul.f32 %v2612, 0.2
      %v2681 = vmul.f32 %v2614, 0.2
      %v2682 = vmul.f32 %v2166, 0.2
      %v2683 = vmul.f32 %v2168, 0.2
      %v2684 = vmul.f32 %v2618, 0.2
      %v2685 = vmul.f32 %v2620, 0.2
      %v2686 = vmul.f32 %v2170, 0.2
      %v2687 = vmul.f32 %v2172, 0.2
      %v2688 = vmul.f32 %v2622, 0.2
      %v2689 = vmul.f32 %v2624, 0.2
      %v2690 = vmax.f32 %v2096, %v2626
      %v2691 = vmax.f32 %v2098, %v2627
      %v2692 = vmax.f32 %v2548, %v2628
      %v2693 = vmax.f32 %v2550, %v2629
      %v2694 = vmax.f32 %v2100, %v2630
      %v2695 = vmax.f32 %v2102, %v2631
      %v2696 = vmax.f32 %v2552, %v2632
      %v2697 = vmax.f32 %v2554, %v2633
      %v2698 = vmax.f32 %v2106, %v2634
      %v2699 = vmax.f32 %v2108, %v2635
      %v2700 = vmax.f32 %v2558, %v2636
      %v2701 = vmax.f32 %v2560, %v2637
      %v2702 = vmax.f32 %v2110, %v2638
      %v2703 = vmax.f32 %v2112, %v2639
      %v2704 = vmax.f32 %v2562, %v2640
      %v2705 = vmax.f32 %v2564, %v2641
      %v2706 = vmax.f32 %v2116, %v2642
      %v2707 = vmax.f32 %v2118, %v2643
      %v2708 = vmax.f32 %v2568, %v2644
      %v2709 = vmax.f32 %v2570, %v2645
      %v2710 = vmax.f32 %v2120, %v2646
      %v2711 = vmax.f32 %v2122, %v2647
      %v2712 = vmax.f32 %v2572, %v2648
      %v2713 = vmax.f32 %v2574, %v2649
      %v2714 = vmax.f32 %v2126, %v2650
      %v2715 = vmax.f32 %v2128, %v2651
      %v2716 = vmax.f32 %v2578, %v2652
      %v2717 = vmax.f32 %v2580, %v2653
      %v2718 = vmax.f32 %v2130, %v2654
      %v2719 = vmax.f32 %v2132, %v2655
      %v2720 = vmax.f32 %v2582, %v2656
      %v2721 = vmax.f32 %v2584, %v2657
      %v2722 = vmax.f32 %v2136, %v2658
      %v2723 = vmax.f32 %v2138, %v2659
      %v2724 = vmax.f32 %v2588, %v2660
      %v2725 = vmax.f32 %v2590, %v2661
      %v2726 = vmax.f32 %v2140, %v2662
      %v2727 = vmax.f32 %v2142, %v2663
      %v2728 = vmax.f32 %v2592, %v2664
      %v2729 = vmax.f32 %v2594, %v2665
      %v2730 = vmax.f32 %v2146, %v2666
      %v2731 = vmax.f32 %v2148, %v2667
      %v2732 = vmax.f32 %v2598, %v2668
      %v2733 = vmax.f32 %v2600, %v2669
      %v2734 = vmax.f32 %v2150, %v2670
      %v2735 = vmax.f32 %v2152, %v2671
      %v2736 = vmax.f32 %v2602, %v2672
      %v2737 = vmax.f32 %v2604, %v2673
      %v2738 = vmax.f32 %v2156, %v2674
      %v2739 = vmax.f32 %v2158, %v2675
      %v2740 = vmax.f32 %v2608, %v2676
      %v2741 = vmax.f32 %v2610, %v2677
      %v2742 = vmax.f32 %v2160, %v2678
      %v2743 = vmax.f32 %v2162, %v2679
      %v2744 = vmax.f32 %v2612, %v2680
      %v2745 = vmax.f32 %v2614, %v2681
      %v2746 = vmax.f32 %v2166, %v2682
      %v2747 = vmax.f32 %v2168, %v2683
      %v2748 = vmax.f32 %v2618, %v2684
      %v2749 = vmax.f32 %v2620, %v2685
      %v2750 = vmax.f32 %v2170, %v2686
      %v2751 = vmax.f32 %v2172, %v2687
      %v2752 = vmax.f32 %v2622, %v2688
      %v2753 = vmax.f32 %v2624, %v2689
      %v2754 = vpack.c.bf16 %v2694, %v2690
      %v2755 = vpack.c.bf16 %v2695, %v2691
      %v2756 = vpack.c.bf16 %v2696, %v2692
      %v2757 = vpack.c.bf16 %v2697, %v2693
      %v2758 = vpack.c.bf16 %v2702, %v2698
      %v2759 = vpack.c.bf16 %v2703, %v2699
      %v2760 = vpack.c.bf16 %v2704, %v2700
      %v2761 = vpack.c.bf16 %v2705, %v2701
      %v2762 = vpack.c.bf16 %v2710, %v2706
      %v2763 = vpack.c.bf16 %v2711, %v2707
      %v2764 = vpack.c.bf16 %v2712, %v2708
      %v2765 = vpack.c.bf16 %v2713, %v2709
      %v2766 = vpack.c.bf16 %v2718, %v2714
      %v2767 = vpack.c.bf16 %v2719, %v2715
      %v2768 = vpack.c.bf16 %v2720, %v2716
      %v2769 = vpack.c.bf16 %v2721, %v2717
      %v2770 = vpack.c.bf16 %v2726, %v2722
      %v2771 = vpack.c.bf16 %v2727, %v2723
      %v2772 = vpack.c.bf16 %v2728, %v2724
      %v2773 = vpack.c.bf16 %v2729, %v2725
      %v2774 = vpack.c.bf16 %v2734, %v2730
      %v2775 = vpack.c.bf16 %v2735, %v2731
      %v2776 = vpack.c.bf16 %v2736, %v2732
      %v2777 = vpack.c.bf16 %v2737, %v2733
      %v2778 = vpack.c.bf16 %v2742, %v2738
      %v2779 = vpack.c.bf16 %v2743, %v2739
      %v2780 = vpack.c.bf16 %v2744, %v2740
      %v2781 = vpack.c.bf16 %v2745, %v2741
      %v2782 = vpack.c.bf16 %v2750, %v2746
      %v2783 = vpack.c.bf16 %v2751, %v2747
      %v2784 = vpack.c.bf16 %v2752, %v2748
      %v2785 = vpack.c.bf16 %v2753, %v2749
      %v2786 = vld [vmem:[%s3] sm:$0xff]
      %v2787 = vld [vmem:[%s3 + $0x8] sm:$0xff]
      %v2788 = vld [vmem:[%s3 + $0x10] sm:$0xff]
      %v2789 = vld [vmem:[%s3 + $0x18] sm:$0xff]
      %v2790 = vld [vmem:[%s3 + $0x20] sm:$0xff]
      %v2791 = vld [vmem:[%s3 + $0x28] sm:$0xff]
      %v2792 = vld [vmem:[%s3 + $0x30] sm:$0xff]
      %v2793 = vld [vmem:[%s3 + $0x38] sm:$0xff]
      %v2794 = vld [vmem:[%s3 + $0x40] sm:$0xff]
      %v2795 = vld [vmem:[%s3 + $0x48] sm:$0xff]
      %v2796 = vld [vmem:[%s3 + $0x50] sm:$0xff]
      %v2797 = vld [vmem:[%s3 + $0x58] sm:$0xff]
      %v2798 = vld [vmem:[%s3 + $0x60] sm:$0xff]
      %v2799 = vld [vmem:[%s3 + $0x68] sm:$0xff]
      %v2800 = vld [vmem:[%s3 + $0x70] sm:$0xff]
      %v2801 = vld [vmem:[%s3 + $0x78] sm:$0xff]
      %v2802 = vld [vmem:[%s3 + $0x80] sm:$0xff]
      %v2803 = vld [vmem:[%s3 + $0x88] sm:$0xff]
      %v2804 = vld [vmem:[%s3 + $0x90] sm:$0xff]
      %v2805 = vld [vmem:[%s3 + $0x98] sm:$0xff]
      %v2806 = vld [vmem:[%s3 + $0xa0] sm:$0xff]
      %v2807 = vld [vmem:[%s3 + $0xa8] sm:$0xff]
      %v2808 = vld [vmem:[%s3 + $0xb0] sm:$0xff]
      %v2809 = vld [vmem:[%s3 + $0xb8] sm:$0xff]
      %v2810 = vld [vmem:[%s3 + $0xc0] sm:$0xff]
      %v2811 = vld [vmem:[%s3 + $0xc8] sm:$0xff]
      %v2812 = vld [vmem:[%s3 + $0xd0] sm:$0xff]
      %v2813 = vld [vmem:[%s3 + $0xd8] sm:$0xff]
      %v2814 = vld [vmem:[%s3 + $0xe0] sm:$0xff]
      %v2815 = vld [vmem:[%s3 + $0xe8] sm:$0xff]
      %v2816 = vld [vmem:[%s3 + $0xf0] sm:$0xff]
      %v2817 = vld [vmem:[%s3 + $0xf8] sm:$0xff]
      %v2818 = vld [vmem:[%s3 + $0x100] sm:$0xff]
      %v2819 = vld [vmem:[%s3 + $0x108] sm:$0xff]
      %v2820 = vld [vmem:[%s3 + $0x110] sm:$0xff]
      %v2821 = vld [vmem:[%s3 + $0x118] sm:$0xff]
      %v2822 = vld [vmem:[%s3 + $0x120] sm:$0xff]
      %v2823 = vld [vmem:[%s3 + $0x128] sm:$0xff]
      %v2824 = vld [vmem:[%s3 + $0x130] sm:$0xff]
      %v2825 = vld [vmem:[%s3 + $0x138] sm:$0xff]
      %v2826 = vld [vmem:[%s3 + $0x140] sm:$0xff]
      %v2827 = vld [vmem:[%s3 + $0x148] sm:$0xff]
      %v2828 = vld [vmem:[%s3 + $0x150] sm:$0xff]
      %v2829 = vld [vmem:[%s3 + $0x158] sm:$0xff]
      %v2830 = vld [vmem:[%s3 + $0x160] sm:$0xff]
      %v2831 = vld [vmem:[%s3 + $0x168] sm:$0xff]
      %v2832 = vld [vmem:[%s3 + $0x170] sm:$0xff]
      %v2833 = vld [vmem:[%s3 + $0x178] sm:$0xff]
      %v2834 = vld [vmem:[%s3 + $0x180] sm:$0xff]
      %v2835 = vld [vmem:[%s3 + $0x188] sm:$0xff]
      %v2836 = vld [vmem:[%s3 + $0x190] sm:$0xff]
      %v2837 = vld [vmem:[%s3 + $0x198] sm:$0xff]
      %v2838 = vld [vmem:[%s3 + $0x1a0] sm:$0xff]
      %v2839 = vld [vmem:[%s3 + $0x1a8] sm:$0xff]
      %v2840 = vld [vmem:[%s3 + $0x1b0] sm:$0xff]
      %v2841 = vld [vmem:[%s3 + $0x1b8] sm:$0xff]
      %v2842 = vld [vmem:[%s3 + $0x1c0] sm:$0xff]
      %v2843 = vld [vmem:[%s3 + $0x1c8] sm:$0xff]
      %v2844 = vld [vmem:[%s3 + $0x1d0] sm:$0xff]
      %v2845 = vld [vmem:[%s3 + $0x1d8] sm:$0xff]
      %v2846 = vld [vmem:[%s3 + $0x1e0] sm:$0xff]
      %v2847 = vld [vmem:[%s3 + $0x1e8] sm:$0xff]
      %v2848 = vld [vmem:[%s3 + $0x1f0] sm:$0xff]
      %v2849 = vld [vmem:[%s3 + $0x1f8] sm:$0xff]
      %v2850 = vld [vmem:[%s3 + $0x200] sm:$0xff]
      %v2851 = vld [vmem:[%s3 + $0x208] sm:$0xff]
      %v2852 = vld [vmem:[%s3 + $0x210] sm:$0xff]
      %v2853 = vld [vmem:[%s3 + $0x218] sm:$0xff]
      %v2854 = vld [vmem:[%s3 + $0x220] sm:$0xff]
      %v2855 = vld [vmem:[%s3 + $0x228] sm:$0xff]
      %v2856 = vld [vmem:[%s3 + $0x230] sm:$0xff]
      %v2857 = vld [vmem:[%s3 + $0x238] sm:$0xff]
      %v2858 = vld [vmem:[%s3 + $0x240] sm:$0xff]
      %v2859 = vld [vmem:[%s3 + $0x248] sm:$0xff]
      %v2860 = vld [vmem:[%s3 + $0x250] sm:$0xff]
      %v2861 = vld [vmem:[%s3 + $0x258] sm:$0xff]
      %v2862 = vld [vmem:[%s3 + $0x260] sm:$0xff]
      %v2863 = vld [vmem:[%s3 + $0x268] sm:$0xff]
      %v2864 = vld [vmem:[%s3 + $0x270] sm:$0xff]
      %v2865 = vld [vmem:[%s3 + $0x278] sm:$0xff]
      %v2866 = vld [vmem:[%s3 + $0x280] sm:$0xff]
      %v2867 = vld [vmem:[%s3 + $0x288] sm:$0xff]
      %v2868 = vld [vmem:[%s3 + $0x290] sm:$0xff]
      %v2869 = vld [vmem:[%s3 + $0x298] sm:$0xff]
      %v2870 = vld [vmem:[%s3 + $0x2a0] sm:$0xff]
      %v2871 = vld [vmem:[%s3 + $0x2a8] sm:$0xff]
      %v2872 = vld [vmem:[%s3 + $0x2b0] sm:$0xff]
      %v2873 = vld [vmem:[%s3 + $0x2b8] sm:$0xff]
      %v2874 = vld [vmem:[%s3 + $0x2c0] sm:$0xff]
      %v2875 = vld [vmem:[%s3 + $0x2c8] sm:$0xff]
      %v2876 = vld [vmem:[%s3 + $0x2d0] sm:$0xff]
      %v2877 = vld [vmem:[%s3 + $0x2d8] sm:$0xff]
      %v2878 = vld [vmem:[%s3 + $0x2e0] sm:$0xff]
      %v2879 = vld [vmem:[%s3 + $0x2e8] sm:$0xff]
      %v2880 = vld [vmem:[%s3 + $0x2f0] sm:$0xff]
      %v2881 = vld [vmem:[%s3 + $0x2f8] sm:$0xff]
      %v2882 = vld [vmem:[%s3 + $0x300] sm:$0xff]
      %v2883 = vld [vmem:[%s3 + $0x308] sm:$0xff]
      %v2884 = vld [vmem:[%s3 + $0x310] sm:$0xff]
      %v2885 = vld [vmem:[%s3 + $0x318] sm:$0xff]
      %v2886 = vld [vmem:[%s3 + $0x320] sm:$0xff]
      %v2887 = vld [vmem:[%s3 + $0x328] sm:$0xff]
      %v2888 = vld [vmem:[%s3 + $0x330] sm:$0xff]
      %v2889 = vld [vmem:[%s3 + $0x338] sm:$0xff]
      %v2890 = vld [vmem:[%s3 + $0x340] sm:$0xff]
      %v2891 = vld [vmem:[%s3 + $0x348] sm:$0xff]
      %v2892 = vld [vmem:[%s3 + $0x350] sm:$0xff]
      %v2893 = vld [vmem:[%s3 + $0x358] sm:$0xff]
      %v2894 = vld [vmem:[%s3 + $0x360] sm:$0xff]
      %v2895 = vld [vmem:[%s3 + $0x368] sm:$0xff]
      %v2896 = vld [vmem:[%s3 + $0x370] sm:$0xff]
      %v2897 = vld [vmem:[%s3 + $0x378] sm:$0xff]
      %v2898 = vld [vmem:[%s3 + $0x380] sm:$0xff]
      %v2899 = vld [vmem:[%s3 + $0x388] sm:$0xff]
      %v2900 = vld [vmem:[%s3 + $0x390] sm:$0xff]
      %v2901 = vld [vmem:[%s3 + $0x398] sm:$0xff]
      %v2902 = vld [vmem:[%s3 + $0x3a0] sm:$0xff]
      %v2903 = vld [vmem:[%s3 + $0x3a8] sm:$0xff]
      %v2904 = vld [vmem:[%s3 + $0x3b0] sm:$0xff]
      %v2905 = vld [vmem:[%s3 + $0x3b8] sm:$0xff]
      %v2906 = vld [vmem:[%s3 + $0x3c0] sm:$0xff]
      %v2907 = vld [vmem:[%s3 + $0x3c8] sm:$0xff]
      %v2908 = vld [vmem:[%s3 + $0x3d0] sm:$0xff]
      %v2909 = vld [vmem:[%s3 + $0x3d8] sm:$0xff]
      %v2910 = vld [vmem:[%s3 + $0x3e0] sm:$0xff]
      %v2911 = vld [vmem:[%s3 + $0x3e8] sm:$0xff]
      %v2912 = vld [vmem:[%s3 + $0x3f0] sm:$0xff]
      %v2913 = vld [vmem:[%s3 + $0x3f8] sm:$0xff]
      %v2914 = vld [vmem:[%s4] sm:$0xf]
      %v2916 = vlaneseq
      %v2917 = vshrl.u32 %v2916, 7
      %v2918 = vsub.s32 0, %v2917
      %v2919 = vrot.slane %v2914, %v2918
      %v2920 = vlaneseq
      %v2921 = vshrl.u32 %v2920, 7
      %v2922 = vsub.s32 1, %v2921
      %v2923 = vrot.slane %v2914, %v2922
      %v2924 = vlaneseq
      %v2925 = vshrl.u32 %v2924, 7
      %v2926 = vsub.s32 2, %v2925
      %v2927 = vrot.slane %v2914, %v2926
      %v2928 = vlaneseq
      %v2929 = vshrl.u32 %v2928, 7
      %v2930 = vsub.s32 3, %v2929
      %v2931 = vrot.slane %v2914, %v2930
      %v3064 = vunpack.c.l.b16 %v2786
      %v3065 = vunpack.c.h.b16 %v2786
      %v3066 = vunpack.c.l.b16 %v2787
      %v3067 = vunpack.c.h.b16 %v2787
      %v3068 = vunpack.c.l.b16 %v2788
      %v3069 = vunpack.c.h.b16 %v2788
      %v3070 = vunpack.c.l.b16 %v2789
      %v3071 = vunpack.c.h.b16 %v2789
      %v3072 = vunpack.c.l.b16 %v2790
      %v3073 = vunpack.c.h.b16 %v2790
      %v3074 = vunpack.c.l.b16 %v2791
      %v3075 = vunpack.c.h.b16 %v2791
      %v3076 = vunpack.c.l.b16 %v2792
      %v3077 = vunpack.c.h.b16 %v2792
      %v3078 = vunpack.c.l.b16 %v2793
      %v3079 = vunpack.c.h.b16 %v2793
      %v3080 = vunpack.c.l.b16 %v2794
      %v3081 = vunpack.c.h.b16 %v2794
      %v3082 = vunpack.c.l.b16 %v2795
      %v3083 = vunpack.c.h.b16 %v2795
      %v3084 = vunpack.c.l.b16 %v2796
      %v3085 = vunpack.c.h.b16 %v2796
      %v3086 = vunpack.c.l.b16 %v2797
      %v3087 = vunpack.c.h.b16 %v2797
      %v3088 = vunpack.c.l.b16 %v2798
      %v3089 = vunpack.c.h.b16 %v2798
      %v3090 = vunpack.c.l.b16 %v2799
      %v3091 = vunpack.c.h.b16 %v2799
      %v3092 = vunpack.c.l.b16 %v2800
      %v3093 = vunpack.c.h.b16 %v2800
      %v3094 = vunpack.c.l.b16 %v2801
      %v3095 = vunpack.c.h.b16 %v2801
      %v3096 = vunpack.c.l.b16 %v2802
      %v3097 = vunpack.c.h.b16 %v2802
      %v3098 = vunpack.c.l.b16 %v2803
      %v3099 = vunpack.c.h.b16 %v2803
      %v3100 = vunpack.c.l.b16 %v2804
      %v3101 = vunpack.c.h.b16 %v2804
      %v3102 = vunpack.c.l.b16 %v2805
      %v3103 = vunpack.c.h.b16 %v2805
      %v3104 = vunpack.c.l.b16 %v2806
      %v3105 = vunpack.c.h.b16 %v2806
      %v3106 = vunpack.c.l.b16 %v2807
      %v3107 = vunpack.c.h.b16 %v2807
      %v3108 = vunpack.c.l.b16 %v2808
      %v3109 = vunpack.c.h.b16 %v2808
      %v3110 = vunpack.c.l.b16 %v2809
      %v3111 = vunpack.c.h.b16 %v2809
      %v3112 = vunpack.c.l.b16 %v2810
      %v3113 = vunpack.c.h.b16 %v2810
      %v3114 = vunpack.c.l.b16 %v2811
      %v3115 = vunpack.c.h.b16 %v2811
      %v3116 = vunpack.c.l.b16 %v2812
      %v3117 = vunpack.c.h.b16 %v2812
      %v3118 = vunpack.c.l.b16 %v2813
      %v3119 = vunpack.c.h.b16 %v2813
      %v3120 = vunpack.c.l.b16 %v2814
      %v3121 = vunpack.c.h.b16 %v2814
      %v3122 = vunpack.c.l.b16 %v2815
      %v3123 = vunpack.c.h.b16 %v2815
      %v3124 = vunpack.c.l.b16 %v2816
      %v3125 = vunpack.c.h.b16 %v2816
      %v3126 = vunpack.c.l.b16 %v2817
      %v3127 = vunpack.c.h.b16 %v2817
      %v3128 = vunpack.c.l.b16 %v2818
      %v3129 = vunpack.c.h.b16 %v2818
      %v3130 = vunpack.c.l.b16 %v2819
      %v3131 = vunpack.c.h.b16 %v2819
      %v3132 = vunpack.c.l.b16 %v2820
      %v3133 = vunpack.c.h.b16 %v2820
      %v3134 = vunpack.c.l.b16 %v2821
      %v3135 = vunpack.c.h.b16 %v2821
      %v3136 = vunpack.c.l.b16 %v2822
      %v3137 = vunpack.c.h.b16 %v2822
      %v3138 = vunpack.c.l.b16 %v2823
      %v3139 = vunpack.c.h.b16 %v2823
      %v3140 = vunpack.c.l.b16 %v2824
      %v3141 = vunpack.c.h.b16 %v2824
      %v3142 = vunpack.c.l.b16 %v2825
      %v3143 = vunpack.c.h.b16 %v2825
      %v3144 = vunpack.c.l.b16 %v2826
      %v3145 = vunpack.c.h.b16 %v2826
      %v3146 = vunpack.c.l.b16 %v2827
      %v3147 = vunpack.c.h.b16 %v2827
      %v3148 = vunpack.c.l.b16 %v2828
      %v3149 = vunpack.c.h.b16 %v2828
      %v3150 = vunpack.c.l.b16 %v2829
      %v3151 = vunpack.c.h.b16 %v2829
      %v3152 = vunpack.c.l.b16 %v2830
      %v3153 = vunpack.c.h.b16 %v2830
      %v3154 = vunpack.c.l.b16 %v2831
      %v3155 = vunpack.c.h.b16 %v2831
      %v3156 = vunpack.c.l.b16 %v2832
      %v3157 = vunpack.c.h.b16 %v2832
      %v3158 = vunpack.c.l.b16 %v2833
      %v3159 = vunpack.c.h.b16 %v2833
      %v3160 = vunpack.c.l.b16 %v2834
      %v3161 = vunpack.c.h.b16 %v2834
      %v3162 = vunpack.c.l.b16 %v2835
      %v3163 = vunpack.c.h.b16 %v2835
      %v3164 = vunpack.c.l.b16 %v2836
      %v3165 = vunpack.c.h.b16 %v2836
      %v3166 = vunpack.c.l.b16 %v2837
      %v3167 = vunpack.c.h.b16 %v2837
      %v3168 = vunpack.c.l.b16 %v2838
      %v3169 = vunpack.c.h.b16 %v2838
      %v3170 = vunpack.c.l.b16 %v2839
      %v3171 = vunpack.c.h.b16 %v2839
      %v3172 = vunpack.c.l.b16 %v2840
      %v3173 = vunpack.c.h.b16 %v2840
      %v3174 = vunpack.c.l.b16 %v2841
      %v3175 = vunpack.c.h.b16 %v2841
      %v3176 = vunpack.c.l.b16 %v2842
      %v3177 = vunpack.c.h.b16 %v2842
      %v3178 = vunpack.c.l.b16 %v2843
      %v3179 = vunpack.c.h.b16 %v2843
      %v3180 = vunpack.c.l.b16 %v2844
      %v3181 = vunpack.c.h.b16 %v2844
      %v3182 = vunpack.c.l.b16 %v2845
      %v3183 = vunpack.c.h.b16 %v2845
      %v3184 = vunpack.c.l.b16 %v2846
      %v3185 = vunpack.c.h.b16 %v2846
      %v3186 = vunpack.c.l.b16 %v2847
      %v3187 = vunpack.c.h.b16 %v2847
      %v3188 = vunpack.c.l.b16 %v2848
      %v3189 = vunpack.c.h.b16 %v2848
      %v3190 = vunpack.c.l.b16 %v2849
      %v3191 = vunpack.c.h.b16 %v2849
      %v3192 = vunpack.c.l.b16 %v2850
      %v3193 = vunpack.c.h.b16 %v2850
      %v3194 = vunpack.c.l.b16 %v2851
      %v3195 = vunpack.c.h.b16 %v2851
      %v3196 = vunpack.c.l.b16 %v2852
      %v3197 = vunpack.c.h.b16 %v2852
      %v3198 = vunpack.c.l.b16 %v2853
      %v3199 = vunpack.c.h.b16 %v2853
      %v3200 = vunpack.c.l.b16 %v2854
      %v3201 = vunpack.c.h.b16 %v2854
      %v3202 = vunpack.c.l.b16 %v2855
      %v3203 = vunpack.c.h.b16 %v2855
      %v3204 = vunpack.c.l.b16 %v2856
      %v3205 = vunpack.c.h.b16 %v2856
      %v3206 = vunpack.c.l.b16 %v2857
      %v3207 = vunpack.c.h.b16 %v2857
      %v3208 = vunpack.c.l.b16 %v2858
      %v3209 = vunpack.c.h.b16 %v2858
      %v3210 = vunpack.c.l.b16 %v2859
      %v3211 = vunpack.c.h.b16 %v2859
      %v3212 = vunpack.c.l.b16 %v2860
      %v3213 = vunpack.c.h.b16 %v2860
      %v3214 = vunpack.c.l.b16 %v2861
      %v3215 = vunpack.c.h.b16 %v2861
      %v3216 = vunpack.c.l.b16 %v2862
      %v3217 = vunpack.c.h.b16 %v2862
      %v3218 = vunpack.c.l.b16 %v2863
      %v3219 = vunpack.c.h.b16 %v2863
      %v3220 = vunpack.c.l.b16 %v2864
      %v3221 = vunpack.c.h.b16 %v2864
      %v3222 = vunpack.c.l.b16 %v2865
      %v3223 = vunpack.c.h.b16 %v2865
      %v3224 = vunpack.c.l.b16 %v2866
      %v3225 = vunpack.c.h.b16 %v2866
      %v3226 = vunpack.c.l.b16 %v2867
      %v3227 = vunpack.c.h.b16 %v2867
      %v3228 = vunpack.c.l.b16 %v2868
      %v3229 = vunpack.c.h.b16 %v2868
      %v3230 = vunpack.c.l.b16 %v2869
      %v3231 = vunpack.c.h.b16 %v2869
      %v3232 = vunpack.c.l.b16 %v2870
      %v3233 = vunpack.c.h.b16 %v2870
      %v3234 = vunpack.c.l.b16 %v2871
      %v3235 = vunpack.c.h.b16 %v2871
      %v3236 = vunpack.c.l.b16 %v2872
      %v3237 = vunpack.c.h.b16 %v2872
      %v3238 = vunpack.c.l.b16 %v2873
      %v3239 = vunpack.c.h.b16 %v2873
      %v3240 = vunpack.c.l.b16 %v2874
      %v3241 = vunpack.c.h.b16 %v2874
      %v3242 = vunpack.c.l.b16 %v2875
      %v3243 = vunpack.c.h.b16 %v2875
      %v3244 = vunpack.c.l.b16 %v2876
      %v3245 = vunpack.c.h.b16 %v2876
      %v3246 = vunpack.c.l.b16 %v2877
      %v3247 = vunpack.c.h.b16 %v2877
      %v3248 = vunpack.c.l.b16 %v2878
      %v3249 = vunpack.c.h.b16 %v2878
      %v3250 = vunpack.c.l.b16 %v2879
      %v3251 = vunpack.c.h.b16 %v2879
      %v3252 = vunpack.c.l.b16 %v2880
      %v3253 = vunpack.c.h.b16 %v2880
      %v3254 = vunpack.c.l.b16 %v2881
      %v3255 = vunpack.c.h.b16 %v2881
      %v3256 = vunpack.c.l.b16 %v2882
      %v3257 = vunpack.c.h.b16 %v2882
      %v3258 = vunpack.c.l.b16 %v2883
      %v3259 = vunpack.c.h.b16 %v2883
      %v3260 = vunpack.c.l.b16 %v2884
      %v3261 = vunpack.c.h.b16 %v2884
      %v3262 = vunpack.c.l.b16 %v2885
      %v3263 = vunpack.c.h.b16 %v2885
      %v3264 = vunpack.c.l.b16 %v2886
      %v3265 = vunpack.c.h.b16 %v2886
      %v3266 = vunpack.c.l.b16 %v2887
      %v3267 = vunpack.c.h.b16 %v2887
      %v3268 = vunpack.c.l.b16 %v2888
      %v3269 = vunpack.c.h.b16 %v2888
      %v3270 = vunpack.c.l.b16 %v2889
      %v3271 = vunpack.c.h.b16 %v2889
      %v3272 = vunpack.c.l.b16 %v2890
      %v3273 = vunpack.c.h.b16 %v2890
      %v3274 = vunpack.c.l.b16 %v2891
      %v3275 = vunpack.c.h.b16 %v2891
      %v3276 = vunpack.c.l.b16 %v2892
      %v3277 = vunpack.c.h.b16 %v2892
      %v3278 = vunpack.c.l.b16 %v2893
      %v3279 = vunpack.c.h.b16 %v2893
      %v3280 = vunpack.c.l.b16 %v2894
      %v3281 = vunpack.c.h.b16 %v2894
      %v3282 = vunpack.c.l.b16 %v2895
      %v3283 = vunpack.c.h.b16 %v2895
      %v3284 = vunpack.c.l.b16 %v2896
      %v3285 = vunpack.c.h.b16 %v2896
      %v3286 = vunpack.c.l.b16 %v2897
      %v3287 = vunpack.c.h.b16 %v2897
      %v3288 = vunpack.c.l.b16 %v2898
      %v3289 = vunpack.c.h.b16 %v2898
      %v3290 = vunpack.c.l.b16 %v2899
      %v3291 = vunpack.c.h.b16 %v2899
      %v3292 = vunpack.c.l.b16 %v2900
      %v3293 = vunpack.c.h.b16 %v2900
      %v3294 = vunpack.c.l.b16 %v2901
      %v3295 = vunpack.c.h.b16 %v2901
      %v3296 = vunpack.c.l.b16 %v2902
      %v3297 = vunpack.c.h.b16 %v2902
      %v3298 = vunpack.c.l.b16 %v2903
      %v3299 = vunpack.c.h.b16 %v2903
      %v3300 = vunpack.c.l.b16 %v2904
      %v3301 = vunpack.c.h.b16 %v2904
      %v3302 = vunpack.c.l.b16 %v2905
      %v3303 = vunpack.c.h.b16 %v2905
      %v3304 = vunpack.c.l.b16 %v2906
      %v3305 = vunpack.c.h.b16 %v2906
      %v3306 = vunpack.c.l.b16 %v2907
      %v3307 = vunpack.c.h.b16 %v2907
      %v3308 = vunpack.c.l.b16 %v2908
      %v3309 = vunpack.c.h.b16 %v2908
      %v3310 = vunpack.c.l.b16 %v2909
      %v3311 = vunpack.c.h.b16 %v2909
      %v3312 = vunpack.c.l.b16 %v2910
      %v3313 = vunpack.c.h.b16 %v2910
      %v3314 = vunpack.c.l.b16 %v2911
      %v3315 = vunpack.c.h.b16 %v2911
      %v3316 = vunpack.c.l.b16 %v2912
      %v3317 = vunpack.c.h.b16 %v2912
      %v3318 = vunpack.c.l.b16 %v2913
      %v3319 = vunpack.c.h.b16 %v2913
      %v3320 = vpack.c.b16 %v3068, %v3064
      %v3321 = vpack.c.b16 %v3069, %v3065
      %v3322 = vpack.c.b16 %v3070, %v3066
      %v3323 = vpack.c.b16 %v3071, %v3067
      %v3324 = vpack.c.b16 %v3076, %v3072
      %v3325 = vpack.c.b16 %v3077, %v3073
      %v3326 = vpack.c.b16 %v3078, %v3074
      %v3327 = vpack.c.b16 %v3079, %v3075
      %v3328 = vpack.c.b16 %v3084, %v3080
      %v3329 = vpack.c.b16 %v3085, %v3081
      %v3330 = vpack.c.b16 %v3086, %v3082
      %v3331 = vpack.c.b16 %v3087, %v3083
      %v3332 = vpack.c.b16 %v3092, %v3088
      %v3333 = vpack.c.b16 %v3093, %v3089
      %v3334 = vpack.c.b16 %v3094, %v3090
      %v3335 = vpack.c.b16 %v3095, %v3091
      %v3336 = vpack.c.b16 %v3100, %v3096
      %v3337 = vpack.c.b16 %v3101, %v3097
      %v3338 = vpack.c.b16 %v3102, %v3098
      %v3339 = vpack.c.b16 %v3103, %v3099
      %v3340 = vpack.c.b16 %v3108, %v3104
      %v3341 = vpack.c.b16 %v3109, %v3105
      %v3342 = vpack.c.b16 %v3110, %v3106
      %v3343 = vpack.c.b16 %v3111, %v3107
      %v3344 = vpack.c.b16 %v3116, %v3112
      %v3345 = vpack.c.b16 %v3117, %v3113
      %v3346 = vpack.c.b16 %v3118, %v3114
      %v3347 = vpack.c.b16 %v3119, %v3115
      %v3348 = vpack.c.b16 %v3124, %v3120
      %v3349 = vpack.c.b16 %v3125, %v3121
      %v3350 = vpack.c.b16 %v3126, %v3122
      %v3351 = vpack.c.b16 %v3127, %v3123
      %v3352 = vpack.c.b16 %v3132, %v3128
      %v3353 = vpack.c.b16 %v3133, %v3129
      %v3354 = vpack.c.b16 %v3134, %v3130
      %v3355 = vpack.c.b16 %v3135, %v3131
      %v3356 = vpack.c.b16 %v3140, %v3136
      %v3357 = vpack.c.b16 %v3141, %v3137
      %v3358 = vpack.c.b16 %v3142, %v3138
      %v3359 = vpack.c.b16 %v3143, %v3139
      %v3360 = vpack.c.b16 %v3148, %v3144
      %v3361 = vpack.c.b16 %v3149, %v3145
      %v3362 = vpack.c.b16 %v3150, %v3146
      %v3363 = vpack.c.b16 %v3151, %v3147
      %v3364 = vpack.c.b16 %v3156, %v3152
      %v3365 = vpack.c.b16 %v3157, %v3153
      %v3366 = vpack.c.b16 %v3158, %v3154
      %v3367 = vpack.c.b16 %v3159, %v3155
      %v3368 = vpack.c.b16 %v3164, %v3160
      %v3369 = vpack.c.b16 %v3165, %v3161
      %v3370 = vpack.c.b16 %v3166, %v3162
      %v3371 = vpack.c.b16 %v3167, %v3163
      %v3372 = vpack.c.b16 %v3172, %v3168
      %v3373 = vpack.c.b16 %v3173, %v3169
      %v3374 = vpack.c.b16 %v3174, %v3170
      %v3375 = vpack.c.b16 %v3175, %v3171
      %v3376 = vpack.c.b16 %v3180, %v3176
      %v3377 = vpack.c.b16 %v3181, %v3177
      %v3378 = vpack.c.b16 %v3182, %v3178
      %v3379 = vpack.c.b16 %v3183, %v3179
      %v3380 = vpack.c.b16 %v3188, %v3184
      %v3381 = vpack.c.b16 %v3189, %v3185
      %v3382 = vpack.c.b16 %v3190, %v3186
      %v3383 = vpack.c.b16 %v3191, %v3187
      %v3384 = vpack.c.b16 %v3196, %v3192
      %v3385 = vpack.c.b16 %v3197, %v3193
      %v3386 = vpack.c.b16 %v3198, %v3194
      %v3387 = vpack.c.b16 %v3199, %v3195
      %v3388 = vpack.c.b16 %v3204, %v3200
      %v3389 = vpack.c.b16 %v3205, %v3201
      %v3390 = vpack.c.b16 %v3206, %v3202
      %v3391 = vpack.c.b16 %v3207, %v3203
      %v3392 = vpack.c.b16 %v3212, %v3208
      %v3393 = vpack.c.b16 %v3213, %v3209
      %v3394 = vpack.c.b16 %v3214, %v3210
      %v3395 = vpack.c.b16 %v3215, %v3211
      %v3396 = vpack.c.b16 %v3220, %v3216
      %v3397 = vpack.c.b16 %v3221, %v3217
      %v3398 = vpack.c.b16 %v3222, %v3218
      %v3399 = vpack.c.b16 %v3223, %v3219
      %v3400 = vpack.c.b16 %v3228, %v3224
      %v3401 = vpack.c.b16 %v3229, %v3225
      %v3402 = vpack.c.b16 %v3230, %v3226
      %v3403 = vpack.c.b16 %v3231, %v3227
      %v3404 = vpack.c.b16 %v3236, %v3232
      %v3405 = vpack.c.b16 %v3237, %v3233
      %v3406 = vpack.c.b16 %v3238, %v3234
      %v3407 = vpack.c.b16 %v3239, %v3235
      %v3408 = vpack.c.b16 %v3244, %v3240
      %v3409 = vpack.c.b16 %v3245, %v3241
      %v3410 = vpack.c.b16 %v3246, %v3242
      %v3411 = vpack.c.b16 %v3247, %v3243
      %v3412 = vpack.c.b16 %v3252, %v3248
      %v3413 = vpack.c.b16 %v3253, %v3249
      %v3414 = vpack.c.b16 %v3254, %v3250
      %v3415 = vpack.c.b16 %v3255, %v3251
      %v3416 = vpack.c.b16 %v3260, %v3256
      %v3417 = vpack.c.b16 %v3261, %v3257
      %v3418 = vpack.c.b16 %v3262, %v3258
      %v3419 = vpack.c.b16 %v3263, %v3259
      %v3420 = vpack.c.b16 %v3268, %v3264
      %v3421 = vpack.c.b16 %v3269, %v3265
      %v3422 = vpack.c.b16 %v3270, %v3266
      %v3423 = vpack.c.b16 %v3271, %v3267
      %v3424 = vpack.c.b16 %v3276, %v3272
      %v3425 = vpack.c.b16 %v3277, %v3273
      %v3426 = vpack.c.b16 %v3278, %v3274
      %v3427 = vpack.c.b16 %v3279, %v3275
      %v3428 = vpack.c.b16 %v3284, %v3280
      %v3429 = vpack.c.b16 %v3285, %v3281
      %v3430 = vpack.c.b16 %v3286, %v3282
      %v3431 = vpack.c.b16 %v3287, %v3283
      %v3432 = vpack.c.b16 %v3292, %v3288
      %v3433 = vpack.c.b16 %v3293, %v3289
      %v3434 = vpack.c.b16 %v3294, %v3290
      %v3435 = vpack.c.b16 %v3295, %v3291
      %v3436 = vpack.c.b16 %v3300, %v3296
      %v3437 = vpack.c.b16 %v3301, %v3297
      %v3438 = vpack.c.b16 %v3302, %v3298
      %v3439 = vpack.c.b16 %v3303, %v3299
      %v3440 = vpack.c.b16 %v3308, %v3304
      %v3441 = vpack.c.b16 %v3309, %v3305
      %v3442 = vpack.c.b16 %v3310, %v3306
      %v3443 = vpack.c.b16 %v3311, %v3307
      %v3444 = vpack.c.b16 %v3316, %v3312
      %v3445 = vpack.c.b16 %v3317, %v3313
      %v3446 = vpack.c.b16 %v3318, %v3314
      %v3447 = vpack.c.b16 %v3319, %v3315
      %3576 = vmatprep.subr.bf16.mxu0 %v3321
      %3577 = vmatpush1.bf16.msra.mxu0 %v3320
      %3578 = vmatprep.subr.bf16.mxu0 %v3325
      %3579 = vmatpush1.bf16.msra.mxu0 %v3324
      %3580 = vmatprep.subr.bf16.mxu0 %v3329
      %3581 = vmatpush1.bf16.msra.mxu0 %v3328
      %3582 = vmatprep.subr.bf16.mxu0 %v3333
      %3583 = vmatpush1.bf16.msra.mxu0 %v3332
      %3584 = vmatprep.subr.bf16.mxu0 %v3337
      %3585 = vmatpush1.bf16.msra.mxu0 %v3336
      %3586 = vmatprep.subr.bf16.mxu0 %v3341
      %3587 = vmatpush1.bf16.msra.mxu0 %v3340
      %3588 = vmatprep.subr.bf16.mxu0 %v3345
      %3589 = vmatpush1.bf16.msra.mxu0 %v3344
      %3590 = vmatprep.subr.bf16.mxu0 %v3349
      %3591 = vmatpush1.bf16.msra.mxu0 %v3348
      %3592 = vmatprep.subr.bf16.mxu0 %v3353
      %3593 = vmatpush1.bf16.msra.mxu0 %v3352
      %3594 = vmatprep.subr.bf16.mxu0 %v3357
      %3595 = vmatpush1.bf16.msra.mxu0 %v3356
      %3596 = vmatprep.subr.bf16.mxu0 %v3361
      %3597 = vmatpush1.bf16.msra.mxu0 %v3360
      %3598 = vmatprep.subr.bf16.mxu0 %v3365
      %3599 = vmatpush1.bf16.msra.mxu0 %v3364
      %3600 = vmatprep.subr.bf16.mxu0 %v3369
      %3601 = vmatpush1.bf16.msra.mxu0 %v3368
      %3602 = vmatprep.subr.bf16.mxu0 %v3373
      %3603 = vmatpush1.bf16.msra.mxu0 %v3372
      %3604 = vmatprep.subr.bf16.mxu0 %v3377
      %3605 = vmatpush1.bf16.msra.mxu0 %v3376
      %3606 = vmatprep.subr.bf16.mxu0 %v3381
      %3607 = vmatpush1.bf16.msra.mxu0 %v3380
      %3608 = vmatprep.mubr.bf16.mxu0 %v2755
      %3609 = vmatmul.mubr.bf16.gmra.mrb[0].mxu0 %v2754
      %v3610 = vpop.f32.mrb[0].mxu0
      %v3611 = vadd.f32 %v2919, %v3610
      %v3612 = vpop.f32.mrb[0].mxu0
      %v3613 = vadd.f32 %v2923, %v3612
      %v3614 = vpop.f32.mrb[0].mxu0
      %v3615 = vadd.f32 %v2919, %v3614
      %v3616 = vpop.f32.mrb[0].mxu0
      %v3617 = vadd.f32 %v2923, %v3616
      %3618 = vmatprep.mubr.bf16.mxu0 %v2759
      %3619 = vmatmul.mubr.bf16.gmra.mrb[0].mxu0 %v2758
      %v3620 = vpop.f32.mrb[0].mxu0
      %v3621 = vadd.f32 %v2919, %v3620
      %v3622 = vpop.f32.mrb[0].mxu0
      %v3623 = vadd.f32 %v2923, %v3622
      %v3624 = vpop.f32.mrb[0].mxu0
      %v3625 = vadd.f32 %v2919, %v3624
      %v3626 = vpop.f32.mrb[0].mxu0
      %v3627 = vadd.f32 %v2923, %v3626
      %3628 = vmatprep.mubr.bf16.mxu0 %v2763
      %3629 = vmatmul.mubr.bf16.gmra.mrb[0].mxu0 %v2762
      %v3630 = vpop.f32.mrb[0].mxu0
      %v3631 = vadd.f32 %v2919, %v3630
      %v3632 = vpop.f32.mrb[0].mxu0
      %v3633 = vadd.f32 %v2923, %v3632
      %v3634 = vpop.f32.mrb[0].mxu0
      %v3635 = vadd.f32 %v2919, %v3634
      %v3636 = vpop.f32.mrb[0].mxu0
      %v3637 = vadd.f32 %v2923, %v3636
      %3638 = vmatprep.mubr.bf16.mxu0 %v2767
      %3639 = vmatmul.mubr.bf16.gmra.mrb[0].mxu0 %v2766
      %v3640 = vpop.f32.mrb[0].mxu0
      %v3641 = vadd.f32 %v2919, %v3640
      %v3642 = vpop.f32.mrb[0].mxu0
      %v3643 = vadd.f32 %v2923, %v3642
      %v3644 = vpop.f32.mrb[0].mxu0
      %v3645 = vadd.f32 %v2919, %v3644
      %v3646 = vpop.f32.mrb[0].mxu0
      %v3647 = vadd.f32 %v2923, %v3646
      %3648 = vmatprep.mubr.bf16.mxu0 %v2771
      %3649 = vmatmul.mubr.bf16.gmra.mrb[0].mxu0 %v2770
      %v3650 = vpop.f32.mrb[0].mxu0
      %v3651 = vadd.f32 %v2919, %v3650
      %v3652 = vpop.f32.mrb[0].mxu0
      %v3653 = vadd.f32 %v2923, %v3652
      %v3654 = vpop.f32.mrb[0].mxu0
      %v3655 = vadd.f32 %v2919, %v3654
      %v3656 = vpop.f32.mrb[0].mxu0
      %v3657 = vadd.f32 %v2923, %v3656
      %3658 = vmatprep.mubr.bf16.mxu0 %v2775
      %3659 = vmatmul.mubr.bf16.gmra.mrb[0].mxu0 %v2774
      %v3660 = vpop.f32.mrb[0].mxu0
      %v3661 = vadd.f32 %v2919, %v3660
      %v3662 = vpop.f32.mrb[0].mxu0
      %v3663 = vadd.f32 %v2923, %v3662
      %v3664 = vpop.f32.mrb[0].mxu0
      %v3665 = vadd.f32 %v2919, %v3664
      %v3666 = vpop.f32.mrb[0].mxu0
      %v3667 = vadd.f32 %v2923, %v3666
      %3668 = vmatprep.mubr.bf16.mxu0 %v2779
      %3669 = vmatmul.mubr.bf16.gmra.mrb[0].mxu0 %v2778
      %v3670 = vpop.f32.mrb[0].mxu0
      %v3671 = vadd.f32 %v2919, %v3670
      %v3672 = vpop.f32.mrb[0].mxu0
      %v3673 = vadd.f32 %v2923, %v3672
      %v3674 = vpop.f32.mrb[0].mxu0
      %v3675 = vadd.f32 %v2919, %v3674
      %v3676 = vpop.f32.mrb[0].mxu0
      %v3677 = vadd.f32 %v2923, %v3676
      %3678 = vmatprep.mubr.bf16.mxu0 %v2783
      %3679 = vmatmul.mubr.bf16.gmra.mrb[0].mxu0 %v2782
      %v3680 = vpop.f32.mrb[0].mxu0
      %v3681 = vadd.f32 %v2919, %v3680
      %v3682 = vpop.f32.mrb[0].mxu0
      %v3683 = vadd.f32 %v2923, %v3682
      %v3684 = vpop.f32.mrb[0].mxu0
      %v3685 = vadd.f32 %v2919, %v3684
      %v3686 = vpop.f32.mrb[0].mxu0
      %v3687 = vadd.f32 %v2923, %v3686
      %3688 = vdwg.mxu0
      %3689 = vmatprep.subr.bf16.mxu0 %v3385
      %3690 = vmatpush1.bf16.msra.mxu0 %v3384
      %3691 = vmatprep.subr.bf16.mxu0 %v3389
      %3692 = vmatpush1.bf16.msra.mxu0 %v3388
      %3693 = vmatprep.subr.bf16.mxu0 %v3393
      %3694 = vmatpush1.bf16.msra.mxu0 %v3392
      %3695 = vmatprep.subr.bf16.mxu0 %v3397
      %3696 = vmatpush1.bf16.msra.mxu0 %v3396
      %3697 = vmatprep.subr.bf16.mxu0 %v3401
      %3698 = vmatpush1.bf16.msra.mxu0 %v3400
      %3699 = vmatprep.subr.bf16.mxu0 %v3405
      %3700 = vmatpush1.bf16.msra.mxu0 %v3404
      %3701 = vmatprep.subr.bf16.mxu0 %v3409
      %3702 = vmatpush1.bf16.msra.mxu0 %v3408
      %3703 = vmatprep.subr.bf16.mxu0 %v3413
      %3704 = vmatpush1.bf16.msra.mxu0 %v3412
      %3705 = vmatprep.subr.bf16.mxu0 %v3417
      %3706 = vmatpush1.bf16.msra.mxu0 %v3416
      %3707 = vmatprep.subr.bf16.mxu0 %v3421
      %3708 = vmatpush1.bf16.msra.mxu0 %v3420
      %3709 = vmatprep.subr.bf16.mxu0 %v3425
      %3710 = vmatpush1.bf16.msra.mxu0 %v3424
      %3711 = vmatprep.subr.bf16.mxu0 %v3429
      %3712 = vmatpush1.bf16.msra.mxu0 %v3428
      %3713 = vmatprep.subr.bf16.mxu0 %v3433
      %3714 = vmatpush1.bf16.msra.mxu0 %v3432
      %3715 = vmatprep.subr.bf16.mxu0 %v3437
      %3716 = vmatpush1.bf16.msra.mxu0 %v3436
      %3717 = vmatprep.subr.bf16.mxu0 %v3441
      %3718 = vmatpush1.bf16.msra.mxu0 %v3440
      %3719 = vmatprep.subr.bf16.mxu0 %v3445
      %3720 = vmatpush1.bf16.msra.mxu0 %v3444
      %3721 = vmatprep.mubr.bf16.mxu0 %v2757
      %3722 = vmatmul.mubr.bf16.gmra.mrb[0].mxu0 %v2756
      %v3723 = vpop.f32.mrb[0].mxu0
      %v3724 = vadd.f32 %v3611, %v3723
      %v3725 = vpop.f32.mrb[0].mxu0
      %v3726 = vadd.f32 %v3613, %v3725
      %v3727 = vpop.f32.mrb[0].mxu0
      %v3728 = vadd.f32 %v3615, %v3727
      %v3729 = vpop.f32.mrb[0].mxu0
      %v3730 = vadd.f32 %v3617, %v3729
      %3731 = vmatprep.mubr.bf16.mxu0 %v2761
      %3732 = vmatmul.mubr.bf16.gmra.mrb[0].mxu0 %v2760
      %v3733 = vpop.f32.mrb[0].mxu0
      %v3734 = vadd.f32 %v3621, %v3733
      %v3735 = vpop.f32.mrb[0].mxu0
      %v3736 = vadd.f32 %v3623, %v3735
      %v3737 = vpop.f32.mrb[0].mxu0
      %v3738 = vadd.f32 %v3625, %v3737
      %v3739 = vpop.f32.mrb[0].mxu0
      %v3740 = vadd.f32 %v3627, %v3739
      %3741 = vmatprep.mubr.bf16.mxu0 %v2765
      %3742 = vmatmul.mubr.bf16.gmra.mrb[0].mxu0 %v2764
      %v3743 = vpop.f32.mrb[0].mxu0
      %v3744 = vadd.f32 %v3631, %v3743
      %v3745 = vpop.f32.mrb[0].mxu0
      %v3746 = vadd.f32 %v3633, %v3745
      %v3747 = vpop.f32.mrb[0].mxu0
      %v3748 = vadd.f32 %v3635, %v3747
      %v3749 = vpop.f32.mrb[0].mxu0
      %v3750 = vadd.f32 %v3637, %v3749
      %3751 = vmatprep.mubr.bf16.mxu0 %v2769
      %3752 = vmatmul.mubr.bf16.gmra.mrb[0].mxu0 %v2768
      %v3753 = vpop.f32.mrb[0].mxu0
      %v3754 = vadd.f32 %v3641, %v3753
      %v3755 = vpop.f32.mrb[0].mxu0
      %v3756 = vadd.f32 %v3643, %v3755
      %v3757 = vpop.f32.mrb[0].mxu0
      %v3758 = vadd.f32 %v3645, %v3757
      %v3759 = vpop.f32.mrb[0].mxu0
      %v3760 = vadd.f32 %v3647, %v3759
      %3761 = vmatprep.mubr.bf16.mxu0 %v2773
      %3762 = vmatmul.mubr.bf16.gmra.mrb[0].mxu0 %v2772
      %v3763 = vpop.f32.mrb[0].mxu0
      %v3764 = vadd.f32 %v3651, %v3763
      %v3765 = vpop.f32.mrb[0].mxu0
      %v3766 = vadd.f32 %v3653, %v3765
      %v3767 = vpop.f32.mrb[0].mxu0
      %v3768 = vadd.f32 %v3655, %v3767
      %v3769 = vpop.f32.mrb[0].mxu0
      %v3770 = vadd.f32 %v3657, %v3769
      %3771 = vmatprep.mubr.bf16.mxu0 %v2777
      %3772 = vmatmul.mubr.bf16.gmra.mrb[0].mxu0 %v2776
      %v3773 = vpop.f32.mrb[0].mxu0
      %v3774 = vadd.f32 %v3661, %v3773
      %v3775 = vpop.f32.mrb[0].mxu0
      %v3776 = vadd.f32 %v3663, %v3775
      %v3777 = vpop.f32.mrb[0].mxu0
      %v3778 = vadd.f32 %v3665, %v3777
      %v3779 = vpop.f32.mrb[0].mxu0
      %v3780 = vadd.f32 %v3667, %v3779
      %3781 = vmatprep.mubr.bf16.mxu0 %v2781
      %3782 = vmatmul.mubr.bf16.gmra.mrb[0].mxu0 %v2780
      %v3783 = vpop.f32.mrb[0].mxu0
      %v3784 = vadd.f32 %v3671, %v3783
      %v3785 = vpop.f32.mrb[0].mxu0
      %v3786 = vadd.f32 %v3673, %v3785
      %v3787 = vpop.f32.mrb[0].mxu0
      %v3788 = vadd.f32 %v3675, %v3787
      %v3789 = vpop.f32.mrb[0].mxu0
      %v3790 = vadd.f32 %v3677, %v3789
      %3791 = vmatprep.mubr.bf16.mxu0 %v2785
      %3792 = vmatmul.mubr.bf16.gmra.mrb[0].mxu0 %v2784
      %v3793 = vpop.f32.mrb[0].mxu0
      %v3794 = vadd.f32 %v3681, %v3793
      %v3795 = vpop.f32.mrb[0].mxu0
      %v3796 = vadd.f32 %v3683, %v3795
      %v3797 = vpop.f32.mrb[0].mxu0
      %v3798 = vadd.f32 %v3685, %v3797
      %v3799 = vpop.f32.mrb[0].mxu0
      %v3800 = vadd.f32 %v3687, %v3799
      %3801 = vdwg.mxu0
      %3802 = vmatprep.subr.bf16.mxu0 %v3323
      %3803 = vmatpush1.bf16.msra.mxu0 %v3322
      %3804 = vmatprep.subr.bf16.mxu0 %v3327
      %3805 = vmatpush1.bf16.msra.mxu0 %v3326
      %3806 = vmatprep.subr.bf16.mxu0 %v3331
      %3807 = vmatpush1.bf16.msra.mxu0 %v3330
      %3808 = vmatprep.subr.bf16.mxu0 %v3335
      %3809 = vmatpush1.bf16.msra.mxu0 %v3334
      %3810 = vmatprep.subr.bf16.mxu0 %v3339
      %3811 = vmatpush1.bf16.msra.mxu0 %v3338
      %3812 = vmatprep.subr.bf16.mxu0 %v3343
      %3813 = vmatpush1.bf16.msra.mxu0 %v3342
      %3814 = vmatprep.subr.bf16.mxu0 %v3347
      %3815 = vmatpush1.bf16.msra.mxu0 %v3346
      %3816 = vmatprep.subr.bf16.mxu0 %v3351
      %3817 = vmatpush1.bf16.msra.mxu0 %v3350
      %3818 = vmatprep.subr.bf16.mxu0 %v3355
      %3819 = vmatpush1.bf16.msra.mxu0 %v3354
      %3820 = vmatprep.subr.bf16.mxu0 %v3359
      %3821 = vmatpush1.bf16.msra.mxu0 %v3358
      %3822 = vmatprep.subr.bf16.mxu0 %v3363
      %3823 = vmatpush1.bf16.msra.mxu0 %v3362
      %3824 = vmatprep.subr.bf16.mxu0 %v3367
      %3825 = vmatpush1.bf16.msra.mxu0 %v3366
      %3826 = vmatprep.subr.bf16.mxu0 %v3371
      %3827 = vmatpush1.bf16.msra.mxu0 %v3370
      %3828 = vmatprep.subr.bf16.mxu0 %v3375
      %3829 = vmatpush1.bf16.msra.mxu0 %v3374
      %3830 = vmatprep.subr.bf16.mxu0 %v3379
      %3831 = vmatpush1.bf16.msra.mxu0 %v3378
      %3832 = vmatprep.subr.bf16.mxu0 %v3383
      %3833 = vmatpush1.bf16.msra.mxu0 %v3382
      %3834 = vmatprep.mubr.bf16.mxu0 %v2755
      %3835 = vmatmul.mubr.bf16.gmra.mrb[0].mxu0 %v2754
      %v3836 = vpop.f32.mrb[0].mxu0
      %v3837 = vadd.f32 %v2927, %v3836
      %v3838 = vpop.f32.mrb[0].mxu0
      %v3839 = vadd.f32 %v2931, %v3838
      %v3840 = vpop.f32.mrb[0].mxu0
      %v3841 = vadd.f32 %v2927, %v3840
      %v3842 = vpop.f32.mrb[0].mxu0
      %v3843 = vadd.f32 %v2931, %v3842
      %3844 = vmatprep.mubr.bf16.mxu0 %v2759
      %3845 = vmatmul.mubr.bf16.gmra.mrb[0].mxu0 %v2758
      %v3846 = vpop.f32.mrb[0].mxu0
      %v3847 = vadd.f32 %v2927, %v3846
      %v3848 = vpop.f32.mrb[0].mxu0
      %v3849 = vadd.f32 %v2931, %v3848
      %v3850 = vpop.f32.mrb[0].mxu0
      %v3851 = vadd.f32 %v2927, %v3850
      %v3852 = vpop.f32.mrb[0].mxu0
      %v3853 = vadd.f32 %v2931, %v3852
      %3854 = vmatprep.mubr.bf16.mxu0 %v2763
      %3855 = vmatmul.mubr.bf16.gmra.mrb[0].mxu0 %v2762
      %v3856 = vpop.f32.mrb[0].mxu0
      %v3857 = vadd.f32 %v2927, %v3856
      %v3858 = vpop.f32.mrb[0].mxu0
      %v3859 = vadd.f32 %v2931, %v3858
      %v3860 = vpop.f32.mrb[0].mxu0
      %v3861 = vadd.f32 %v2927, %v3860
      %v3862 = vpop.f32.mrb[0].mxu0
      %v3863 = vadd.f32 %v2931, %v3862
      %3864 = vmatprep.mubr.bf16.mxu0 %v2767
      %3865 = vmatmul.mubr.bf16.gmra.mrb[0].mxu0 %v2766
      %v3866 = vpop.f32.mrb[0].mxu0
      %v3867 = vadd.f32 %v2927, %v3866
      %v3868 = vpop.f32.mrb[0].mxu0
      %v3869 = vadd.f32 %v2931, %v3868
      %v3870 = vpop.f32.mrb[0].mxu0
      %v3871 = vadd.f32 %v2927, %v3870
      %v3872 = vpop.f32.mrb[0].mxu0
      %v3873 = vadd.f32 %v2931, %v3872
      %3874 = vmatprep.mubr.bf16.mxu0 %v2771
      %3875 = vmatmul.mubr.bf16.gmra.mrb[0].mxu0 %v2770
      %v3876 = vpop.f32.mrb[0].mxu0
      %v3877 = vadd.f32 %v2927, %v3876
      %v3878 = vpop.f32.mrb[0].mxu0
      %v3879 = vadd.f32 %v2931, %v3878
      %v3880 = vpop.f32.mrb[0].mxu0
      %v3881 = vadd.f32 %v2927, %v3880
      %v3882 = vpop.f32.mrb[0].mxu0
      %v3883 = vadd.f32 %v2931, %v3882
      %3884 = vmatprep.mubr.bf16.mxu0 %v2775
      %3885 = vmatmul.mubr.bf16.gmra.mrb[0].mxu0 %v2774
      %v3886 = vpop.f32.mrb[0].mxu0
      %v3887 = vadd.f32 %v2927, %v3886
      %v3888 = vpop.f32.mrb[0].mxu0
      %v3889 = vadd.f32 %v2931, %v3888
      %v3890 = vpop.f32.mrb[0].mxu0
      %v3891 = vadd.f32 %v2927, %v3890
      %v3892 = vpop.f32.mrb[0].mxu0
      %v3893 = vadd.f32 %v2931, %v3892
      %3894 = vmatprep.mubr.bf16.mxu0 %v2779
      %3895 = vmatmul.mubr.bf16.gmra.mrb[0].mxu0 %v2778
      %v3896 = vpop.f32.mrb[0].mxu0
      %v3897 = vadd.f32 %v2927, %v3896
      %v3898 = vpop.f32.mrb[0].mxu0
      %v3899 = vadd.f32 %v2931, %v3898
      %v3900 = vpop.f32.mrb[0].mxu0
      %v3901 = vadd.f32 %v2927, %v3900
      %v3902 = vpop.f32.mrb[0].mxu0
      %v3903 = vadd.f32 %v2931, %v3902
      %3904 = vmatprep.mubr.bf16.mxu0 %v2783
      %3905 = vmatmul.mubr.bf16.gmra.mrb[0].mxu0 %v2782
      %v3906 = vpop.f32.mrb[0].mxu0
      %v3907 = vadd.f32 %v2927, %v3906
      %v3908 = vpop.f32.mrb[0].mxu0
      %v3909 = vadd.f32 %v2931, %v3908
      %v3910 = vpop.f32.mrb[0].mxu0
      %v3911 = vadd.f32 %v2927, %v3910
      %v3912 = vpop.f32.mrb[0].mxu0
      %v3913 = vadd.f32 %v2931, %v3912
      %3914 = vdwg.mxu0
      %3915 = vmatprep.subr.bf16.mxu0 %v3387
      %3916 = vmatpush1.bf16.msra.mxu0 %v3386
      %3917 = vmatprep.subr.bf16.mxu0 %v3391
      %3918 = vmatpush1.bf16.msra.mxu0 %v3390
      %3919 = vmatprep.subr.bf16.mxu0 %v3395
      %3920 = vmatpush1.bf16.msra.mxu0 %v3394
      %3921 = vmatprep.subr.bf16.mxu0 %v3399
      %3922 = vmatpush1.bf16.msra.mxu0 %v3398
      %3923 = vmatprep.subr.bf16.mxu0 %v3403
      %3924 = vmatpush1.bf16.msra.mxu0 %v3402
      %3925 = vmatprep.subr.bf16.mxu0 %v3407
      %3926 = vmatpush1.bf16.msra.mxu0 %v3406
      %3927 = vmatprep.subr.bf16.mxu0 %v3411
      %3928 = vmatpush1.bf16.msra.mxu0 %v3410
      %3929 = vmatprep.subr.bf16.mxu0 %v3415
      %3930 = vmatpush1.bf16.msra.mxu0 %v3414
      %3931 = vmatprep.subr.bf16.mxu0 %v3419
      %3932 = vmatpush1.bf16.msra.mxu0 %v3418
      %3933 = vmatprep.subr.bf16.mxu0 %v3423
      %3934 = vmatpush1.bf16.msra.mxu0 %v3422
      %3935 = vmatprep.subr.bf16.mxu0 %v3427
      %3936 = vmatpush1.bf16.msra.mxu0 %v3426
      %3937 = vmatprep.subr.bf16.mxu0 %v3431
      %3938 = vmatpush1.bf16.msra.mxu0 %v3430
      %3939 = vmatprep.subr.bf16.mxu0 %v3435
      %3940 = vmatpush1.bf16.msra.mxu0 %v3434
      %3941 = vmatprep.subr.bf16.mxu0 %v3439
      %3942 = vmatpush1.bf16.msra.mxu0 %v3438
      %3943 = vmatprep.subr.bf16.mxu0 %v3443
      %3944 = vmatpush1.bf16.msra.mxu0 %v3442
      %3945 = vmatprep.subr.bf16.mxu0 %v3447
      %3946 = vmatpush1.bf16.msra.mxu0 %v3446
      %3947 = vmatprep.mubr.bf16.mxu0 %v2757
      %3948 = vmatmul.mubr.bf16.gmra.mrb[0].mxu0 %v2756
      %v3949 = vpop.f32.mrb[0].mxu0
      %v3950 = vadd.f32 %v3837, %v3949
      %v3951 = vpop.f32.mrb[0].mxu0
      %v3952 = vadd.f32 %v3839, %v3951
      %v3953 = vpop.f32.mrb[0].mxu0
      %v3954 = vadd.f32 %v3841, %v3953
      %v3955 = vpop.f32.mrb[0].mxu0
      %v3956 = vadd.f32 %v3843, %v3955
      %3957 = vmatprep.mubr.bf16.mxu0 %v2761
      %3958 = vmatmul.mubr.bf16.gmra.mrb[0].mxu0 %v2760
      %v3959 = vpop.f32.mrb[0].mxu0
      %v3960 = vadd.f32 %v3847, %v3959
      %v3961 = vpop.f32.mrb[0].mxu0
      %v3962 = vadd.f32 %v3849, %v3961
      %v3963 = vpop.f32.mrb[0].mxu0
      %v3964 = vadd.f32 %v3851, %v3963
      %v3965 = vpop.f32.mrb[0].mxu0
      %v3966 = vadd.f32 %v3853, %v3965
      %3967 = vmatprep.mubr.bf16.mxu0 %v2765
      %3968 = vmatmul.mubr.bf16.gmra.mrb[0].mxu0 %v2764
      %v3969 = vpop.f32.mrb[0].mxu0
      %v3970 = vadd.f32 %v3857, %v3969
      %v3971 = vpop.f32.mrb[0].mxu0
      %v3972 = vadd.f32 %v3859, %v3971
      %v3973 = vpop.f32.mrb[0].mxu0
      %v3974 = vadd.f32 %v3861, %v3973
      %v3975 = vpop.f32.mrb[0].mxu0
      %v3976 = vadd.f32 %v3863, %v3975
      %3977 = vmatprep.mubr.bf16.mxu0 %v2769
      %3978 = vmatmul.mubr.bf16.gmra.mrb[0].mxu0 %v2768
      %v3979 = vpop.f32.mrb[0].mxu0
      %v3980 = vadd.f32 %v3867, %v3979
      %v3981 = vpop.f32.mrb[0].mxu0
      %v3982 = vadd.f32 %v3869, %v3981
      %v3983 = vpop.f32.mrb[0].mxu0
      %v3984 = vadd.f32 %v3871, %v3983
      %v3985 = vpop.f32.mrb[0].mxu0
      %v3986 = vadd.f32 %v3873, %v3985
      %3987 = vmatprep.mubr.bf16.mxu0 %v2773
      %3988 = vmatmul.mubr.bf16.gmra.mrb[0].mxu0 %v2772
      %v3989 = vpop.f32.mrb[0].mxu0
      %v3990 = vadd.f32 %v3877, %v3989
      %v3991 = vpop.f32.mrb[0].mxu0
      %v3992 = vadd.f32 %v3879, %v3991
      %v3993 = vpop.f32.mrb[0].mxu0
      %v3994 = vadd.f32 %v3881, %v3993
      %v3995 = vpop.f32.mrb[0].mxu0
      %v3996 = vadd.f32 %v3883, %v3995
      %3997 = vmatprep.mubr.bf16.mxu0 %v2777
      %3998 = vmatmul.mubr.bf16.gmra.mrb[0].mxu0 %v2776
      %v3999 = vpop.f32.mrb[0].mxu0
      %v4000 = vadd.f32 %v3887, %v3999
      %v4001 = vpop.f32.mrb[0].mxu0
      %v4002 = vadd.f32 %v3889, %v4001
      %v4003 = vpop.f32.mrb[0].mxu0
      %v4004 = vadd.f32 %v3891, %v4003
      %v4005 = vpop.f32.mrb[0].mxu0
      %v4006 = vadd.f32 %v3893, %v4005
      %4007 = vmatprep.mubr.bf16.mxu0 %v2781
      %4008 = vmatmul.mubr.bf16.gmra.mrb[0].mxu0 %v2780
      %v4009 = vpop.f32.mrb[0].mxu0
      %v4010 = vadd.f32 %v3897, %v4009
      %v4011 = vpop.f32.mrb[0].mxu0
      %v4012 = vadd.f32 %v3899, %v4011
      %v4013 = vpop.f32.mrb[0].mxu0
      %v4014 = vadd.f32 %v3901, %v4013
      %v4015 = vpop.f32.mrb[0].mxu0
      %v4016 = vadd.f32 %v3903, %v4015
      %4017 = vmatprep.mubr.bf16.mxu0 %v2785
      %4018 = vmatmul.mubr.bf16.gmra.mrb[0].mxu0 %v2784
      %v4019 = vpop.f32.mrb[0].mxu0
      %v4020 = vadd.f32 %v3907, %v4019
      %v4021 = vpop.f32.mrb[0].mxu0
      %v4022 = vadd.f32 %v3909, %v4021
      %v4023 = vpop.f32.mrb[0].mxu0
      %v4024 = vadd.f32 %v3911, %v4023
      %v4025 = vpop.f32.mrb[0].mxu0
      %v4026 = vadd.f32 %v3913, %v4025
      %4027 = vdwg.mxu0
      %v4028 = vmul.f32 %v3724, 0.2
      %v4029 = vmul.f32 %v3726, 0.2
      %v4030 = vmul.f32 %v3950, 0.2
      %v4031 = vmul.f32 %v3952, 0.2
      %v4032 = vmul.f32 %v3728, 0.2
      %v4033 = vmul.f32 %v3730, 0.2
      %v4034 = vmul.f32 %v3954, 0.2
      %v4035 = vmul.f32 %v3956, 0.2
      %v4036 = vmul.f32 %v3734, 0.2
      %v4037 = vmul.f32 %v3736, 0.2
      %v4038 = vmul.f32 %v3960, 0.2
      %v4039 = vmul.f32 %v3962, 0.2
      %v4040 = vmul.f32 %v3738, 0.2
      %v4041 = vmul.f32 %v3740, 0.2
      %v4042 = vmul.f32 %v3964, 0.2
      %v4043 = vmul.f32 %v3966, 0.2
      %v4044 = vmul.f32 %v3744, 0.2
      %v4045 = vmul.f32 %v3746, 0.2
      %v4046 = vmul.f32 %v3970, 0.2
      %v4047 = vmul.f32 %v3972, 0.2
      %v4048 = vmul.f32 %v3748, 0.2
      %v4049 = vmul.f32 %v3750, 0.2
      %v4050 = vmul.f32 %v3974, 0.2
      %v4051 = vmul.f32 %v3976, 0.2
      %v4052 = vmul.f32 %v3754, 0.2
      %v4053 = vmul.f32 %v3756, 0.2
      %v4054 = vmul.f32 %v3980, 0.2
      %v4055 = vmul.f32 %v3982, 0.2
      %v4056 = vmul.f32 %v3758, 0.2
      %v4057 = vmul.f32 %v3760, 0.2
      %v4058 = vmul.f32 %v3984, 0.2
      %v4059 = vmul.f32 %v3986, 0.2
      %v4060 = vmul.f32 %v3764, 0.2
      %v4061 = vmul.f32 %v3766, 0.2
      %v4062 = vmul.f32 %v3990, 0.2
      %v4063 = vmul.f32 %v3992, 0.2
      %v4064 = vmul.f32 %v3768, 0.2
      %v4065 = vmul.f32 %v3770, 0.2
      %v4066 = vmul.f32 %v3994, 0.2
      %v4067 = vmul.f32 %v3996, 0.2
      %v4068 = vmul.f32 %v3774, 0.2
      %v4069 = vmul.f32 %v3776, 0.2
      %v4070 = vmul.f32 %v4000, 0.2
      %v4071 = vmul.f32 %v4002, 0.2
      %v4072 = vmul.f32 %v3778, 0.2
      %v4073 = vmul.f32 %v3780, 0.2
      %v4074 = vmul.f32 %v4004, 0.2
      %v4075 = vmul.f32 %v4006, 0.2
      %v4076 = vmul.f32 %v3784, 0.2
      %v4077 = vmul.f32 %v3786, 0.2
      %v4078 = vmul.f32 %v4010, 0.2
      %v4079 = vmul.f32 %v4012, 0.2
      %v4080 = vmul.f32 %v3788, 0.2
      %v4081 = vmul.f32 %v3790, 0.2
      %v4082 = vmul.f32 %v4014, 0.2
      %v4083 = vmul.f32 %v4016, 0.2
      %v4084 = vmul.f32 %v3794, 0.2
      %v4085 = vmul.f32 %v3796, 0.2
      %v4086 = vmul.f32 %v4020, 0.2
      %v4087 = vmul.f32 %v4022, 0.2
      %v4088 = vmul.f32 %v3798, 0.2
      %v4089 = vmul.f32 %v3800, 0.2
      %v4090 = vmul.f32 %v4024, 0.2
      %v4091 = vmul.f32 %v4026, 0.2
      %v4092 = vmax.f32 %v3724, %v4028
      %v4093 = vmax.f32 %v3726, %v4029
      %v4094 = vmax.f32 %v3950, %v4030
      %v4095 = vmax.f32 %v3952, %v4031
      %v4096 = vmax.f32 %v3728, %v4032
      %v4097 = vmax.f32 %v3730, %v4033
      %v4098 = vmax.f32 %v3954, %v4034
      %v4099 = vmax.f32 %v3956, %v4035
      %v4100 = vmax.f32 %v3734, %v4036
      %v4101 = vmax.f32 %v3736, %v4037
      %v4102 = vmax.f32 %v3960, %v4038
      %v4103 = vmax.f32 %v3962, %v4039
      %v4104 = vmax.f32 %v3738, %v4040
      %v4105 = vmax.f32 %v3740, %v4041
      %v4106 = vmax.f32 %v3964, %v4042
      %v4107 = vmax.f32 %v3966, %v4043
      %v4108 = vmax.f32 %v3744, %v4044
      %v4109 = vmax.f32 %v3746, %v4045
      %v4110 = vmax.f32 %v3970, %v4046
      %v4111 = vmax.f32 %v3972, %v4047
      %v4112 = vmax.f32 %v3748, %v4048
      %v4113 = vmax.f32 %v3750, %v4049
      %v4114 = vmax.f32 %v3974, %v4050
      %v4115 = vmax.f32 %v3976, %v4051
      %v4116 = vmax.f32 %v3754, %v4052
      %v4117 = vmax.f32 %v3756, %v4053
      %v4118 = vmax.f32 %v3980, %v4054
      %v4119 = vmax.f32 %v3982, %v4055
      %v4120 = vmax.f32 %v3758, %v4056
      %v4121 = vmax.f32 %v3760, %v4057
      %v4122 = vmax.f32 %v3984, %v4058
      %v4123 = vmax.f32 %v3986, %v4059
      %v4124 = vmax.f32 %v3764, %v4060
      %v4125 = vmax.f32 %v3766, %v4061
      %v4126 = vmax.f32 %v3990, %v4062
      %v4127 = vmax.f32 %v3992, %v4063
      %v4128 = vmax.f32 %v3768, %v4064
      %v4129 = vmax.f32 %v3770, %v4065
      %v4130 = vmax.f32 %v3994, %v4066
      %v4131 = vmax.f32 %v3996, %v4067
      %v4132 = vmax.f32 %v3774, %v4068
      %v4133 = vmax.f32 %v3776, %v4069
      %v4134 = vmax.f32 %v4000, %v4070
      %v4135 = vmax.f32 %v4002, %v4071
      %v4136 = vmax.f32 %v3778, %v4072
      %v4137 = vmax.f32 %v3780, %v4073
      %v4138 = vmax.f32 %v4004, %v4074
      %v4139 = vmax.f32 %v4006, %v4075
      %v4140 = vmax.f32 %v3784, %v4076
      %v4141 = vmax.f32 %v3786, %v4077
      %v4142 = vmax.f32 %v4010, %v4078
      %v4143 = vmax.f32 %v4012, %v4079
      %v4144 = vmax.f32 %v3788, %v4080
      %v4145 = vmax.f32 %v3790, %v4081
      %v4146 = vmax.f32 %v4014, %v4082
      %v4147 = vmax.f32 %v4016, %v4083
      %v4148 = vmax.f32 %v3794, %v4084
      %v4149 = vmax.f32 %v3796, %v4085
      %v4150 = vmax.f32 %v4020, %v4086
      %v4151 = vmax.f32 %v4022, %v4087
      %v4152 = vmax.f32 %v3798, %v4088
      %v4153 = vmax.f32 %v3800, %v4089
      %v4154 = vmax.f32 %v4024, %v4090
      %v4155 = vmax.f32 %v4026, %v4091
      %v4156 = vpack.c.bf16 %v4096, %v4092
      %v4157 = vpack.c.bf16 %v4097, %v4093
      %v4158 = vpack.c.bf16 %v4098, %v4094
      %v4159 = vpack.c.bf16 %v4099, %v4095
      %v4160 = vpack.c.bf16 %v4104, %v4100
      %v4161 = vpack.c.bf16 %v4105, %v4101
      %v4162 = vpack.c.bf16 %v4106, %v4102
      %v4163 = vpack.c.bf16 %v4107, %v4103
      %v4164 = vpack.c.bf16 %v4112, %v4108
      %v4165 = vpack.c.bf16 %v4113, %v4109
      %v4166 = vpack.c.bf16 %v4114, %v4110
      %v4167 = vpack.c.bf16 %v4115, %v4111
      %v4168 = vpack.c.bf16 %v4120, %v4116
      %v4169 = vpack.c.bf16 %v4121, %v4117
      %v4170 = vpack.c.bf16 %v4122, %v4118
      %v4171 = vpack.c.bf16 %v4123, %v4119
      %v4172 = vpack.c.bf16 %v4128, %v4124
      %v4173 = vpack.c.bf16 %v4129, %v4125
      %v4174 = vpack.c.bf16 %v4130, %v4126
      %v4175 = vpack.c.bf16 %v4131, %v4127
      %v4176 = vpack.c.bf16 %v4136, %v4132
      %v4177 = vpack.c.bf16 %v4137, %v4133
      %v4178 = vpack.c.bf16 %v4138, %v4134
      %v4179 = vpack.c.bf16 %v4139, %v4135
      %v4180 = vpack.c.bf16 %v4144, %v4140
      %v4181 = vpack.c.bf16 %v4145, %v4141
      %v4182 = vpack.c.bf16 %v4146, %v4142
      %v4183 = vpack.c.bf16 %v4147, %v4143
      %v4184 = vpack.c.bf16 %v4152, %v4148
      %v4185 = vpack.c.bf16 %v4153, %v4149
      %v4186 = vpack.c.bf16 %v4154, %v4150
      %v4187 = vpack.c.bf16 %v4155, %v4151
      %v4188 = vld [vmem:[%s5] sm:$0xff]
      %v4189 = vld [vmem:[%s5 + $0x8] sm:$0xff]
      %v4190 = vld [vmem:[%s5 + $0x10] sm:$0xff]
      %v4191 = vld [vmem:[%s5 + $0x18] sm:$0xff]
      %v4192 = vld [vmem:[%s5 + $0x20] sm:$0xff]
      %v4193 = vld [vmem:[%s5 + $0x28] sm:$0xff]
      %v4194 = vld [vmem:[%s5 + $0x30] sm:$0xff]
      %v4195 = vld [vmem:[%s5 + $0x38] sm:$0xff]
      %v4196 = vld [vmem:[%s5 + $0x40] sm:$0xff]
      %v4197 = vld [vmem:[%s5 + $0x48] sm:$0xff]
      %v4198 = vld [vmem:[%s5 + $0x50] sm:$0xff]
      %v4199 = vld [vmem:[%s5 + $0x58] sm:$0xff]
      %v4200 = vld [vmem:[%s5 + $0x60] sm:$0xff]
      %v4201 = vld [vmem:[%s5 + $0x68] sm:$0xff]
      %v4202 = vld [vmem:[%s5 + $0x70] sm:$0xff]
      %v4203 = vld [vmem:[%s5 + $0x78] sm:$0xff]
      %v4204 = vld [vmem:[%s5 + $0x80] sm:$0xff]
      %v4205 = vld [vmem:[%s5 + $0x88] sm:$0xff]
      %v4206 = vld [vmem:[%s5 + $0x90] sm:$0xff]
      %v4207 = vld [vmem:[%s5 + $0x98] sm:$0xff]
      %v4208 = vld [vmem:[%s5 + $0xa0] sm:$0xff]
      %v4209 = vld [vmem:[%s5 + $0xa8] sm:$0xff]
      %v4210 = vld [vmem:[%s5 + $0xb0] sm:$0xff]
      %v4211 = vld [vmem:[%s5 + $0xb8] sm:$0xff]
      %v4212 = vld [vmem:[%s5 + $0xc0] sm:$0xff]
      %v4213 = vld [vmem:[%s5 + $0xc8] sm:$0xff]
      %v4214 = vld [vmem:[%s5 + $0xd0] sm:$0xff]
      %v4215 = vld [vmem:[%s5 + $0xd8] sm:$0xff]
      %v4216 = vld [vmem:[%s5 + $0xe0] sm:$0xff]
      %v4217 = vld [vmem:[%s5 + $0xe8] sm:$0xff]
      %v4218 = vld [vmem:[%s5 + $0xf0] sm:$0xff]
      %v4219 = vld [vmem:[%s5 + $0xf8] sm:$0xff]
      %v4220 = vld [vmem:[%s5 + $0x100] sm:$0xff]
      %v4221 = vld [vmem:[%s5 + $0x108] sm:$0xff]
      %v4222 = vld [vmem:[%s5 + $0x110] sm:$0xff]
      %v4223 = vld [vmem:[%s5 + $0x118] sm:$0xff]
      %v4224 = vld [vmem:[%s5 + $0x120] sm:$0xff]
      %v4225 = vld [vmem:[%s5 + $0x128] sm:$0xff]
      %v4226 = vld [vmem:[%s5 + $0x130] sm:$0xff]
      %v4227 = vld [vmem:[%s5 + $0x138] sm:$0xff]
      %v4228 = vld [vmem:[%s5 + $0x140] sm:$0xff]
      %v4229 = vld [vmem:[%s5 + $0x148] sm:$0xff]
      %v4230 = vld [vmem:[%s5 + $0x150] sm:$0xff]
      %v4231 = vld [vmem:[%s5 + $0x158] sm:$0xff]
      %v4232 = vld [vmem:[%s5 + $0x160] sm:$0xff]
      %v4233 = vld [vmem:[%s5 + $0x168] sm:$0xff]
      %v4234 = vld [vmem:[%s5 + $0x170] sm:$0xff]
      %v4235 = vld [vmem:[%s5 + $0x178] sm:$0xff]
      %v4236 = vld [vmem:[%s5 + $0x180] sm:$0xff]
      %v4237 = vld [vmem:[%s5 + $0x188] sm:$0xff]
      %v4238 = vld [vmem:[%s5 + $0x190] sm:$0xff]
      %v4239 = vld [vmem:[%s5 + $0x198] sm:$0xff]
      %v4240 = vld [vmem:[%s5 + $0x1a0] sm:$0xff]
      %v4241 = vld [vmem:[%s5 + $0x1a8] sm:$0xff]
      %v4242 = vld [vmem:[%s5 + $0x1b0] sm:$0xff]
      %v4243 = vld [vmem:[%s5 + $0x1b8] sm:$0xff]
      %v4244 = vld [vmem:[%s5 + $0x1c0] sm:$0xff]
      %v4245 = vld [vmem:[%s5 + $0x1c8] sm:$0xff]
      %v4246 = vld [vmem:[%s5 + $0x1d0] sm:$0xff]
      %v4247 = vld [vmem:[%s5 + $0x1d8] sm:$0xff]
      %v4248 = vld [vmem:[%s5 + $0x1e0] sm:$0xff]
      %v4249 = vld [vmem:[%s5 + $0x1e8] sm:$0xff]
      %v4250 = vld [vmem:[%s5 + $0x1f0] sm:$0xff]
      %v4251 = vld [vmem:[%s5 + $0x1f8] sm:$0xff]
      %v4252 = vld [vmem:[%s5 + $0x200] sm:$0xff]
      %v4253 = vld [vmem:[%s5 + $0x208] sm:$0xff]
      %v4254 = vld [vmem:[%s5 + $0x210] sm:$0xff]
      %v4255 = vld [vmem:[%s5 + $0x218] sm:$0xff]
      %v4256 = vld [vmem:[%s5 + $0x220] sm:$0xff]
      %v4257 = vld [vmem:[%s5 + $0x228] sm:$0xff]
      %v4258 = vld [vmem:[%s5 + $0x230] sm:$0xff]
      %v4259 = vld [vmem:[%s5 + $0x238] sm:$0xff]
      %v4260 = vld [vmem:[%s5 + $0x240] sm:$0xff]
      %v4261 = vld [vmem:[%s5 + $0x248] sm:$0xff]
      %v4262 = vld [vmem:[%s5 + $0x250] sm:$0xff]
      %v4263 = vld [vmem:[%s5 + $0x258] sm:$0xff]
      %v4264 = vld [vmem:[%s5 + $0x260] sm:$0xff]
      %v4265 = vld [vmem:[%s5 + $0x268] sm:$0xff]
      %v4266 = vld [vmem:[%s5 + $0x270] sm:$0xff]
      %v4267 = vld [vmem:[%s5 + $0x278] sm:$0xff]
      %v4268 = vld [vmem:[%s5 + $0x280] sm:$0xff]
      %v4269 = vld [vmem:[%s5 + $0x288] sm:$0xff]
      %v4270 = vld [vmem:[%s5 + $0x290] sm:$0xff]
      %v4271 = vld [vmem:[%s5 + $0x298] sm:$0xff]
      %v4272 = vld [vmem:[%s5 + $0x2a0] sm:$0xff]
      %v4273 = vld [vmem:[%s5 + $0x2a8] sm:$0xff]
      %v4274 = vld [vmem:[%s5 + $0x2b0] sm:$0xff]
      %v4275 = vld [vmem:[%s5 + $0x2b8] sm:$0xff]
      %v4276 = vld [vmem:[%s5 + $0x2c0] sm:$0xff]
      %v4277 = vld [vmem:[%s5 + $0x2c8] sm:$0xff]
      %v4278 = vld [vmem:[%s5 + $0x2d0] sm:$0xff]
      %v4279 = vld [vmem:[%s5 + $0x2d8] sm:$0xff]
      %v4280 = vld [vmem:[%s5 + $0x2e0] sm:$0xff]
      %v4281 = vld [vmem:[%s5 + $0x2e8] sm:$0xff]
      %v4282 = vld [vmem:[%s5 + $0x2f0] sm:$0xff]
      %v4283 = vld [vmem:[%s5 + $0x2f8] sm:$0xff]
      %v4284 = vld [vmem:[%s5 + $0x300] sm:$0xff]
      %v4285 = vld [vmem:[%s5 + $0x308] sm:$0xff]
      %v4286 = vld [vmem:[%s5 + $0x310] sm:$0xff]
      %v4287 = vld [vmem:[%s5 + $0x318] sm:$0xff]
      %v4288 = vld [vmem:[%s5 + $0x320] sm:$0xff]
      %v4289 = vld [vmem:[%s5 + $0x328] sm:$0xff]
      %v4290 = vld [vmem:[%s5 + $0x330] sm:$0xff]
      %v4291 = vld [vmem:[%s5 + $0x338] sm:$0xff]
      %v4292 = vld [vmem:[%s5 + $0x340] sm:$0xff]
      %v4293 = vld [vmem:[%s5 + $0x348] sm:$0xff]
      %v4294 = vld [vmem:[%s5 + $0x350] sm:$0xff]
      %v4295 = vld [vmem:[%s5 + $0x358] sm:$0xff]
      %v4296 = vld [vmem:[%s5 + $0x360] sm:$0xff]
      %v4297 = vld [vmem:[%s5 + $0x368] sm:$0xff]
      %v4298 = vld [vmem:[%s5 + $0x370] sm:$0xff]
      %v4299 = vld [vmem:[%s5 + $0x378] sm:$0xff]
      %v4300 = vld [vmem:[%s5 + $0x380] sm:$0xff]
      %v4301 = vld [vmem:[%s5 + $0x388] sm:$0xff]
      %v4302 = vld [vmem:[%s5 + $0x390] sm:$0xff]
      %v4303 = vld [vmem:[%s5 + $0x398] sm:$0xff]
      %v4304 = vld [vmem:[%s5 + $0x3a0] sm:$0xff]
      %v4305 = vld [vmem:[%s5 + $0x3a8] sm:$0xff]
      %v4306 = vld [vmem:[%s5 + $0x3b0] sm:$0xff]
      %v4307 = vld [vmem:[%s5 + $0x3b8] sm:$0xff]
      %v4308 = vld [vmem:[%s5 + $0x3c0] sm:$0xff]
      %v4309 = vld [vmem:[%s5 + $0x3c8] sm:$0xff]
      %v4310 = vld [vmem:[%s5 + $0x3d0] sm:$0xff]
      %v4311 = vld [vmem:[%s5 + $0x3d8] sm:$0xff]
      %v4312 = vld [vmem:[%s5 + $0x3e0] sm:$0xff]
      %v4313 = vld [vmem:[%s5 + $0x3e8] sm:$0xff]
      %v4314 = vld [vmem:[%s5 + $0x3f0] sm:$0xff]
      %v4315 = vld [vmem:[%s5 + $0x3f8] sm:$0xff]
      %v4316 = vld [vmem:[%s6] sm:$0xf]
      %v4318 = vlaneseq
      %v4319 = vshrl.u32 %v4318, 7
      %v4320 = vsub.s32 0, %v4319
      %v4321 = vrot.slane %v4316, %v4320
      %v4322 = vlaneseq
      %v4323 = vshrl.u32 %v4322, 7
      %v4324 = vsub.s32 1, %v4323
      %v4325 = vrot.slane %v4316, %v4324
      %v4326 = vlaneseq
      %v4327 = vshrl.u32 %v4326, 7
      %v4328 = vsub.s32 2, %v4327
      %v4329 = vrot.slane %v4316, %v4328
      %v4330 = vlaneseq
      %v4331 = vshrl.u32 %v4330, 7
      %v4332 = vsub.s32 3, %v4331
      %v4333 = vrot.slane %v4316, %v4332
      %v4466 = vunpack.c.l.b16 %v4188
      %v4467 = vunpack.c.h.b16 %v4188
      %v4468 = vunpack.c.l.b16 %v4189
      %v4469 = vunpack.c.h.b16 %v4189
      %v4470 = vunpack.c.l.b16 %v4190
      %v4471 = vunpack.c.h.b16 %v4190
      %v4472 = vunpack.c.l.b16 %v4191
      %v4473 = vunpack.c.h.b16 %v4191
      %v4474 = vunpack.c.l.b16 %v4192
      %v4475 = vunpack.c.h.b16 %v4192
      %v4476 = vunpack.c.l.b16 %v4193
      %v4477 = vunpack.c.h.b16 %v4193
      %v4478 = vunpack.c.l.b16 %v4194
      %v4479 = vunpack.c.h.b16 %v4194
      %v4480 = vunpack.c.l.b16 %v4195
      %v4481 = vunpack.c.h.b16 %v4195
      %v4482 = vunpack.c.l.b16 %v4196
      %v4483 = vunpack.c.h.b16 %v4196
      %v4484 = vunpack.c.l.b16 %v4197
      %v4485 = vunpack.c.h.b16 %v4197
      %v4486 = vunpack.c.l.b16 %v4198
      %v4487 = vunpack.c.h.b16 %v4198
      %v4488 = vunpack.c.l.b16 %v4199
      %v4489 = vunpack.c.h.b16 %v4199
      %v4490 = vunpack.c.l.b16 %v4200
      %v4491 = vunpack.c.h.b16 %v4200
      %v4492 = vunpack.c.l.b16 %v4201
      %v4493 = vunpack.c.h.b16 %v4201
      %v4494 = vunpack.c.l.b16 %v4202
      %v4495 = vunpack.c.h.b16 %v4202
      %v4496 = vunpack.c.l.b16 %v4203
      %v4497 = vunpack.c.h.b16 %v4203
      %v4498 = vunpack.c.l.b16 %v4204
      %v4499 = vunpack.c.h.b16 %v4204
      %v4500 = vunpack.c.l.b16 %v4205
      %v4501 = vunpack.c.h.b16 %v4205
      %v4502 = vunpack.c.l.b16 %v4206
      %v4503 = vunpack.c.h.b16 %v4206
      %v4504 = vunpack.c.l.b16 %v4207
      %v4505 = vunpack.c.h.b16 %v4207
      %v4506 = vunpack.c.l.b16 %v4208
      %v4507 = vunpack.c.h.b16 %v4208
      %v4508 = vunpack.c.l.b16 %v4209
      %v4509 = vunpack.c.h.b16 %v4209
      %v4510 = vunpack.c.l.b16 %v4210
      %v4511 = vunpack.c.h.b16 %v4210
      %v4512 = vunpack.c.l.b16 %v4211
      %v4513 = vunpack.c.h.b16 %v4211
      %v4514 = vunpack.c.l.b16 %v4212
      %v4515 = vunpack.c.h.b16 %v4212
      %v4516 = vunpack.c.l.b16 %v4213
      %v4517 = vunpack.c.h.b16 %v4213
      %v4518 = vunpack.c.l.b16 %v4214
      %v4519 = vunpack.c.h.b16 %v4214
      %v4520 = vunpack.c.l.b16 %v4215
      %v4521 = vunpack.c.h.b16 %v4215
      %v4522 = vunpack.c.l.b16 %v4216
      %v4523 = vunpack.c.h.b16 %v4216
      %v4524 = vunpack.c.l.b16 %v4217
      %v4525 = vunpack.c.h.b16 %v4217
      %v4526 = vunpack.c.l.b16 %v4218
      %v4527 = vunpack.c.h.b16 %v4218
      %v4528 = vunpack.c.l.b16 %v4219
      %v4529 = vunpack.c.h.b16 %v4219
      %v4530 = vunpack.c.l.b16 %v4220
      %v4531 = vunpack.c.h.b16 %v4220
      %v4532 = vunpack.c.l.b16 %v4221
      %v4533 = vunpack.c.h.b16 %v4221
      %v4534 = vunpack.c.l.b16 %v4222
      %v4535 = vunpack.c.h.b16 %v4222
      %v4536 = vunpack.c.l.b16 %v4223
      %v4537 = vunpack.c.h.b16 %v4223
      %v4538 = vunpack.c.l.b16 %v4224
      %v4539 = vunpack.c.h.b16 %v4224
      %v4540 = vunpack.c.l.b16 %v4225
      %v4541 = vunpack.c.h.b16 %v4225
      %v4542 = vunpack.c.l.b16 %v4226
      %v4543 = vunpack.c.h.b16 %v4226
      %v4544 = vunpack.c.l.b16 %v4227
      %v4545 = vunpack.c.h.b16 %v4227
      %v4546 = vunpack.c.l.b16 %v4228
      %v4547 = vunpack.c.h.b16 %v4228
      %v4548 = vunpack.c.l.b16 %v4229
      %v4549 = vunpack.c.h.b16 %v4229
      %v4550 = vunpack.c.l.b16 %v4230
      %v4551 = vunpack.c.h.b16 %v4230
      %v4552 = vunpack.c.l.b16 %v4231
      %v4553 = vunpack.c.h.b16 %v4231
      %v4554 = vunpack.c.l.b16 %v4232
      %v4555 = vunpack.c.h.b16 %v4232
      %v4556 = vunpack.c.l.b16 %v4233
      %v4557 = vunpack.c.h.b16 %v4233
      %v4558 = vunpack.c.l.b16 %v4234
      %v4559 = vunpack.c.h.b16 %v4234
      %v4560 = vunpack.c.l.b16 %v4235
      %v4561 = vunpack.c.h.b16 %v4235
      %v4562 = vunpack.c.l.b16 %v4236
      %v4563 = vunpack.c.h.b16 %v4236
      %v4564 = vunpack.c.l.b16 %v4237
      %v4565 = vunpack.c.h.b16 %v4237
      %v4566 = vunpack.c.l.b16 %v4238
      %v4567 = vunpack.c.h.b16 %v4238
      %v4568 = vunpack.c.l.b16 %v4239
      %v4569 = vunpack.c.h.b16 %v4239
      %v4570 = vunpack.c.l.b16 %v4240
      %v4571 = vunpack.c.h.b16 %v4240
      %v4572 = vunpack.c.l.b16 %v4241
      %v4573 = vunpack.c.h.b16 %v4241
      %v4574 = vunpack.c.l.b16 %v4242
      %v4575 = vunpack.c.h.b16 %v4242
      %v4576 = vunpack.c.l.b16 %v4243
      %v4577 = vunpack.c.h.b16 %v4243
      %v4578 = vunpack.c.l.b16 %v4244
      %v4579 = vunpack.c.h.b16 %v4244
      %v4580 = vunpack.c.l.b16 %v4245
      %v4581 = vunpack.c.h.b16 %v4245
      %v4582 = vunpack.c.l.b16 %v4246
      %v4583 = vunpack.c.h.b16 %v4246
      %v4584 = vunpack.c.l.b16 %v4247
      %v4585 = vunpack.c.h.b16 %v4247
      %v4586 = vunpack.c.l.b16 %v4248
      %v4587 = vunpack.c.h.b16 %v4248
      %v4588 = vunpack.c.l.b16 %v4249
      %v4589 = vunpack.c.h.b16 %v4249
      %v4590 = vunpack.c.l.b16 %v4250
      %v4591 = vunpack.c.h.b16 %v4250
      %v4592 = vunpack.c.l.b16 %v4251
      %v4593 = vunpack.c.h.b16 %v4251
      %v4594 = vunpack.c.l.b16 %v4252
      %v4595 = vunpack.c.h.b16 %v4252
      %v4596 = vunpack.c.l.b16 %v4253
      %v4597 = vunpack.c.h.b16 %v4253
      %v4598 = vunpack.c.l.b16 %v4254
      %v4599 = vunpack.c.h.b16 %v4254
      %v4600 = vunpack.c.l.b16 %v4255
      %v4601 = vunpack.c.h.b16 %v4255
      %v4602 = vunpack.c.l.b16 %v4256
      %v4603 = vunpack.c.h.b16 %v4256
      %v4604 = vunpack.c.l.b16 %v4257
      %v4605 = vunpack.c.h.b16 %v4257
      %v4606 = vunpack.c.l.b16 %v4258
      %v4607 = vunpack.c.h.b16 %v4258
      %v4608 = vunpack.c.l.b16 %v4259
      %v4609 = vunpack.c.h.b16 %v4259
      %v4610 = vunpack.c.l.b16 %v4260
      %v4611 = vunpack.c.h.b16 %v4260
      %v4612 = vunpack.c.l.b16 %v4261
      %v4613 = vunpack.c.h.b16 %v4261
      %v4614 = vunpack.c.l.b16 %v4262
      %v4615 = vunpack.c.h.b16 %v4262
      %v4616 = vunpack.c.l.b16 %v4263
      %v4617 = vunpack.c.h.b16 %v4263
      %v4618 = vunpack.c.l.b16 %v4264
      %v4619 = vunpack.c.h.b16 %v4264
      %v4620 = vunpack.c.l.b16 %v4265
      %v4621 = vunpack.c.h.b16 %v4265
      %v4622 = vunpack.c.l.b16 %v4266
      %v4623 = vunpack.c.h.b16 %v4266
      %v4624 = vunpack.c.l.b16 %v4267
      %v4625 = vunpack.c.h.b16 %v4267
      %v4626 = vunpack.c.l.b16 %v4268
      %v4627 = vunpack.c.h.b16 %v4268
      %v4628 = vunpack.c.l.b16 %v4269
      %v4629 = vunpack.c.h.b16 %v4269
      %v4630 = vunpack.c.l.b16 %v4270
      %v4631 = vunpack.c.h.b16 %v4270
      %v4632 = vunpack.c.l.b16 %v4271
      %v4633 = vunpack.c.h.b16 %v4271
      %v4634 = vunpack.c.l.b16 %v4272
      %v4635 = vunpack.c.h.b16 %v4272
      %v4636 = vunpack.c.l.b16 %v4273
      %v4637 = vunpack.c.h.b16 %v4273
      %v4638 = vunpack.c.l.b16 %v4274
      %v4639 = vunpack.c.h.b16 %v4274
      %v4640 = vunpack.c.l.b16 %v4275
      %v4641 = vunpack.c.h.b16 %v4275
      %v4642 = vunpack.c.l.b16 %v4276
      %v4643 = vunpack.c.h.b16 %v4276
      %v4644 = vunpack.c.l.b16 %v4277
      %v4645 = vunpack.c.h.b16 %v4277
      %v4646 = vunpack.c.l.b16 %v4278
      %v4647 = vunpack.c.h.b16 %v4278
      %v4648 = vunpack.c.l.b16 %v4279
      %v4649 = vunpack.c.h.b16 %v4279
      %v4650 = vunpack.c.l.b16 %v4280
      %v4651 = vunpack.c.h.b16 %v4280
      %v4652 = vunpack.c.l.b16 %v4281
      %v4653 = vunpack.c.h.b16 %v4281
      %v4654 = vunpack.c.l.b16 %v4282
      %v4655 = vunpack.c.h.b16 %v4282
      %v4656 = vunpack.c.l.b16 %v4283
      %v4657 = vunpack.c.h.b16 %v4283
      %v4658 = vunpack.c.l.b16 %v4284
      %v4659 = vunpack.c.h.b16 %v4284
      %v4660 = vunpack.c.l.b16 %v4285
      %v4661 = vunpack.c.h.b16 %v4285
      %v4662 = vunpack.c.l.b16 %v4286
      %v4663 = vunpack.c.h.b16 %v4286
      %v4664 = vunpack.c.l.b16 %v4287
      %v4665 = vunpack.c.h.b16 %v4287
      %v4666 = vunpack.c.l.b16 %v4288
      %v4667 = vunpack.c.h.b16 %v4288
      %v4668 = vunpack.c.l.b16 %v4289
      %v4669 = vunpack.c.h.b16 %v4289
      %v4670 = vunpack.c.l.b16 %v4290
      %v4671 = vunpack.c.h.b16 %v4290
      %v4672 = vunpack.c.l.b16 %v4291
      %v4673 = vunpack.c.h.b16 %v4291
      %v4674 = vunpack.c.l.b16 %v4292
      %v4675 = vunpack.c.h.b16 %v4292
      %v4676 = vunpack.c.l.b16 %v4293
      %v4677 = vunpack.c.h.b16 %v4293
      %v4678 = vunpack.c.l.b16 %v4294
      %v4679 = vunpack.c.h.b16 %v4294
      %v4680 = vunpack.c.l.b16 %v4295
      %v4681 = vunpack.c.h.b16 %v4295
      %v4682 = vunpack.c.l.b16 %v4296
      %v4683 = vunpack.c.h.b16 %v4296
      %v4684 = vunpack.c.l.b16 %v4297
      %v4685 = vunpack.c.h.b16 %v4297
      %v4686 = vunpack.c.l.b16 %v4298
      %v4687 = vunpack.c.h.b16 %v4298
      %v4688 = vunpack.c.l.b16 %v4299
      %v4689 = vunpack.c.h.b16 %v4299
      %v4690 = vunpack.c.l.b16 %v4300
      %v4691 = vunpack.c.h.b16 %v4300
      %v4692 = vunpack.c.l.b16 %v4301
      %v4693 = vunpack.c.h.b16 %v4301
      %v4694 = vunpack.c.l.b16 %v4302
      %v4695 = vunpack.c.h.b16 %v4302
      %v4696 = vunpack.c.l.b16 %v4303
      %v4697 = vunpack.c.h.b16 %v4303
      %v4698 = vunpack.c.l.b16 %v4304
      %v4699 = vunpack.c.h.b16 %v4304
      %v4700 = vunpack.c.l.b16 %v4305
      %v4701 = vunpack.c.h.b16 %v4305
      %v4702 = vunpack.c.l.b16 %v4306
      %v4703 = vunpack.c.h.b16 %v4306
      %v4704 = vunpack.c.l.b16 %v4307
      %v4705 = vunpack.c.h.b16 %v4307
      %v4706 = vunpack.c.l.b16 %v4308
      %v4707 = vunpack.c.h.b16 %v4308
      %v4708 = vunpack.c.l.b16 %v4309
      %v4709 = vunpack.c.h.b16 %v4309
      %v4710 = vunpack.c.l.b16 %v4310
      %v4711 = vunpack.c.h.b16 %v4310
      %v4712 = vunpack.c.l.b16 %v4311
      %v4713 = vunpack.c.h.b16 %v4311
      %v4714 = vunpack.c.l.b16 %v4312
      %v4715 = vunpack.c.h.b16 %v4312
      %v4716 = vunpack.c.l.b16 %v4313
      %v4717 = vunpack.c.h.b16 %v4313
      %v4718 = vunpack.c.l.b16 %v4314
      %v4719 = vunpack.c.h.b16 %v4314
      %v4720 = vunpack.c.l.b16 %v4315
      %v4721 = vunpack.c.h.b16 %v4315
      %v4722 = vpack.c.b16 %v4470, %v4466
      %v4723 = vpack.c.b16 %v4471, %v4467
      %v4724 = vpack.c.b16 %v4472, %v4468
      %v4725 = vpack.c.b16 %v4473, %v4469
      %v4726 = vpack.c.b16 %v4478, %v4474
      %v4727 = vpack.c.b16 %v4479, %v4475
      %v4728 = vpack.c.b16 %v4480, %v4476
      %v4729 = vpack.c.b16 %v4481, %v4477
      %v4730 = vpack.c.b16 %v4486, %v4482
      %v4731 = vpack.c.b16 %v4487, %v4483
      %v4732 = vpack.c.b16 %v4488, %v4484
      %v4733 = vpack.c.b16 %v4489, %v4485
      %v4734 = vpack.c.b16 %v4494, %v4490
      %v4735 = vpack.c.b16 %v4495, %v4491
      %v4736 = vpack.c.b16 %v4496, %v4492
      %v4737 = vpack.c.b16 %v4497, %v4493
      %v4738 = vpack.c.b16 %v4502, %v4498
      %v4739 = vpack.c.b16 %v4503, %v4499
      %v4740 = vpack.c.b16 %v4504, %v4500
      %v4741 = vpack.c.b16 %v4505, %v4501
      %v4742 = vpack.c.b16 %v4510, %v4506
      %v4743 = vpack.c.b16 %v4511, %v4507
      %v4744 = vpack.c.b16 %v4512, %v4508
      %v4745 = vpack.c.b16 %v4513, %v4509
      %v4746 = vpack.c.b16 %v4518, %v4514
      %v4747 = vpack.c.b16 %v4519, %v4515
      %v4748 = vpack.c.b16 %v4520, %v4516
      %v4749 = vpack.c.b16 %v4521, %v4517
      %v4750 = vpack.c.b16 %v4526, %v4522
      %v4751 = vpack.c.b16 %v4527, %v4523
      %v4752 = vpack.c.b16 %v4528, %v4524
      %v4753 = vpack.c.b16 %v4529, %v4525
      %v4754 = vpack.c.b16 %v4534, %v4530
      %v4755 = vpack.c.b16 %v4535, %v4531
      %v4756 = vpack.c.b16 %v4536, %v4532
      %v4757 = vpack.c.b16 %v4537, %v4533
      %v4758 = vpack.c.b16 %v4542, %v4538
      %v4759 = vpack.c.b16 %v4543, %v4539
      %v4760 = vpack.c.b16 %v4544, %v4540
      %v4761 = vpack.c.b16 %v4545, %v4541
      %v4762 = vpack.c.b16 %v4550, %v4546
      %v4763 = vpack.c.b16 %v4551, %v4547
      %v4764 = vpack.c.b16 %v4552, %v4548
      %v4765 = vpack.c.b16 %v4553, %v4549
      %v4766 = vpack.c.b16 %v4558, %v4554
      %v4767 = vpack.c.b16 %v4559, %v4555
      %v4768 = vpack.c.b16 %v4560, %v4556
      %v4769 = vpack.c.b16 %v4561, %v4557
      %v4770 = vpack.c.b16 %v4566, %v4562
      %v4771 = vpack.c.b16 %v4567, %v4563
      %v4772 = vpack.c.b16 %v4568, %v4564
      %v4773 = vpack.c.b16 %v4569, %v4565
      %v4774 = vpack.c.b16 %v4574, %v4570
      %v4775 = vpack.c.b16 %v4575, %v4571
      %v4776 = vpack.c.b16 %v4576, %v4572
      %v4777 = vpack.c.b16 %v4577, %v4573
      %v4778 = vpack.c.b16 %v4582, %v4578
      %v4779 = vpack.c.b16 %v4583, %v4579
      %v4780 = vpack.c.b16 %v4584, %v4580
      %v4781 = vpack.c.b16 %v4585, %v4581
      %v4782 = vpack.c.b16 %v4590, %v4586
      %v4783 = vpack.c.b16 %v4591, %v4587
      %v4784 = vpack.c.b16 %v4592, %v4588
      %v4785 = vpack.c.b16 %v4593, %v4589
      %v4786 = vpack.c.b16 %v4598, %v4594
      %v4787 = vpack.c.b16 %v4599, %v4595
      %v4788 = vpack.c.b16 %v4600, %v4596
      %v4789 = vpack.c.b16 %v4601, %v4597
      %v4790 = vpack.c.b16 %v4606, %v4602
      %v4791 = vpack.c.b16 %v4607, %v4603
      %v4792 = vpack.c.b16 %v4608, %v4604
      %v4793 = vpack.c.b16 %v4609, %v4605
      %v4794 = vpack.c.b16 %v4614, %v4610
      %v4795 = vpack.c.b16 %v4615, %v4611
      %v4796 = vpack.c.b16 %v4616, %v4612
      %v4797 = vpack.c.b16 %v4617, %v4613
      %v4798 = vpack.c.b16 %v4622, %v4618
      %v4799 = vpack.c.b16 %v4623, %v4619
      %v4800 = vpack.c.b16 %v4624, %v4620
      %v4801 = vpack.c.b16 %v4625, %v4621
      %v4802 = vpack.c.b16 %v4630, %v4626
      %v4803 = vpack.c.b16 %v4631, %v4627
      %v4804 = vpack.c.b16 %v4632, %v4628
      %v4805 = vpack.c.b16 %v4633, %v4629
      %v4806 = vpack.c.b16 %v4638, %v4634
      %v4807 = vpack.c.b16 %v4639, %v4635
      %v4808 = vpack.c.b16 %v4640, %v4636
      %v4809 = vpack.c.b16 %v4641, %v4637
      %v4810 = vpack.c.b16 %v4646, %v4642
      %v4811 = vpack.c.b16 %v4647, %v4643
      %v4812 = vpack.c.b16 %v4648, %v4644
      %v4813 = vpack.c.b16 %v4649, %v4645
      %v4814 = vpack.c.b16 %v4654, %v4650
      %v4815 = vpack.c.b16 %v4655, %v4651
      %v4816 = vpack.c.b16 %v4656, %v4652
      %v4817 = vpack.c.b16 %v4657, %v4653
      %v4818 = vpack.c.b16 %v4662, %v4658
      %v4819 = vpack.c.b16 %v4663, %v4659
      %v4820 = vpack.c.b16 %v4664, %v4660
      %v4821 = vpack.c.b16 %v4665, %v4661
      %v4822 = vpack.c.b16 %v4670, %v4666
      %v4823 = vpack.c.b16 %v4671, %v4667
      %v4824 = vpack.c.b16 %v4672, %v4668
      %v4825 = vpack.c.b16 %v4673, %v4669
      %v4826 = vpack.c.b16 %v4678, %v4674
      %v4827 = vpack.c.b16 %v4679, %v4675
      %v4828 = vpack.c.b16 %v4680, %v4676
      %v4829 = vpack.c.b16 %v4681, %v4677
      %v4830 = vpack.c.b16 %v4686, %v4682
      %v4831 = vpack.c.b16 %v4687, %v4683
      %v4832 = vpack.c.b16 %v4688, %v4684
      %v4833 = vpack.c.b16 %v4689, %v4685
      %v4834 = vpack.c.b16 %v4694, %v4690
      %v4835 = vpack.c.b16 %v4695, %v4691
      %v4836 = vpack.c.b16 %v4696, %v4692
      %v4837 = vpack.c.b16 %v4697, %v4693
      %v4838 = vpack.c.b16 %v4702, %v4698
      %v4839 = vpack.c.b16 %v4703, %v4699
      %v4840 = vpack.c.b16 %v4704, %v4700
      %v4841 = vpack.c.b16 %v4705, %v4701
      %v4842 = vpack.c.b16 %v4710, %v4706
      %v4843 = vpack.c.b16 %v4711, %v4707
      %v4844 = vpack.c.b16 %v4712, %v4708
      %v4845 = vpack.c.b16 %v4713, %v4709
      %v4846 = vpack.c.b16 %v4718, %v4714
      %v4847 = vpack.c.b16 %v4719, %v4715
      %v4848 = vpack.c.b16 %v4720, %v4716
      %v4849 = vpack.c.b16 %v4721, %v4717
      %4978 = vmatprep.subr.bf16.mxu0 %v4723
      %4979 = vmatpush1.bf16.msra.mxu0 %v4722
      %4980 = vmatprep.subr.bf16.mxu0 %v4727
      %4981 = vmatpush1.bf16.msra.mxu0 %v4726
      %4982 = vmatprep.subr.bf16.mxu0 %v4731
      %4983 = vmatpush1.bf16.msra.mxu0 %v4730
      %4984 = vmatprep.subr.bf16.mxu0 %v4735
      %4985 = vmatpush1.bf16.msra.mxu0 %v4734
      %4986 = vmatprep.subr.bf16.mxu0 %v4739
      %4987 = vmatpush1.bf16.msra.mxu0 %v4738
      %4988 = vmatprep.subr.bf16.mxu0 %v4743
      %4989 = vmatpush1.bf16.msra.mxu0 %v4742
      %4990 = vmatprep.subr.bf16.mxu0 %v4747
      %4991 = vmatpush1.bf16.msra.mxu0 %v4746
      %4992 = vmatprep.subr.bf16.mxu0 %v4751
      %4993 = vmatpush1.bf16.msra.mxu0 %v4750
      %4994 = vmatprep.subr.bf16.mxu0 %v4755
      %4995 = vmatpush1.bf16.msra.mxu0 %v4754
      %4996 = vmatprep.subr.bf16.mxu0 %v4759
      %4997 = vmatpush1.bf16.msra.mxu0 %v4758
      %4998 = vmatprep.subr.bf16.mxu0 %v4763
      %4999 = vmatpush1.bf16.msra.mxu0 %v4762
      %5000 = vmatprep.subr.bf16.mxu0 %v4767
      %5001 = vmatpush1.bf16.msra.mxu0 %v4766
      %5002 = vmatprep.subr.bf16.mxu0 %v4771
      %5003 = vmatpush1.bf16.msra.mxu0 %v4770
      %5004 = vmatprep.subr.bf16.mxu0 %v4775
      %5005 = vmatpush1.bf16.msra.mxu0 %v4774
      %5006 = vmatprep.subr.bf16.mxu0 %v4779
      %5007 = vmatpush1.bf16.msra.mxu0 %v4778
      %5008 = vmatprep.subr.bf16.mxu0 %v4783
      %5009 = vmatpush1.bf16.msra.mxu0 %v4782
      %5010 = vmatprep.mubr.bf16.mxu0 %v4157
      %5011 = vmatmul.mubr.bf16.gmra.mrb[0].mxu0 %v4156
      %v5012 = vpop.f32.mrb[0].mxu0
      %v5013 = vadd.f32 %v4321, %v5012
      %v5014 = vpop.f32.mrb[0].mxu0
      %v5015 = vadd.f32 %v4325, %v5014
      %v5016 = vpop.f32.mrb[0].mxu0
      %v5017 = vadd.f32 %v4321, %v5016
      %v5018 = vpop.f32.mrb[0].mxu0
      %v5019 = vadd.f32 %v4325, %v5018
      %5020 = vmatprep.mubr.bf16.mxu0 %v4161
      %5021 = vmatmul.mubr.bf16.gmra.mrb[0].mxu0 %v4160
      %v5022 = vpop.f32.mrb[0].mxu0
      %v5023 = vadd.f32 %v4321, %v5022
      %v5024 = vpop.f32.mrb[0].mxu0
      %v5025 = vadd.f32 %v4325, %v5024
      %v5026 = vpop.f32.mrb[0].mxu0
      %v5027 = vadd.f32 %v4321, %v5026
      %v5028 = vpop.f32.mrb[0].mxu0
      %v5029 = vadd.f32 %v4325, %v5028
      %5030 = vmatprep.mubr.bf16.mxu0 %v4165
      %5031 = vmatmul.mubr.bf16.gmra.mrb[0].mxu0 %v4164
      %v5032 = vpop.f32.mrb[0].mxu0
      %v5033 = vadd.f32 %v4321, %v5032
      %v5034 = vpop.f32.mrb[0].mxu0
      %v5035 = vadd.f32 %v4325, %v5034
      %v5036 = vpop.f32.mrb[0].mxu0
      %v5037 = vadd.f32 %v4321, %v5036
      %v5038 = vpop.f32.mrb[0].mxu0
      %v5039 = vadd.f32 %v4325, %v5038
      %5040 = vmatprep.mubr.bf16.mxu0 %v4169
      %5041 = vmatmul.mubr.bf16.gmra.mrb[0].mxu0 %v4168
      %v5042 = vpop.f32.mrb[0].mxu0
      %v5043 = vadd.f32 %v4321, %v5042
      %v5044 = vpop.f32.mrb[0].mxu0
      %v5045 = vadd.f32 %v4325, %v5044
      %v5046 = vpop.f32.mrb[0].mxu0
      %v5047 = vadd.f32 %v4321, %v5046
      %v5048 = vpop.f32.mrb[0].mxu0
      %v5049 = vadd.f32 %v4325, %v5048
      %5050 = vmatprep.mubr.bf16.mxu0 %v4173
      %5051 = vmatmul.mubr.bf16.gmra.mrb[0].mxu0 %v4172
      %v5052 = vpop.f32.mrb[0].mxu0
      %v5053 = vadd.f32 %v4321, %v5052
      %v5054 = vpop.f32.mrb[0].mxu0
      %v5055 = vadd.f32 %v4325, %v5054
      %v5056 = vpop.f32.mrb[0].mxu0
      %v5057 = vadd.f32 %v4321, %v5056
      %v5058 = vpop.f32.mrb[0].mxu0
      %v5059 = vadd.f32 %v4325, %v5058
      %5060 = vmatprep.mubr.bf16.mxu0 %v4177
      %5061 = vmatmul.mubr.bf16.gmra.mrb[0].mxu0 %v4176
      %v5062 = vpop.f32.mrb[0].mxu0
      %v5063 = vadd.f32 %v4321, %v5062
      %v5064 = vpop.f32.mrb[0].mxu0
      %v5065 = vadd.f32 %v4325, %v5064
      %v5066 = vpop.f32.mrb[0].mxu0
      %v5067 = vadd.f32 %v4321, %v5066
      %v5068 = vpop.f32.mrb[0].mxu0
      %v5069 = vadd.f32 %v4325, %v5068
      %5070 = vmatprep.mubr.bf16.mxu0 %v4181
      %5071 = vmatmul.mubr.bf16.gmra.mrb[0].mxu0 %v4180
      %v5072 = vpop.f32.mrb[0].mxu0
      %v5073 = vadd.f32 %v4321, %v5072
      %v5074 = vpop.f32.mrb[0].mxu0
      %v5075 = vadd.f32 %v4325, %v5074
      %v5076 = vpop.f32.mrb[0].mxu0
      %v5077 = vadd.f32 %v4321, %v5076
      %v5078 = vpop.f32.mrb[0].mxu0
      %v5079 = vadd.f32 %v4325, %v5078
      %5080 = vmatprep.mubr.bf16.mxu0 %v4185
      %5081 = vmatmul.mubr.bf16.gmra.mrb[0].mxu0 %v4184
      %v5082 = vpop.f32.mrb[0].mxu0
      %v5083 = vadd.f32 %v4321, %v5082
      %v5084 = vpop.f32.mrb[0].mxu0
      %v5085 = vadd.f32 %v4325, %v5084
      %v5086 = vpop.f32.mrb[0].mxu0
      %v5087 = vadd.f32 %v4321, %v5086
      %v5088 = vpop.f32.mrb[0].mxu0
      %v5089 = vadd.f32 %v4325, %v5088
      %5090 = vdwg.mxu0
      %5091 = vmatprep.subr.bf16.mxu0 %v4787
      %5092 = vmatpush1.bf16.msra.mxu0 %v4786
      %5093 = vmatprep.subr.bf16.mxu0 %v4791
      %5094 = vmatpush1.bf16.msra.mxu0 %v4790
      %5095 = vmatprep.subr.bf16.mxu0 %v4795
      %5096 = vmatpush1.bf16.msra.mxu0 %v4794
      %5097 = vmatprep.subr.bf16.mxu0 %v4799
      %5098 = vmatpush1.bf16.msra.mxu0 %v4798
      %5099 = vmatprep.subr.bf16.mxu0 %v4803
      %5100 = vmatpush1.bf16.msra.mxu0 %v4802
      %5101 = vmatprep.subr.bf16.mxu0 %v4807
      %5102 = vmatpush1.bf16.msra.mxu0 %v4806
      %5103 = vmatprep.subr.bf16.mxu0 %v4811
      %5104 = vmatpush1.bf16.msra.mxu0 %v4810
      %5105 = vmatprep.subr.bf16.mxu0 %v4815
      %5106 = vmatpush1.bf16.msra.mxu0 %v4814
      %5107 = vmatprep.subr.bf16.mxu0 %v4819
      %5108 = vmatpush1.bf16.msra.mxu0 %v4818
      %5109 = vmatprep.subr.bf16.mxu0 %v4823
      %5110 = vmatpush1.bf16.msra.mxu0 %v4822
      %5111 = vmatprep.subr.bf16.mxu0 %v4827
      %5112 = vmatpush1.bf16.msra.mxu0 %v4826
      %5113 = vmatprep.subr.bf16.mxu0 %v4831
      %5114 = vmatpush1.bf16.msra.mxu0 %v4830
      %5115 = vmatprep.subr.bf16.mxu0 %v4835
      %5116 = vmatpush1.bf16.msra.mxu0 %v4834
      %5117 = vmatprep.subr.bf16.mxu0 %v4839
      %5118 = vmatpush1.bf16.msra.mxu0 %v4838
      %5119 = vmatprep.subr.bf16.mxu0 %v4843
      %5120 = vmatpush1.bf16.msra.mxu0 %v4842
      %5121 = vmatprep.subr.bf16.mxu0 %v4847
      %5122 = vmatpush1.bf16.msra.mxu0 %v4846
      %5123 = vmatprep.mubr.bf16.mxu0 %v4159
      %5124 = vmatmul.mubr.bf16.gmra.mrb[0].mxu0 %v4158
      %v5125 = vpop.f32.mrb[0].mxu0
      %v5126 = vadd.f32 %v5013, %v5125
      %v5127 = vpop.f32.mrb[0].mxu0
      %v5128 = vadd.f32 %v5015, %v5127
      %v5129 = vpop.f32.mrb[0].mxu0
      %v5130 = vadd.f32 %v5017, %v5129
      %v5131 = vpop.f32.mrb[0].mxu0
      %v5132 = vadd.f32 %v5019, %v5131
      %5133 = vmatprep.mubr.bf16.mxu0 %v4163
      %5134 = vmatmul.mubr.bf16.gmra.mrb[0].mxu0 %v4162
      %v5135 = vpop.f32.mrb[0].mxu0
      %v5136 = vadd.f32 %v5023, %v5135
      %v5137 = vpop.f32.mrb[0].mxu0
      %v5138 = vadd.f32 %v5025, %v5137
      %v5139 = vpop.f32.mrb[0].mxu0
      %v5140 = vadd.f32 %v5027, %v5139
      %v5141 = vpop.f32.mrb[0].mxu0
      %v5142 = vadd.f32 %v5029, %v5141
      %5143 = vmatprep.mubr.bf16.mxu0 %v4167
      %5144 = vmatmul.mubr.bf16.gmra.mrb[0].mxu0 %v4166
      %v5145 = vpop.f32.mrb[0].mxu0
      %v5146 = vadd.f32 %v5033, %v5145
      %v5147 = vpop.f32.mrb[0].mxu0
      %v5148 = vadd.f32 %v5035, %v5147
      %v5149 = vpop.f32.mrb[0].mxu0
      %v5150 = vadd.f32 %v5037, %v5149
      %v5151 = vpop.f32.mrb[0].mxu0
      %v5152 = vadd.f32 %v5039, %v5151
      %5153 = vmatprep.mubr.bf16.mxu0 %v4171
      %5154 = vmatmul.mubr.bf16.gmra.mrb[0].mxu0 %v4170
      %v5155 = vpop.f32.mrb[0].mxu0
      %v5156 = vadd.f32 %v5043, %v5155
      %v5157 = vpop.f32.mrb[0].mxu0
      %v5158 = vadd.f32 %v5045, %v5157
      %v5159 = vpop.f32.mrb[0].mxu0
      %v5160 = vadd.f32 %v5047, %v5159
      %v5161 = vpop.f32.mrb[0].mxu0
      %v5162 = vadd.f32 %v5049, %v5161
      %5163 = vmatprep.mubr.bf16.mxu0 %v4175
      %5164 = vmatmul.mubr.bf16.gmra.mrb[0].mxu0 %v4174
      %v5165 = vpop.f32.mrb[0].mxu0
      %v5166 = vadd.f32 %v5053, %v5165
      %v5167 = vpop.f32.mrb[0].mxu0
      %v5168 = vadd.f32 %v5055, %v5167
      %v5169 = vpop.f32.mrb[0].mxu0
      %v5170 = vadd.f32 %v5057, %v5169
      %v5171 = vpop.f32.mrb[0].mxu0
      %v5172 = vadd.f32 %v5059, %v5171
      %5173 = vmatprep.mubr.bf16.mxu0 %v4179
      %5174 = vmatmul.mubr.bf16.gmra.mrb[0].mxu0 %v4178
      %v5175 = vpop.f32.mrb[0].mxu0
      %v5176 = vadd.f32 %v5063, %v5175
      %v5177 = vpop.f32.mrb[0].mxu0
      %v5178 = vadd.f32 %v5065, %v5177
      %v5179 = vpop.f32.mrb[0].mxu0
      %v5180 = vadd.f32 %v5067, %v5179
      %v5181 = vpop.f32.mrb[0].mxu0
      %v5182 = vadd.f32 %v5069, %v5181
      %5183 = vmatprep.mubr.bf16.mxu0 %v4183
      %5184 = vmatmul.mubr.bf16.gmra.mrb[0].mxu0 %v4182
      %v5185 = vpop.f32.mrb[0].mxu0
      %v5186 = vadd.f32 %v5073, %v5185
      %v5187 = vpop.f32.mrb[0].mxu0
      %v5188 = vadd.f32 %v5075, %v5187
      %v5189 = vpop.f32.mrb[0].mxu0
      %v5190 = vadd.f32 %v5077, %v5189
      %v5191 = vpop.f32.mrb[0].mxu0
      %v5192 = vadd.f32 %v5079, %v5191
      %5193 = vmatprep.mubr.bf16.mxu0 %v4187
      %5194 = vmatmul.mubr.bf16.gmra.mrb[0].mxu0 %v4186
      %v5195 = vpop.f32.mrb[0].mxu0
      %v5196 = vadd.f32 %v5083, %v5195
      %v5197 = vpop.f32.mrb[0].mxu0
      %v5198 = vadd.f32 %v5085, %v5197
      %v5199 = vpop.f32.mrb[0].mxu0
      %v5200 = vadd.f32 %v5087, %v5199
      %v5201 = vpop.f32.mrb[0].mxu0
      %v5202 = vadd.f32 %v5089, %v5201
      %5203 = vdwg.mxu0
      %5204 = vmatprep.subr.bf16.mxu0 %v4725
      %5205 = vmatpush1.bf16.msra.mxu0 %v4724
      %5206 = vmatprep.subr.bf16.mxu0 %v4729
      %5207 = vmatpush1.bf16.msra.mxu0 %v4728
      %5208 = vmatprep.subr.bf16.mxu0 %v4733
      %5209 = vmatpush1.bf16.msra.mxu0 %v4732
      %5210 = vmatprep.subr.bf16.mxu0 %v4737
      %5211 = vmatpush1.bf16.msra.mxu0 %v4736
      %5212 = vmatprep.subr.bf16.mxu0 %v4741
      %5213 = vmatpush1.bf16.msra.mxu0 %v4740
      %5214 = vmatprep.subr.bf16.mxu0 %v4745
      %5215 = vmatpush1.bf16.msra.mxu0 %v4744
      %5216 = vmatprep.subr.bf16.mxu0 %v4749
      %5217 = vmatpush1.bf16.msra.mxu0 %v4748
      %5218 = vmatprep.subr.bf16.mxu0 %v4753
      %5219 = vmatpush1.bf16.msra.mxu0 %v4752
      %5220 = vmatprep.subr.bf16.mxu0 %v4757
      %5221 = vmatpush1.bf16.msra.mxu0 %v4756
      %5222 = vmatprep.subr.bf16.mxu0 %v4761
      %5223 = vmatpush1.bf16.msra.mxu0 %v4760
      %5224 = vmatprep.subr.bf16.mxu0 %v4765
      %5225 = vmatpush1.bf16.msra.mxu0 %v4764
      %5226 = vmatprep.subr.bf16.mxu0 %v4769
      %5227 = vmatpush1.bf16.msra.mxu0 %v4768
      %5228 = vmatprep.subr.bf16.mxu0 %v4773
      %5229 = vmatpush1.bf16.msra.mxu0 %v4772
      %5230 = vmatprep.subr.bf16.mxu0 %v4777
      %5231 = vmatpush1.bf16.msra.mxu0 %v4776
      %5232 = vmatprep.subr.bf16.mxu0 %v4781
      %5233 = vmatpush1.bf16.msra.mxu0 %v4780
      %5234 = vmatprep.subr.bf16.mxu0 %v4785
      %5235 = vmatpush1.bf16.msra.mxu0 %v4784
      %5236 = vmatprep.mubr.bf16.mxu0 %v4157
      %5237 = vmatmul.mubr.bf16.gmra.mrb[0].mxu0 %v4156
      %v5238 = vpop.f32.mrb[0].mxu0
      %v5239 = vadd.f32 %v4329, %v5238
      %v5240 = vpop.f32.mrb[0].mxu0
      %v5241 = vadd.f32 %v4333, %v5240
      %v5242 = vpop.f32.mrb[0].mxu0
      %v5243 = vadd.f32 %v4329, %v5242
      %v5244 = vpop.f32.mrb[0].mxu0
      %v5245 = vadd.f32 %v4333, %v5244
      %5246 = vmatprep.mubr.bf16.mxu0 %v4161
      %5247 = vmatmul.mubr.bf16.gmra.mrb[0].mxu0 %v4160
      %v5248 = vpop.f32.mrb[0].mxu0
      %v5249 = vadd.f32 %v4329, %v5248
      %v5250 = vpop.f32.mrb[0].mxu0
      %v5251 = vadd.f32 %v4333, %v5250
      %v5252 = vpop.f32.mrb[0].mxu0
      %v5253 = vadd.f32 %v4329, %v5252
      %v5254 = vpop.f32.mrb[0].mxu0
      %v5255 = vadd.f32 %v4333, %v5254
      %5256 = vmatprep.mubr.bf16.mxu0 %v4165
      %5257 = vmatmul.mubr.bf16.gmra.mrb[0].mxu0 %v4164
      %v5258 = vpop.f32.mrb[0].mxu0
      %v5259 = vadd.f32 %v4329, %v5258
      %v5260 = vpop.f32.mrb[0].mxu0
      %v5261 = vadd.f32 %v4333, %v5260
      %v5262 = vpop.f32.mrb[0].mxu0
      %v5263 = vadd.f32 %v4329, %v5262
      %v5264 = vpop.f32.mrb[0].mxu0
      %v5265 = vadd.f32 %v4333, %v5264
      %5266 = vmatprep.mubr.bf16.mxu0 %v4169
      %5267 = vmatmul.mubr.bf16.gmra.mrb[0].mxu0 %v4168
      %v5268 = vpop.f32.mrb[0].mxu0
      %v5269 = vadd.f32 %v4329, %v5268
      %v5270 = vpop.f32.mrb[0].mxu0
      %v5271 = vadd.f32 %v4333, %v5270
      %v5272 = vpop.f32.mrb[0].mxu0
      %v5273 = vadd.f32 %v4329, %v5272
      %v5274 = vpop.f32.mrb[0].mxu0
      %v5275 = vadd.f32 %v4333, %v5274
      %5276 = vmatprep.mubr.bf16.mxu0 %v4173
      %5277 = vmatmul.mubr.bf16.gmra.mrb[0].mxu0 %v4172
      %v5278 = vpop.f32.mrb[0].mxu0
      %v5279 = vadd.f32 %v4329, %v5278
      %v5280 = vpop.f32.mrb[0].mxu0
      %v5281 = vadd.f32 %v4333, %v5280
      %v5282 = vpop.f32.mrb[0].mxu0
      %v5283 = vadd.f32 %v4329, %v5282
      %v5284 = vpop.f32.mrb[0].mxu0
      %v5285 = vadd.f32 %v4333, %v5284
      %5286 = vmatprep.mubr.bf16.mxu0 %v4177
      %5287 = vmatmul.mubr.bf16.gmra.mrb[0].mxu0 %v4176
      %v5288 = vpop.f32.mrb[0].mxu0
      %v5289 = vadd.f32 %v4329, %v5288
      %v5290 = vpop.f32.mrb[0].mxu0
      %v5291 = vadd.f32 %v4333, %v5290
      %v5292 = vpop.f32.mrb[0].mxu0
      %v5293 = vadd.f32 %v4329, %v5292
      %v5294 = vpop.f32.mrb[0].mxu0
      %v5295 = vadd.f32 %v4333, %v5294
      %5296 = vmatprep.mubr.bf16.mxu0 %v4181
      %5297 = vmatmul.mubr.bf16.gmra.mrb[0].mxu0 %v4180
      %v5298 = vpop.f32.mrb[0].mxu0
      %v5299 = vadd.f32 %v4329, %v5298
      %v5300 = vpop.f32.mrb[0].mxu0
      %v5301 = vadd.f32 %v4333, %v5300
      %v5302 = vpop.f32.mrb[0].mxu0
      %v5303 = vadd.f32 %v4329, %v5302
      %v5304 = vpop.f32.mrb[0].mxu0
      %v5305 = vadd.f32 %v4333, %v5304
      %5306 = vmatprep.mubr.bf16.mxu0 %v4185
      %5307 = vmatmul.mubr.bf16.gmra.mrb[0].mxu0 %v4184
      %v5308 = vpop.f32.mrb[0].mxu0
      %v5309 = vadd.f32 %v4329, %v5308
      %v5310 = vpop.f32.mrb[0].mxu0
      %v5311 = vadd.f32 %v4333, %v5310
      %v5312 = vpop.f32.mrb[0].mxu0
      %v5313 = vadd.f32 %v4329, %v5312
      %v5314 = vpop.f32.mrb[0].mxu0
      %v5315 = vadd.f32 %v4333, %v5314
      %5316 = vdwg.mxu0
      %5317 = vmatprep.subr.bf16.mxu0 %v4789
      %5318 = vmatpush1.bf16.msra.mxu0 %v4788
      %5319 = vmatprep.subr.bf16.mxu0 %v4793
      %5320 = vmatpush1.bf16.msra.mxu0 %v4792
      %5321 = vmatprep.subr.bf16.mxu0 %v4797
      %5322 = vmatpush1.bf16.msra.mxu0 %v4796
      %5323 = vmatprep.subr.bf16.mxu0 %v4801
      %5324 = vmatpush1.bf16.msra.mxu0 %v4800
      %5325 = vmatprep.subr.bf16.mxu0 %v4805
      %5326 = vmatpush1.bf16.msra.mxu0 %v4804
      %5327 = vmatprep.subr.bf16.mxu0 %v4809
      %5328 = vmatpush1.bf16.msra.mxu0 %v4808
      %5329 = vmatprep.subr.bf16.mxu0 %v4813
      %5330 = vmatpush1.bf16.msra.mxu0 %v4812
      %5331 = vmatprep.subr.bf16.mxu0 %v4817
      %5332 = vmatpush1.bf16.msra.mxu0 %v4816
      %5333 = vmatprep.subr.bf16.mxu0 %v4821
      %5334 = vmatpush1.bf16.msra.mxu0 %v4820
      %5335 = vmatprep.subr.bf16.mxu0 %v4825
      %5336 = vmatpush1.bf16.msra.mxu0 %v4824
      %5337 = vmatprep.subr.bf16.mxu0 %v4829
      %5338 = vmatpush1.bf16.msra.mxu0 %v4828
      %5339 = vmatprep.subr.bf16.mxu0 %v4833
      %5340 = vmatpush1.bf16.msra.mxu0 %v4832
      %5341 = vmatprep.subr.bf16.mxu0 %v4837
      %5342 = vmatpush1.bf16.msra.mxu0 %v4836
      %5343 = vmatprep.subr.bf16.mxu0 %v4841
      %5344 = vmatpush1.bf16.msra.mxu0 %v4840
      %5345 = vmatprep.subr.bf16.mxu0 %v4845
      %5346 = vmatpush1.bf16.msra.mxu0 %v4844
      %5347 = vmatprep.subr.bf16.mxu0 %v4849
      %5348 = vmatpush1.bf16.msra.mxu0 %v4848
      %5349 = vmatprep.mubr.bf16.mxu0 %v4159
      %5350 = vmatmul.mubr.bf16.gmra.mrb[0].mxu0 %v4158
      %v5351 = vpop.f32.mrb[0].mxu0
      %v5352 = vadd.f32 %v5239, %v5351
      %v5353 = vpop.f32.mrb[0].mxu0
      %v5354 = vadd.f32 %v5241, %v5353
      %v5355 = vpop.f32.mrb[0].mxu0
      %v5356 = vadd.f32 %v5243, %v5355
      %v5357 = vpop.f32.mrb[0].mxu0
      %v5358 = vadd.f32 %v5245, %v5357
      %5359 = vmatprep.mubr.bf16.mxu0 %v4163
      %5360 = vmatmul.mubr.bf16.gmra.mrb[0].mxu0 %v4162
      %v5361 = vpop.f32.mrb[0].mxu0
      %v5362 = vadd.f32 %v5249, %v5361
      %v5363 = vpop.f32.mrb[0].mxu0
      %v5364 = vadd.f32 %v5251, %v5363
      %v5365 = vpop.f32.mrb[0].mxu0
      %v5366 = vadd.f32 %v5253, %v5365
      %v5367 = vpop.f32.mrb[0].mxu0
      %v5368 = vadd.f32 %v5255, %v5367
      %5369 = vmatprep.mubr.bf16.mxu0 %v4167
      %5370 = vmatmul.mubr.bf16.gmra.mrb[0].mxu0 %v4166
      %v5371 = vpop.f32.mrb[0].mxu0
      %v5372 = vadd.f32 %v5259, %v5371
      %v5373 = vpop.f32.mrb[0].mxu0
      %v5374 = vadd.f32 %v5261, %v5373
      %v5375 = vpop.f32.mrb[0].mxu0
      %v5376 = vadd.f32 %v5263, %v5375
      %v5377 = vpop.f32.mrb[0].mxu0
      %v5378 = vadd.f32 %v5265, %v5377
      %5379 = vmatprep.mubr.bf16.mxu0 %v4171
      %5380 = vmatmul.mubr.bf16.gmra.mrb[0].mxu0 %v4170
      %v5381 = vpop.f32.mrb[0].mxu0
      %v5382 = vadd.f32 %v5269, %v5381
      %v5383 = vpop.f32.mrb[0].mxu0
      %v5384 = vadd.f32 %v5271, %v5383
      %v5385 = vpop.f32.mrb[0].mxu0
      %v5386 = vadd.f32 %v5273, %v5385
      %v5387 = vpop.f32.mrb[0].mxu0
      %v5388 = vadd.f32 %v5275, %v5387
      %5389 = vmatprep.mubr.bf16.mxu0 %v4175
      %5390 = vmatmul.mubr.bf16.gmra.mrb[0].mxu0 %v4174
      %v5391 = vpop.f32.mrb[0].mxu0
      %v5392 = vadd.f32 %v5279, %v5391
      %v5393 = vpop.f32.mrb[0].mxu0
      %v5394 = vadd.f32 %v5281, %v5393
      %v5395 = vpop.f32.mrb[0].mxu0
      %v5396 = vadd.f32 %v5283, %v5395
      %v5397 = vpop.f32.mrb[0].mxu0
      %v5398 = vadd.f32 %v5285, %v5397
      %5399 = vmatprep.mubr.bf16.mxu0 %v4179
      %5400 = vmatmul.mubr.bf16.gmra.mrb[0].mxu0 %v4178
      %v5401 = vpop.f32.mrb[0].mxu0
      %v5402 = vadd.f32 %v5289, %v5401
      %v5403 = vpop.f32.mrb[0].mxu0
      %v5404 = vadd.f32 %v5291, %v5403
      %v5405 = vpop.f32.mrb[0].mxu0
      %v5406 = vadd.f32 %v5293, %v5405
      %v5407 = vpop.f32.mrb[0].mxu0
      %v5408 = vadd.f32 %v5295, %v5407
      %5409 = vmatprep.mubr.bf16.mxu0 %v4183
      %5410 = vmatmul.mubr.bf16.gmra.mrb[0].mxu0 %v4182
      %v5411 = vpop.f32.mrb[0].mxu0
      %v5412 = vadd.f32 %v5299, %v5411
      %v5413 = vpop.f32.mrb[0].mxu0
      %v5414 = vadd.f32 %v5301, %v5413
      %v5415 = vpop.f32.mrb[0].mxu0
      %v5416 = vadd.f32 %v5303, %v5415
      %v5417 = vpop.f32.mrb[0].mxu0
      %v5418 = vadd.f32 %v5305, %v5417
      %5419 = vmatprep.mubr.bf16.mxu0 %v4187
      %5420 = vmatmul.mubr.bf16.gmra.mrb[0].mxu0 %v4186
      %v5421 = vpop.f32.mrb[0].mxu0
      %v5422 = vadd.f32 %v5309, %v5421
      %v5423 = vpop.f32.mrb[0].mxu0
      %v5424 = vadd.f32 %v5311, %v5423
      %v5425 = vpop.f32.mrb[0].mxu0
      %v5426 = vadd.f32 %v5313, %v5425
      %v5427 = vpop.f32.mrb[0].mxu0
      %v5428 = vadd.f32 %v5315, %v5427
      %5429 = vdwg.mxu0
      %5430 = vst [vmem:[%s321] sm:$0xff] %v5126
      %vm5431 = vcmask 588800
      %5432 = vst.msk [vmem:[%s321 + $0x8] sm:$0xff] %vm5431, %v5128
      %5433 = vst [vmem:[%s321 + $0x10] sm:$0xff] %v5130
      %5434 = vst.msk [vmem:[%s321 + $0x18] sm:$0xff] %vm5431, %v5132
      %5435 = vst [vmem:[%s321 + $0x20] sm:$0xff] %v5136
      %5436 = vst.msk [vmem:[%s321 + $0x28] sm:$0xff] %vm5431, %v5138
      %5437 = vst [vmem:[%s321 + $0x30] sm:$0xff] %v5140
      %5438 = vst.msk [vmem:[%s321 + $0x38] sm:$0xff] %vm5431, %v5142
      %5439 = vst [vmem:[%s321 + $0x40] sm:$0xff] %v5146
      %5440 = vst.msk [vmem:[%s321 + $0x48] sm:$0xff] %vm5431, %v5148
      %5441 = vst [vmem:[%s321 + $0x50] sm:$0xff] %v5150
      %5442 = vst.msk [vmem:[%s321 + $0x58] sm:$0xff] %vm5431, %v5152
      %5443 = vst [vmem:[%s321 + $0x60] sm:$0xff] %v5156
      %5444 = vst.msk [vmem:[%s321 + $0x68] sm:$0xff] %vm5431, %v5158
      %5445 = vst [vmem:[%s321 + $0x70] sm:$0xff] %v5160
      %5446 = vst.msk [vmem:[%s321 + $0x78] sm:$0xff] %vm5431, %v5162
      %5447 = vst [vmem:[%s321 + $0x80] sm:$0xff] %v5166
      %5448 = vst.msk [vmem:[%s321 + $0x88] sm:$0xff] %vm5431, %v5168
      %5449 = vst [vmem:[%s321 + $0x90] sm:$0xff] %v5170
      %5450 = vst.msk [vmem:[%s321 + $0x98] sm:$0xff] %vm5431, %v5172
      %5451 = vst [vmem:[%s321 + $0xa0] sm:$0xff] %v5176
      %5452 = vst.msk [vmem:[%s321 + $0xa8] sm:$0xff] %vm5431, %v5178
      %5453 = vst [vmem:[%s321 + $0xb0] sm:$0xff] %v5180
      %5454 = vst.msk [vmem:[%s321 + $0xb8] sm:$0xff] %vm5431, %v5182
      %5455 = vst [vmem:[%s321 + $0xc0] sm:$0xff] %v5186
      %5456 = vst.msk [vmem:[%s321 + $0xc8] sm:$0xff] %vm5431, %v5188
      %5457 = vst [vmem:[%s321 + $0xd0] sm:$0xff] %v5190
      %5458 = vst.msk [vmem:[%s321 + $0xd8] sm:$0xff] %vm5431, %v5192
      %5459 = vst [vmem:[%s321 + $0xe0] sm:$0xff] %v5196
      %5460 = vst.msk [vmem:[%s321 + $0xe8] sm:$0xff] %vm5431, %v5198
      %5461 = vst [vmem:[%s321 + $0xf0] sm:$0xff] %v5200
      %5462 = vst.msk [vmem:[%s321 + $0xf8] sm:$0xff] %vm5431, %v5202
      %5463 = vst [vmem:[%s328] sm:$0xff] %v5352
      %5464 = vst.msk [vmem:[%s328 + $0x8] sm:$0xff] %vm5431, %v5354
      %5465 = vst [vmem:[%s328 + $0x10] sm:$0xff] %v5356
      %5466 = vst.msk [vmem:[%s328 + $0x18] sm:$0xff] %vm5431, %v5358
      %5467 = vst [vmem:[%s328 + $0x20] sm:$0xff] %v5362
      %5468 = vst.msk [vmem:[%s328 + $0x28] sm:$0xff] %vm5431, %v5364
      %5469 = vst [vmem:[%s328 + $0x30] sm:$0xff] %v5366
      %5470 = vst.msk [vmem:[%s328 + $0x38] sm:$0xff] %vm5431, %v5368
      %5471 = vst [vmem:[%s328 + $0x40] sm:$0xff] %v5372
      %5472 = vst.msk [vmem:[%s328 + $0x48] sm:$0xff] %vm5431, %v5374
      %5473 = vst [vmem:[%s328 + $0x50] sm:$0xff] %v5376
      %5474 = vst.msk [vmem:[%s328 + $0x58] sm:$0xff] %vm5431, %v5378
      %5475 = vst [vmem:[%s328 + $0x60] sm:$0xff] %v5382
      %5476 = vst.msk [vmem:[%s328 + $0x68] sm:$0xff] %vm5431, %v5384
      %5477 = vst [vmem:[%s328 + $0x70] sm:$0xff] %v5386
      %5478 = vst.msk [vmem:[%s328 + $0x78] sm:$0xff] %vm5431, %v5388
      %5479 = vst [vmem:[%s328 + $0x80] sm:$0xff] %v5392
      %5480 = vst.msk [vmem:[%s328 + $0x88] sm:$0xff] %vm5431, %v5394
      %5481 = vst [vmem:[%s328 + $0x90] sm:$0xff] %v5396
      %5482 = vst.msk [vmem:[%s328 + $0x98] sm:$0xff] %vm5431, %v5398
      %5483 = vst [vmem:[%s328 + $0xa0] sm:$0xff] %v5402
      %5484 = vst.msk [vmem:[%s328 + $0xa8] sm:$0xff] %vm5431, %v5404
      %5485 = vst [vmem:[%s328 + $0xb0] sm:$0xff] %v5406
      %5486 = vst.msk [vmem:[%s328 + $0xb8] sm:$0xff] %vm5431, %v5408
      %5487 = vst [vmem:[%s328 + $0xc0] sm:$0xff] %v5412
      %5488 = vst.msk [vmem:[%s328 + $0xc8] sm:$0xff] %vm5431, %v5414
      %5489 = vst [vmem:[%s328 + $0xd0] sm:$0xff] %v5416
      %5490 = vst.msk [vmem:[%s328 + $0xd8] sm:$0xff] %vm5431, %v5418
      %5491 = vst [vmem:[%s328 + $0xe0] sm:$0xff] %v5422
      %5492 = vst.msk [vmem:[%s328 + $0xe8] sm:$0xff] %vm5431, %v5424
      %5493 = vst [vmem:[%s328 + $0xf0] sm:$0xff] %v5426
      %5494 = vst.msk [vmem:[%s328 + $0xf8] sm:$0xff] %vm5431, %v5428
      %s5495 = smul.u32 16, %s20
      %p5496 = scmp.lt.s32.totalorder %s5495, 63
      %s5497 = scalar_select %p5496, %s5495, 63
      %s5498 = smul.addr %s5497, 2
      %s5499 = smul.addr %s5498, 8
      %s5500 = scalar_lea.vmem %s7, %s5499
      %s5501 = smul.u32 16, %s20
      %p5502 = scmp.lt.s32.totalorder %s5501, 63
      %s5503 = scalar_select %p5502, %s5501, 63
      %s5504 = smul.addr %s5503, 2
      %s5505 = smul.addr %s5504, 8
      %s5506 = scalar_lea.vmem %s8, %s5505
      // Predicated region
      $region49: #{tpu_custom_call.1} parent=47 // pred_check
        %p5507 = pneg %p190
      $region50: #{tpu_custom_call.1} parent=47 // pred_check_branch
        %5509 = sbr.rel (%p5507) target = $region52
      $region51: #{tpu_custom_call.1} parent=47 // pred_region
        %s5510 = smul.u32 16, %s20
      $region52: #{tpu_custom_call.1} parent=47 // pred_fallthru
        _
      // Predicated region
      $region53: #{tpu_custom_call.1} parent=47 // pred_check
        %p5511 = pneg %p216
      $region54: #{tpu_custom_call.1} parent=47 // pred_check_branch
        %5513 = sbr.rel (%p5511) target = $region56
      $region55: #{tpu_custom_call.1} parent=47 // pred_region
        %s5514 = smul.u32 16, %s20
      $region56: #{tpu_custom_call.1} parent=47 // pred_fallthru
        _
    $region48: #{tpu_custom_call.1} parent=5 // pred_fallthru
      _
    %p5515 = scmp.le.s32.totalorder 2, %s15
    // Predicated region
    $region57: #{tpu_custom_call.1} parent=5 // pred_check
      %p5516 = pneg %p5515
    $region58: #{tpu_custom_call.1} parent=5 // pred_check_branch
      %5518 = sbr.rel (%p5516) target = $region60
    $region59: #{tpu_custom_call.1} parent=5 // pred_region
      %s5519 = ssub.s32 %s15, 2
      // Predicated region
      $region61: #{tpu_custom_call.1} parent=59 // pred_check
        %p5520 = pneg %p196
      $region62: #{tpu_custom_call.1} parent=59 // pred_check_branch
        %5522 = sbr.rel (%p5520) target = $region64
      $region63: #{tpu_custom_call.1} parent=59 // pred_region
        %s5523 = smul.u32 16, %s21
        %p5524 = scmp.lt.s32.totalorder %s5523, 63
        %s5525 = scalar_select %p5524, %s5523, 63
        %s5526 = smul.addr %s5525, 2
        %s5527 = smul.addr %s5526, 8
        %s5528 = scalar_lea.vmem %s7, %s5527
      $region64: #{tpu_custom_call.1} parent=59 // pred_fallthru
        _
      // Predicated region
      $region65: #{tpu_custom_call.1} parent=59 // pred_check
        %p5529 = pneg %p222
      $region66: #{tpu_custom_call.1} parent=59 // pred_check_branch
        %5531 = sbr.rel (%p5529) target = $region68
      $region67: #{tpu_custom_call.1} parent=59 // pred_region
        %s5532 = smul.u32 16, %s21
        %p5533 = scmp.lt.s32.totalorder %s5532, 63
        %s5534 = scalar_select %p5533, %s5532, 63
        %s5535 = smul.addr %s5534, 2
        %s5536 = smul.addr %s5535, 8
        %s5537 = scalar_lea.vmem %s8, %s5536
      $region68: #{tpu_custom_call.1} parent=59 // pred_fallthru
        _
    $region60: #{tpu_custom_call.1} parent=5 // pred_fallthru
      _
  $region6: #{tpu_custom_call.1} parent=0 // loop_footer
    %s19 = sadd.s32 1, %s15
  $region7: #{tpu_custom_call.1} parent=0 // loop_footer_branch
    %14 = sbr.rel target = $region3
  $region8: #{tpu_custom_call.1} parent=0 // loop_exit
    _

</llo_original>
